<compile_context>
chip_gen: v7x
topology: tpu7x:2x2x1
jax: 0.10.0
libtpu: 0.0.40
codegen_flags: <defaults>
</compile_context>

<pallas_src>
import numpy as np
import jax
import jax.numpy as jnp
from jax import lax
from jax.experimental import pallas as pl
from jax.experimental.pallas import tpu as pltpu


# ----------------------------------------------------------------------------
# Pallas kernel: whole batch, conv1 -> pool -> conv2 -> pool -> fc -> sigmoid
# ----------------------------------------------------------------------------
def _pre_relation_kernel(x_ref, keep_ref, b1_ref, c1_ref, s1_ref,
                         b2_ref, c2_ref, s2_ref, f1_ref, d1_ref,
                         fw2p_ref, d2_ref, out_ref, p1_ref, mw2_ref):
    f32, bf16 = jnp.float32, jnp.bfloat16
    R = out_ref.shape[1]          # N * 16 rows (one score per row n*16)
    n1 = b1_ref.shape[2]          # conv1 output lanes = W*C   (48)
    n2 = b2_ref.shape[2]          # conv2 output lanes = (W/2)*C (24)

    # The strided conv2 / fc1 window loads below read up to 6 / 8 rows past R;
    # zero those scratch tail rows once (scratch memory is uninitialized).
    p1_ref[pl.ds(R, p1_ref.shape[0] - R), :] = jnp.zeros(
        (p1_ref.shape[0] - R, n1), f32)
    mw2_ref[pl.ds(R, mw2_ref.shape[0] - R), :] = jnp.zeros(
        (mw2_ref.shape[0] - R, n2), f32)

    def tap_matmuls_rowpair(load, w_ref):
        # y_lo[r] = sum_t load(t)[r] @ w[t]   (conv output row for slab row r)
        # y_hi[r] = sum_t load(t+1)[r] @ w[t] (== y_lo[r+1], the H-pool partner)
        # Interior windows are shared between the two accumulators and loaded
        # just-in-time; the first dot defines each accumulator (no zeros init).
        n_taps = w_ref.shape[0]
        y_lo = y_hi = None
        for t in range(n_taps + 1):
            v = load(t)
            if t < n_taps:
                d = jnp.dot(v, w_ref[t], preferred_element_type=f32)
                y_lo = d if y_lo is None else y_lo + d
            if t > 0:
                d = jnp.dot(v, w_ref[t - 1], preferred_element_type=f32)
                y_hi = d if y_hi is None else y_hi + d
        return y_lo, y_hi

    # ---- layer1: conv3x3 + bias + ReLU + 2x2 maxpool -------------------------
    y_lo, y_hi = tap_matmuls_rowpair(
        lambda t: x_ref[pl.ds(t, R), :].astype(bf16), b1_ref)
    o1 = jnp.maximum(jnp.maximum(y_lo, y_hi) + c1_ref[...], 0.0)
    # W-direction pool pair via an exact 0/1 shift matrix on the idle MXU.
    o1s = jnp.dot(o1, s1_ref[...], preferred_element_type=f32)
    # keep zeroes the rows conv2 reads as its +-1 zero padding (locals 0,14,15).
    p1_ref[pl.ds(0, R), :] = jnp.maximum(o1, o1s) * keep_ref[...]
    # pooled1 (h', w') now lives at in-image row 2+2h', lane (2w')*C + c.

    # ---- layer2: conv3x3 + bias + ReLU + 2x2 maxpool (row stride 2) ----------
    y_lo, y_hi = tap_matmuls_rowpair(
        lambda t: p1_ref[pl.ds(2 * t, R), :].astype(bf16), b2_ref)
    o2 = jnp.maximum(jnp.maximum(y_lo, y_hi) + c2_ref[...], 0.0)
    o2s = jnp.dot(o2, s2_ref[...], preferred_element_type=f32)
    mw2_ref[pl.ds(0, R), :] = jnp.maximum(o2, o2s)
    # pooled2 (h'', w'') lives at in-image row 4h'', lane (2w'')*C + c.

    # ---- fc: Linear(C*9, 8) + ReLU, Linear(8, 1), Sigmoid --------------------
    z = None
    for t in range(f1_ref.shape[0]):
        d = jnp.dot(mw2_ref[pl.ds(4 * t, R), :].astype(bf16), f1_ref[t],
                    preferred_element_type=f32)
        z = d if z is None else z + d
    z = jnp.maximum(z + d1_ref[...], 0.0)
    # Lane-dense (8, R) score block (row 0 is the real fc2 output); the final
    # store is dense instead of a (R, 1) masked, strided one.
    score = lax.dot_general(fw2p_ref[...], z, (((1,), (1,)), ((), ())),
                            preferred_element_type=f32) + d2_ref[...]
    out_ref[...] = pl.reciprocal(1.0 + jnp.exp(-score), approx=True)


def _relation_scores(x_slab, keep, kp):
    """x_slab: (R+8, (W+2)*2C) f32; keep: (R, 1) f32 -> (R,) scores (row n*16)."""
    R = keep.shape[0]
    n1 = kp["b1"].shape[2]
    n2 = kp["b2"].shape[2]
    out = pl.pallas_call(
        _pre_relation_kernel,
        out_shape=jax.ShapeDtypeStruct((8, R), jnp.float32),
        scratch_shapes=[pltpu.VMEM((R + 8, n1), jnp.float32),
                        pltpu.VMEM((R + 8, n2), jnp.float32)],
    )(x_slab, keep, kp["b1"], kp["c1"], kp["s1"], kp["b2"], kp["c2"],
      kp["s2"], kp["f1"], kp["d1"], kp["fw2p"], kp["d2"])
    return out[0]


# ----------------------------------------------------------------------------
# Wrapper: pair construction, slab layout, score extraction, L1 normalize
# ----------------------------------------------------------------------------
def _make_pairs(x1, x2):
    s, c, h, w = x1.shape
    b = x2.shape[0]
    ss = jnp.concatenate(
        [jnp.repeat(x1[:, None], s, axis=1), jnp.repeat(x1[None, :], s, axis=0)],
        axis=2).reshape(s * s, 2 * c, h, w)
    sq = jnp.concatenate(
        [jnp.repeat(x1[:, None], b, axis=1), jnp.repeat(x2[None, :], s, axis=0)],
        axis=2).reshape(s * b, 2 * c, h, w)
    return ss, sq


def pre_relation_forward(x1, x2, kp):
    s, c, h, w = x1.shape
    b = x2.shape[0]
    rpi = h + 4                                     # 16 rows per image
    ss, sq = _make_pairs(x1, x2)
    pairs = jnp.concatenate([ss, sq], axis=0)       # (N, 2c, h, w)  NCHW
    n = pairs.shape[0]
    # NCHW -> NHWC; pad H by (3, 1) and W by (1, 1) zeros so that flattened
    # row n*rpi + m holds: m=0..2 zeros, m=3..h+2 the image rows, m=h+3 zero,
    # and columns are (padded-W position)*2c + cin (lane-dense, 112 lanes).
    xs = jnp.transpose(pairs, (0, 2, 3, 1))
    xs = jnp.pad(xs, ((0, 0), (3, 1), (1, 1), (0, 0)))
    xs = xs.reshape(n * rpi, (w + 2) * 2 * c)
    xs = jnp.pad(xs, ((0, 8), (0, 0)))              # row-window overreach rows
    # Host-precomputed keep mask: zero per-image locals {0, rpi-2, rpi-1}.
    pat = np.ones((rpi,), np.float32)
    pat[[0, rpi - 2, rpi - 1]] = 0.0
    keep = jnp.asarray(np.tile(pat, n).reshape(n * rpi, 1))

    scores = _relation_scores(xs, keep, kp)         # (n*rpi,)
    scores = scores.reshape(n, rpi)[:, 0]           # image n's score at row n*rpi
    outss = scores[:s * s].reshape(s, s)
    outsq = scores[s * s:].reshape(s, b)
    # F.normalize(p=1) on ~15 floats: plain JAX (review: no extra pallas_call).
    outss = outss / jnp.maximum(jnp.sum(jnp.abs(outss), axis=1, keepdims=True), 1e-12)
    outsq = outsq / jnp.maximum(jnp.sum(jnp.abs(outsq), axis=0, keepdims=True), 1e-12)
    return outss, outsq


# ----------------------------------------------------------------------------
# Host-side weight preparation (BN folding + block-Toeplitz slab matrices)
# ----------------------------------------------------------------------------
def _fold_bn(w, bias, gamma, beta, mean, var, eps=1e-5):
    scale = gamma / jnp.sqrt(var + eps)
    return w * scale[:, None, None, None], (bias - mean) * scale + beta


def _conv1_slab_weights(w, w_out):
    # w: (Cout, Cin, 3, 3). B[kh, (wo+kw)*Cin + ci, wo*Cout + co] = w[co,ci,kh,kw].
    w = np.asarray(w, np.float32)
    cout, cin = w.shape[0], w.shape[1]
    B = np.zeros((3, (w_out + 2) * cin, w_out * cout), np.float32)
    for kh in range(3):
        for wo in range(w_out):
            for kw in range(3):
                B[kh, (wo + kw) * cin:(wo + kw + 1) * cin,
                  wo * cout:(wo + 1) * cout] += w[:, :, kh, kw].T
    return jnp.asarray(B)


def _conv2_slab_weights(w, w_in, w_out, in_stride):
    # Pooled input position v occupies lanes [v*in_stride, v*in_stride+Cin);
    # output position wo reads v = wo + kw - 1 (out-of-range v == zero pad).
    w = np.asarray(w, np.float32)
    cout, cin = w.shape[0], w.shape[1]
    B = np.zeros((3, w_in * in_stride, w_out * cout), np.float32)
    for kh in range(3):
        for wo in range(w_out):
            for kw in range(3):
                v = wo + kw - 1
                if 0 <= v < w_in:
                    B[kh, v * in_stride:v * in_stride + cin,
                      wo * cout:(wo + 1) * cout] += w[:, :, kh, kw].T
    return jnp.asarray(B)


def _fc1_slab_weights(fw1, C, in_stride):
    # fw1: (F, C*3*3) PyTorch Linear weight; NCHW flatten order ci*9 + hh*3 + ww.
    fw1 = np.asarray(fw1, np.float32)
    nfeat = fw1.shape[0]
    w = fw1.reshape(nfeat, C, 3, 3)
    F = np.zeros((3, 3 * in_stride, nfeat), np.float32)
    for hh in range(3):
        for ww in range(3):
            F[hh, ww * in_stride:ww * in_stride + C, :] = w[:, :, hh, ww].T
    return jnp.asarray(F)


def _shift_matrix(n, c):
    # S[j+c, j] = 1: (x @ S)[:, j] == x[:, j+c], last c lanes become exact 0.
    S = np.zeros((n, n), np.float32)
    for j in range(n - c):
        S[j + c, j] = 1.0
    return jnp.asarray(S)


def init_params(key, feature_dim, w_spatial=12):
    C = feature_dim
    ks = jax.random.split(key, 16)
    # layer1: Conv2d(2C -> C, 3x3, pad=1) + BN(C)
    w1 = 0.2 * jax.random.normal(ks[0], (C, 2 * C, 3, 3), jnp.float32)
    cb1 = 0.1 * jax.random.normal(ks[1], (C,), jnp.float32)
    g1 = 1.0 + 0.1 * jax.random.normal(ks[2], (C,), jnp.float32)
    be1 = 0.1 * jax.random.normal(ks[3], (C,), jnp.float32)
    m1 = 0.1 * jax.random.normal(ks[4], (C,), jnp.float32)
    v1 = jax.random.uniform(ks[5], (C,), jnp.float32, 0.5, 1.5)
    # layer2: Conv2d(C -> C, 3x3, pad=1) + BN(C)
    w2 = 0.2 * jax.random.normal(ks[6], (C, C, 3, 3), jnp.float32)
    cb2 = 0.1 * jax.random.normal(ks[7], (C,), jnp.float32)
    g2 = 1.0 + 0.1 * jax.random.normal(ks[8], (C,), jnp.float32)
    be2 = 0.1 * jax.random.normal(ks[9], (C,), jnp.float32)
    m2 = 0.1 * jax.random.normal(ks[10], (C,), jnp.float32)
    v2 = jax.random.uniform(ks[11], (C,), jnp.float32, 0.5, 1.5)
    # fc: Linear(C*3*3, 8) -> ReLU -> Linear(8, 1) -> Sigmoid  (PyTorch layout)
    fw1 = 0.2 * jax.random.normal(ks[12], (8, C * 9), jnp.float32)
    fb1 = 0.1 * jax.random.normal(ks[13], (8,), jnp.float32)
    fw2 = 0.2 * jax.random.normal(ks[14], (1, 8), jnp.float32)
    fb2 = 0.1 * jax.random.normal(ks[15], (1,), jnp.float32)

    w1f, b1f = _fold_bn(w1, cb1, g1, be1, m1, v1)
    w2f, b2f = _fold_bn(w2, cb2, g2, be2, m2, v2)

    wp = w_spatial
    bf16 = jnp.bfloat16
    fw2p = np.zeros((8, 8), np.float32)              # fc2 padded to a full tile
    fw2p[0, :] = np.asarray(fw2[0])
    kernel_params = {
        # bf16 matmul operands (MXU is natively bf16 on v5e/v6e/v7x); all
        # accumulation / bias / pool / sigmoid math stays f32.
        "b1": _conv1_slab_weights(w1f, wp).astype(bf16),                  # (3,112,48)
        "c1": jnp.tile(b1f, (wp,)).reshape(1, wp * C),                    # (1,48)
        "s1": _shift_matrix(wp * C, C),                                   # (48,48)
        "b2": _conv2_slab_weights(w2f, wp // 2, wp // 2, 2 * C).astype(bf16),  # (3,48,24)
        "c2": jnp.tile(b2f, (wp // 2,)).reshape(1, (wp // 2) * C),        # (1,24)
        "s2": _shift_matrix((wp // 2) * C, C),                            # (24,24)
        "f1": _fc1_slab_weights(fw1, C, 2 * C).astype(bf16),              # (3,24,8)
        "d1": fb1.reshape(1, 8),
        "fw2p": jnp.asarray(fw2p),                                        # (8,8)
        "d2": fb2.reshape(1, 1),
    }
    # PyTorch-layout (BN-folded) parameters for the pure-JAX reference.
    raw_params = {"w1": w1f, "b1": b1f, "w2": w2f, "b2": b2f,
                  "fw1": fw1, "fb1": fb1, "fw2": fw2, "fb2": fb2}
    return kernel_params, raw_params


# ----------------------------------------------------------------------------
# Pure-JAX reference (for correctness check only)
# ----------------------------------------------------------------------------
def _reference(x1, x2, raw, matmul_dtype=jnp.float32):
    md = matmul_dtype

    def block(x, w, bias):
        y = lax.conv_general_dilated(
            x.astype(md), w.astype(md), (1, 1), ((1, 1), (1, 1)),
            dimension_numbers=("NCHW", "OIHW", "NCHW"),
            preferred_element_type=jnp.float32,
            precision=lax.Precision.HIGHEST)
        y = jnp.maximum(y + bias[None, :, None, None], 0.0)
        return lax.reduce_window(y, -jnp.inf, lax.max,
                                 (1, 1, 2, 2), (1, 1, 2, 2), "VALID")

    def scores(pairs):
        y = block(block(pairs, raw["w1"], raw["b1"]), raw["w2"], raw["b2"])
        flat = y.reshape(y.shape[0], -1)
        z = jnp.dot(flat.astype(md), raw["fw1"].T.astype(md),
                    preferred_element_type=jnp.float32,
                    precision=lax.Precision.HIGHEST)
        z = jnp.maximum(z + raw["fb1"], 0.0)
        return jax.nn.sigmoid(z @ raw["fw2"].T + raw["fb2"])[:, 0]

    s, b = x1.shape[0], x2.shape[0]
    ss, sq = _make_pairs(x1, x2)
    oss = scores(ss).reshape(s, s)
    osq = scores(sq).reshape(s, b)
    oss = oss / jnp.maximum(jnp.sum(jnp.abs(oss), axis=1, keepdims=True), 1e-12)
    osq = osq / jnp.maximum(jnp.sum(jnp.abs(osq), axis=0, keepdims=True), 1e-12)
    return oss, osq


if __name__ == "__main__":
    feature_dim = 4
    s, b = 3, 2
    H = W = 12          # 12 -> pool -> 6 -> pool -> 3  =>  fc in = feature_dim*3*3

    key = jax.random.PRNGKey(0)
    kparam, kx1, kx2 = jax.random.split(key, 3)
    kernel_params, raw_params = init_params(kparam, feature_dim, w_spatial=W)

    x1 = jax.random.normal(kx1, (s, feature_dim, H, W), jnp.float32)
    x2 = jax.random.normal(kx2, (b, feature_dim, H, W), jnp.float32)

    outss, outsq = pre_relation_forward(x1, x2, kernel_params)
    jax.block_until_ready((outss, outsq))

    assert outss.shape == (s, s) and outsq.shape == (s, b)
    # Kernel matmuls use bf16 operands (f32 accumulation) and an approximate
    # EUP reciprocal in the sigmoid: check tightly against a bf16-matched
    # reference and loosely against the full-f32 reference.
    ss_bf, sq_bf = _reference(x1, x2, raw_params, matmul_dtype=jnp.bfloat16)
    ss_f32, sq_f32 = _reference(x1, x2, raw_params, matmul_dtype=jnp.float32)
    assert jnp.allclose(outss, ss_bf, atol=1e-2, rtol=1e-2), "outss mismatch (bf16 ref)"
    assert jnp.allclose(outsq, sq_bf, atol=1e-2, rtol=1e-2), "outsq mismatch (bf16 ref)"
    assert jnp.allclose(outss, ss_f32, atol=3e-2, rtol=3e-2), "outss mismatch (f32 ref)"
    assert jnp.allclose(outsq, sq_f32, atol=3e-2, rtol=3e-2), "outsq mismatch (f32 ref)"

    print("KERNEL_OK")
</pallas_src>

<mosaic_0001>
module attributes {stable_mosaic.version = 11 : i64} {
  func.func @_pre_relation_kernel(%arg0: memref<248x112xf32, #tpu.memory_space<vmem>>, %arg1: memref<240x1xf32, #tpu.memory_space<vmem>>, %arg2: memref<3x112x48xbf16, #tpu.memory_space<vmem>>, %arg3: memref<1x48xf32, #tpu.memory_space<vmem>>, %arg4: memref<48x48xf32, #tpu.memory_space<vmem>>, %arg5: memref<3x48x24xbf16, #tpu.memory_space<vmem>>, %arg6: memref<1x24xf32, #tpu.memory_space<vmem>>, %arg7: memref<24x24xf32, #tpu.memory_space<vmem>>, %arg8: memref<3x24x8xbf16, #tpu.memory_space<vmem>>, %arg9: memref<1x8xf32, #tpu.memory_space<vmem>>, %arg10: memref<8x8xf32, #tpu.memory_space<vmem>>, %arg11: memref<1x1xf32, #tpu.memory_space<vmem>>, %arg12: memref<8x240xf32, #tpu.memory_space<vmem>>, %arg13: memref<248x48xf32, #tpu.memory_space<vmem>>, %arg14: memref<248x24xf32, #tpu.memory_space<vmem>>) attributes {dimension_semantics = [], scalar_prefetch = 0 : i64, scratch_operands = 2 : i64, tpu.core_type = #tpu.core_type<tc>} {
    %cst = arith.constant 0.000000e+00 : f32
    %0 = vector.broadcast %cst : f32 to vector<8x48xf32>
    %c240 = arith.constant 240 : index
    %c0 = arith.constant 0 : index
    %1 = vector.load %arg13[%c240, %c0] : memref<248x48xf32, #tpu.memory_space<vmem>>, vector<8x48xf32>
    tpu.vector_store %arg13[%c240, %c0], %0 {strides = array<i32>} : memref<248x48xf32, #tpu.memory_space<vmem>>, vector<8x48xf32>,
    %cst_0 = arith.constant 0.000000e+00 : f32
    %2 = vector.broadcast %cst_0 : f32 to vector<8x24xf32>
    %c240_1 = arith.constant 240 : index
    %c0_2 = arith.constant 0 : index
    %3 = vector.load %arg14[%c240_1, %c0_2] : memref<248x24xf32, #tpu.memory_space<vmem>>, vector<8x24xf32>
    tpu.vector_store %arg14[%c240_1, %c0_2], %2 {strides = array<i32>} : memref<248x24xf32, #tpu.memory_space<vmem>>, vector<8x24xf32>,
    %c0_3 = arith.constant 0 : index
    %c0_4 = arith.constant 0 : index
    %4 = vector.load %arg0[%c0_3, %c0_4] : memref<248x112xf32, #tpu.memory_space<vmem>>, vector<240x112xf32>
    %5 = arith.truncf %4 : vector<240x112xf32> to vector<240x112xbf16>
    %c0_5 = arith.constant 0 : index
    %c0_6 = arith.constant 0 : index
    %c0_7 = arith.constant 0 : index
    %6 = vector.load %arg2[%c0_5, %c0_6, %c0_7] : memref<3x112x48xbf16, #tpu.memory_space<vmem>>, vector<1x112x48xbf16>
    %7 = vector.shape_cast %6 : vector<1x112x48xbf16> to vector<112x48xbf16>
    %cst_8 = arith.constant dense<0.000000e+00> : vector<240x48xf32>
    %8 = tpu.matmul %5, %7, %cst_8 {dimension_numbers = #tpu.dot_dimension_numbers<[1], [0], [0], [1], [0, 0, 1, 1], [], []>} : vector<240x112xbf16>, vector<112x48xbf16>, vector<240x48xf32> -> vector<240x48xf32>
    %c1 = arith.constant 1 : index
    %c0_9 = arith.constant 0 : index
    %9 = vector.load %arg0[%c1, %c0_9] : memref<248x112xf32, #tpu.memory_space<vmem>>, vector<240x112xf32>
    %10 = arith.truncf %9 : vector<240x112xf32> to vector<240x112xbf16>
    %c1_10 = arith.constant 1 : index
    %c0_11 = arith.constant 0 : index
    %c0_12 = arith.constant 0 : index
    %11 = vector.load %arg2[%c1_10, %c0_11, %c0_12] : memref<3x112x48xbf16, #tpu.memory_space<vmem>>, vector<1x112x48xbf16>
    %12 = vector.shape_cast %11 : vector<1x112x48xbf16> to vector<112x48xbf16>
    %cst_13 = arith.constant dense<0.000000e+00> : vector<240x48xf32>
    %13 = tpu.matmul %10, %12, %cst_13 {dimension_numbers = #tpu.dot_dimension_numbers<[1], [0], [0], [1], [0, 0, 1, 1], [], []>} : vector<240x112xbf16>, vector<112x48xbf16>, vector<240x48xf32> -> vector<240x48xf32>
    %14 = arith.addf %8, %13 : vector<240x48xf32>
    %c0_14 = arith.constant 0 : index
    %c0_15 = arith.constant 0 : index
    %c0_16 = arith.constant 0 : index
    %15 = vector.load %arg2[%c0_14, %c0_15, %c0_16] : memref<3x112x48xbf16, #tpu.memory_space<vmem>>, vector<1x112x48xbf16>
    %16 = vector.shape_cast %15 : vector<1x112x48xbf16> to vector<112x48xbf16>
    %cst_17 = arith.constant dense<0.000000e+00> : vector<240x48xf32>
    %17 = tpu.matmul %10, %16, %cst_17 {dimension_numbers = #tpu.dot_dimension_numbers<[1], [0], [0], [1], [0, 0, 1, 1], [], []>} : vector<240x112xbf16>, vector<112x48xbf16>, vector<240x48xf32> -> vector<240x48xf32>
    %c2 = arith.constant 2 : index
    %c0_18 = arith.constant 0 : index
    %18 = vector.load %arg0[%c2, %c0_18] : memref<248x112xf32, #tpu.memory_space<vmem>>, vector<240x112xf32>
    %19 = arith.truncf %18 : vector<240x112xf32> to vector<240x112xbf16>
    %c2_19 = arith.constant 2 : index
    %c0_20 = arith.constant 0 : index
    %c0_21 = arith.constant 0 : index
    %20 = vector.load %arg2[%c2_19, %c0_20, %c0_21] : memref<3x112x48xbf16, #tpu.memory_space<vmem>>, vector<1x112x48xbf16>
    %21 = vector.shape_cast %20 : vector<1x112x48xbf16> to vector<112x48xbf16>
    %cst_22 = arith.constant dense<0.000000e+00> : vector<240x48xf32>
    %22 = tpu.matmul %19, %21, %cst_22 {dimension_numbers = #tpu.dot_dimension_numbers<[1], [0], [0], [1], [0, 0, 1, 1], [], []>} : vector<240x112xbf16>, vector<112x48xbf16>, vector<240x48xf32> -> vector<240x48xf32>
    %23 = arith.addf %14, %22 : vector<240x48xf32>
    %c1_23 = arith.constant 1 : index
    %c0_24 = arith.constant 0 : index
    %c0_25 = arith.constant 0 : index
    %24 = vector.load %arg2[%c1_23, %c0_24, %c0_25] : memref<3x112x48xbf16, #tpu.memory_space<vmem>>, vector<1x112x48xbf16>
    %25 = vector.shape_cast %24 : vector<1x112x48xbf16> to vector<112x48xbf16>
    %cst_26 = arith.constant dense<0.000000e+00> : vector<240x48xf32>
    %26 = tpu.matmul %19, %25, %cst_26 {dimension_numbers = #tpu.dot_dimension_numbers<[1], [0], [0], [1], [0, 0, 1, 1], [], []>} : vector<240x112xbf16>, vector<112x48xbf16>, vector<240x48xf32> -> vector<240x48xf32>
    %27 = arith.addf %17, %26 : vector<240x48xf32>
    %c3 = arith.constant 3 : index
    %c0_27 = arith.constant 0 : index
    %28 = vector.load %arg0[%c3, %c0_27] : memref<248x112xf32, #tpu.memory_space<vmem>>, vector<240x112xf32>
    %29 = arith.truncf %28 : vector<240x112xf32> to vector<240x112xbf16>
    %c2_28 = arith.constant 2 : index
    %c0_29 = arith.constant 0 : index
    %c0_30 = arith.constant 0 : index
    %30 = vector.load %arg2[%c2_28, %c0_29, %c0_30] : memref<3x112x48xbf16, #tpu.memory_space<vmem>>, vector<1x112x48xbf16>
    %31 = vector.shape_cast %30 : vector<1x112x48xbf16> to vector<112x48xbf16>
    %cst_31 = arith.constant dense<0.000000e+00> : vector<240x48xf32>
    %32 = tpu.matmul %29, %31, %cst_31 {dimension_numbers = #tpu.dot_dimension_numbers<[1], [0], [0], [1], [0, 0, 1, 1], [], []>} : vector<240x112xbf16>, vector<112x48xbf16>, vector<240x48xf32> -> vector<240x48xf32>
    %33 = arith.addf %27, %32 : vector<240x48xf32>
    %34 = arith.maximumf %23, %33 : vector<240x48xf32>
    %c0_32 = arith.constant 0 : index
    %c0_33 = arith.constant 0 : index
    %35 = vector.load %arg3[%c0_32, %c0_33] : memref<1x48xf32, #tpu.memory_space<vmem>>, vector<1x48xf32>
    %36 = vector.broadcast %35 : vector<1x48xf32> to vector<240x48xf32>
    %37 = arith.addf %34, %36 : vector<240x48xf32>
    %cst_34 = arith.constant 0.000000e+00 : f32
    %38 = vector.broadcast %cst_34 : f32 to vector<240x48xf32>
    %39 = arith.maximumf %37, %38 : vector<240x48xf32>
    %c0_35 = arith.constant 0 : index
    %c0_36 = arith.constant 0 : index
    %40 = vector.load %arg4[%c0_35, %c0_36] : memref<48x48xf32, #tpu.memory_space<vmem>>, vector<48x48xf32>
    %cst_37 = arith.constant dense<0.000000e+00> : vector<240x48xf32>
    %41 = tpu.matmul %39, %40, %cst_37 {dimension_numbers = #tpu.dot_dimension_numbers<[1], [0], [0], [1], [0, 0, 1, 1], [], []>} : vector<240x48xf32>, vector<48x48xf32>, vector<240x48xf32> -> vector<240x48xf32>
    %42 = arith.maximumf %39, %41 : vector<240x48xf32>
    %c0_38 = arith.constant 0 : index
    %c0_39 = arith.constant 0 : index
    %43 = vector.load %arg1[%c0_38, %c0_39] : memref<240x1xf32, #tpu.memory_space<vmem>>, vector<240x1xf32>
    %44 = vector.broadcast %43 : vector<240x1xf32> to vector<240x48xf32>
    %45 = arith.mulf %42, %44 : vector<240x48xf32>
    %c0_40 = arith.constant 0 : index
    %c0_41 = arith.constant 0 : index
    %46 = vector.load %arg13[%c0_40, %c0_41] : memref<248x48xf32, #tpu.memory_space<vmem>>, vector<240x48xf32>
    tpu.vector_store %arg13[%c0_40, %c0_41], %45 {strides = array<i32>} : memref<248x48xf32, #tpu.memory_space<vmem>>, vector<240x48xf32>,
    %c0_42 = arith.constant 0 : index
    %c0_43 = arith.constant 0 : index
    %47 = vector.load %arg13[%c0_42, %c0_43] : memref<248x48xf32, #tpu.memory_space<vmem>>, vector<240x48xf32>
    %48 = arith.truncf %47 : vector<240x48xf32> to vector<240x48xbf16>
    %c0_44 = arith.constant 0 : index
    %c0_45 = arith.constant 0 : index
    %c0_46 = arith.constant 0 : index
    %49 = vector.load %arg5[%c0_44, %c0_45, %c0_46] : memref<3x48x24xbf16, #tpu.memory_space<vmem>>, vector<1x48x24xbf16>
    %50 = vector.shape_cast %49 : vector<1x48x24xbf16> to vector<48x24xbf16>
    %cst_47 = arith.constant dense<0.000000e+00> : vector<240x24xf32>
    %51 = tpu.matmul %48, %50, %cst_47 {dimension_numbers = #tpu.dot_dimension_numbers<[1], [0], [0], [1], [0, 0, 1, 1], [], []>} : vector<240x48xbf16>, vector<48x24xbf16>, vector<240x24xf32> -> vector<240x24xf32>
    %c2_48 = arith.constant 2 : index
    %c0_49 = arith.constant 0 : index
    %52 = vector.load %arg13[%c2_48, %c0_49] : memref<248x48xf32, #tpu.memory_space<vmem>>, vector<240x48xf32>
    %53 = arith.truncf %52 : vector<240x48xf32> to vector<240x48xbf16>
    %c1_50 = arith.constant 1 : index
    %c0_51 = arith.constant 0 : index
    %c0_52 = arith.constant 0 : index
    %54 = vector.load %arg5[%c1_50, %c0_51, %c0_52] : memref<3x48x24xbf16, #tpu.memory_space<vmem>>, vector<1x48x24xbf16>
    %55 = vector.shape_cast %54 : vector<1x48x24xbf16> to vector<48x24xbf16>
    %cst_53 = arith.constant dense<0.000000e+00> : vector<240x24xf32>
    %56 = tpu.matmul %53, %55, %cst_53 {dimension_numbers = #tpu.dot_dimension_numbers<[1], [0], [0], [1], [0, 0, 1, 1], [], []>} : vector<240x48xbf16>, vector<48x24xbf16>, vector<240x24xf32> -> vector<240x24xf32>
    %57 = arith.addf %51, %56 : vector<240x24xf32>
    %c0_54 = arith.constant 0 : index
    %c0_55 = arith.constant 0 : index
    %c0_56 = arith.constant 0 : index
    %58 = vector.load %arg5[%c0_54, %c0_55, %c0_56] : memref<3x48x24xbf16, #tpu.memory_space<vmem>>, vector<1x48x24xbf16>
    %59 = vector.shape_cast %58 : vector<1x48x24xbf16> to vector<48x24xbf16>
    %cst_57 = arith.constant dense<0.000000e+00> : vector<240x24xf32>
    %60 = tpu.matmul %53, %59, %cst_57 {dimension_numbers = #tpu.dot_dimension_numbers<[1], [0], [0], [1], [0, 0, 1, 1], [], []>} : vector<240x48xbf16>, vector<48x24xbf16>, vector<240x24xf32> -> vector<240x24xf32>
    %c4 = arith.constant 4 : index
    %c0_58 = arith.constant 0 : index
    %61 = vector.load %arg13[%c4, %c0_58] : memref<248x48xf32, #tpu.memory_space<vmem>>, vector<240x48xf32>
    %62 = arith.truncf %61 : vector<240x48xf32> to vector<240x48xbf16>
    %c2_59 = arith.constant 2 : index
    %c0_60 = arith.constant 0 : index
    %c0_61 = arith.constant 0 : index
    %63 = vector.load %arg5[%c2_59, %c0_60, %c0_61] : memref<3x48x24xbf16, #tpu.memory_space<vmem>>, vector<1x48x24xbf16>
    %64 = vector.shape_cast %63 : vector<1x48x24xbf16> to vector<48x24xbf16>
    %cst_62 = arith.constant dense<0.000000e+00> : vector<240x24xf32>
    %65 = tpu.matmul %62, %64, %cst_62 {dimension_numbers = #tpu.dot_dimension_numbers<[1], [0], [0], [1], [0, 0, 1, 1], [], []>} : vector<240x48xbf16>, vector<48x24xbf16>, vector<240x24xf32> -> vector<240x24xf32>
    %66 = arith.addf %57, %65 : vector<240x24xf32>
    %c1_63 = arith.constant 1 : index
    %c0_64 = arith.constant 0 : index
    %c0_65 = arith.constant 0 : index
    %67 = vector.load %arg5[%c1_63, %c0_64, %c0_65] : memref<3x48x24xbf16, #tpu.memory_space<vmem>>, vector<1x48x24xbf16>
    %68 = vector.shape_cast %67 : vector<1x48x24xbf16> to vector<48x24xbf16>
    %cst_66 = arith.constant dense<0.000000e+00> : vector<240x24xf32>
    %69 = tpu.matmul %62, %68, %cst_66 {dimension_numbers = #tpu.dot_dimension_numbers<[1], [0], [0], [1], [0, 0, 1, 1], [], []>} : vector<240x48xbf16>, vector<48x24xbf16>, vector<240x24xf32> -> vector<240x24xf32>
    %70 = arith.addf %60, %69 : vector<240x24xf32>
    %c6 = arith.constant 6 : index
    %c0_67 = arith.constant 0 : index
    %71 = vector.load %arg13[%c6, %c0_67] : memref<248x48xf32, #tpu.memory_space<vmem>>, vector<240x48xf32>
    %72 = arith.truncf %71 : vector<240x48xf32> to vector<240x48xbf16>
    %c2_68 = arith.constant 2 : index
    %c0_69 = arith.constant 0 : index
    %c0_70 = arith.constant 0 : index
    %73 = vector.load %arg5[%c2_68, %c0_69, %c0_70] : memref<3x48x24xbf16, #tpu.memory_space<vmem>>, vector<1x48x24xbf16>
    %74 = vector.shape_cast %73 : vector<1x48x24xbf16> to vector<48x24xbf16>
    %cst_71 = arith.constant dense<0.000000e+00> : vector<240x24xf32>
    %75 = tpu.matmul %72, %74, %cst_71 {dimension_numbers = #tpu.dot_dimension_numbers<[1], [0], [0], [1], [0, 0, 1, 1], [], []>} : vector<240x48xbf16>, vector<48x24xbf16>, vector<240x24xf32> -> vector<240x24xf32>
    %76 = arith.addf %70, %75 : vector<240x24xf32>
    %77 = arith.maximumf %66, %76 : vector<240x24xf32>
    %c0_72 = arith.constant 0 : index
    %c0_73 = arith.constant 0 : index
    %78 = vector.load %arg6[%c0_72, %c0_73] : memref<1x24xf32, #tpu.memory_space<vmem>>, vector<1x24xf32>
    %79 = vector.broadcast %78 : vector<1x24xf32> to vector<240x24xf32>
    %80 = arith.addf %77, %79 : vector<240x24xf32>
    %cst_74 = arith.constant 0.000000e+00 : f32
    %81 = vector.broadcast %cst_74 : f32 to vector<240x24xf32>
    %82 = arith.maximumf %80, %81 : vector<240x24xf32>
    %c0_75 = arith.constant 0 : index
    %c0_76 = arith.constant 0 : index
    %83 = vector.load %arg7[%c0_75, %c0_76] : memref<24x24xf32, #tpu.memory_space<vmem>>, vector<24x24xf32>
    %cst_77 = arith.constant dense<0.000000e+00> : vector<240x24xf32>
    %84 = tpu.matmul %82, %83, %cst_77 {dimension_numbers = #tpu.dot_dimension_numbers<[1], [0], [0], [1], [0, 0, 1, 1], [], []>} : vector<240x24xf32>, vector<24x24xf32>, vector<240x24xf32> -> vector<240x24xf32>
    %85 = arith.maximumf %82, %84 : vector<240x24xf32>
    %c0_78 = arith.constant 0 : index
    %c0_79 = arith.constant 0 : index
    %86 = vector.load %arg14[%c0_78, %c0_79] : memref<248x24xf32, #tpu.memory_space<vmem>>, vector<240x24xf32>
    tpu.vector_store %arg14[%c0_78, %c0_79], %85 {strides = array<i32>} : memref<248x24xf32, #tpu.memory_space<vmem>>, vector<240x24xf32>,
    %c0_80 = arith.constant 0 : index
    %c0_81 = arith.constant 0 : index
    %87 = vector.load %arg14[%c0_80, %c0_81] : memref<248x24xf32, #tpu.memory_space<vmem>>, vector<240x24xf32>
    %88 = arith.truncf %87 : vector<240x24xf32> to vector<240x24xbf16>
    %c0_82 = arith.constant 0 : index
    %c0_83 = arith.constant 0 : index
    %c0_84 = arith.constant 0 : index
    %89 = vector.load %arg8[%c0_82, %c0_83, %c0_84] : memref<3x24x8xbf16, #tpu.memory_space<vmem>>, vector<1x24x8xbf16>
    %90 = vector.shape_cast %89 : vector<1x24x8xbf16> to vector<24x8xbf16>
    %cst_85 = arith.constant dense<0.000000e+00> : vector<240x8xf32>
    %91 = tpu.matmul %88, %90, %cst_85 {dimension_numbers = #tpu.dot_dimension_numbers<[1], [0], [0], [1], [0, 0, 1, 1], [], []>} : vector<240x24xbf16>, vector<24x8xbf16>, vector<240x8xf32> -> vector<240x8xf32>
    %c4_86 = arith.constant 4 : index
    %c0_87 = arith.constant 0 : index
    %92 = vector.load %arg14[%c4_86, %c0_87] : memref<248x24xf32, #tpu.memory_space<vmem>>, vector<240x24xf32>
    %93 = arith.truncf %92 : vector<240x24xf32> to vector<240x24xbf16>
    %c1_88 = arith.constant 1 : index
    %c0_89 = arith.constant 0 : index
    %c0_90 = arith.constant 0 : index
    %94 = vector.load %arg8[%c1_88, %c0_89, %c0_90] : memref<3x24x8xbf16, #tpu.memory_space<vmem>>, vector<1x24x8xbf16>
    %95 = vector.shape_cast %94 : vector<1x24x8xbf16> to vector<24x8xbf16>
    %cst_91 = arith.constant dense<0.000000e+00> : vector<240x8xf32>
    %96 = tpu.matmul %93, %95, %cst_91 {dimension_numbers = #tpu.dot_dimension_numbers<[1], [0], [0], [1], [0, 0, 1, 1], [], []>} : vector<240x24xbf16>, vector<24x8xbf16>, vector<240x8xf32> -> vector<240x8xf32>
    %97 = arith.addf %91, %96 : vector<240x8xf32>
    %c8 = arith.constant 8 : index
    %c0_92 = arith.constant 0 : index
    %98 = vector.load %arg14[%c8, %c0_92] : memref<248x24xf32, #tpu.memory_space<vmem>>, vector<240x24xf32>
    %99 = arith.truncf %98 : vector<240x24xf32> to vector<240x24xbf16>
    %c2_93 = arith.constant 2 : index
    %c0_94 = arith.constant 0 : index
    %c0_95 = arith.constant 0 : index
    %100 = vector.load %arg8[%c2_93, %c0_94, %c0_95] : memref<3x24x8xbf16, #tpu.memory_space<vmem>>, vector<1x24x8xbf16>
    %101 = vector.shape_cast %100 : vector<1x24x8xbf16> to vector<24x8xbf16>
    %cst_96 = arith.constant dense<0.000000e+00> : vector<240x8xf32>
    %102 = tpu.matmul %99, %101, %cst_96 {dimension_numbers = #tpu.dot_dimension_numbers<[1], [0], [0], [1], [0, 0, 1, 1], [], []>} : vector<240x24xbf16>, vector<24x8xbf16>, vector<240x8xf32> -> vector<240x8xf32>
    %103 = arith.addf %97, %102 : vector<240x8xf32>
    %c0_97 = arith.constant 0 : index
    %c0_98 = arith.constant 0 : index
    %104 = vector.load %arg9[%c0_97, %c0_98] : memref<1x8xf32, #tpu.memory_space<vmem>>, vector<1x8xf32>
    %105 = vector.broadcast %104 : vector<1x8xf32> to vector<240x8xf32>
    %106 = arith.addf %103, %105 : vector<240x8xf32>
    %cst_99 = arith.constant 0.000000e+00 : f32
    %107 = vector.broadcast %cst_99 : f32 to vector<240x8xf32>
    %108 = arith.maximumf %106, %107 : vector<240x8xf32>
    %c0_100 = arith.constant 0 : index
    %c0_101 = arith.constant 0 : index
    %109 = vector.load %arg10[%c0_100, %c0_101] : memref<8x8xf32, #tpu.memory_space<vmem>>, vector<8x8xf32>
    %cst_102 = arith.constant dense<0.000000e+00> : vector<8x240xf32>
    %110 = tpu.matmul %109, %108, %cst_102 {dimension_numbers = #tpu.dot_dimension_numbers<[1], [1], [0], [0], [0, 0, 1, 0], [], []>} : vector<8x8xf32>, vector<240x8xf32>, vector<8x240xf32> -> vector<8x240xf32>
    %c0_103 = arith.constant 0 : index
    %c0_104 = arith.constant 0 : index
    %111 = vector.load %arg11[%c0_103, %c0_104] : memref<1x1xf32, #tpu.memory_space<vmem>>, vector<1x1xf32>
    %112 = vector.broadcast %111 : vector<1x1xf32> to vector<8x240xf32>
    %113 = arith.addf %110, %112 : vector<8x240xf32>
    %cst_105 = arith.constant 0.000000e+00 : f32
    %114 = vector.broadcast %cst_105 : f32 to vector<8x240xf32>
    %115 = arith.subf %114, %113 : vector<8x240xf32>
    %116 = math.exp %115 : vector<8x240xf32>
    %cst_106 = arith.constant 1.000000e+00 : f32
    %117 = vector.broadcast %cst_106 : f32 to vector<8x240xf32>
    %118 = arith.addf %117, %116 : vector<8x240xf32>
    %119 = tpu.reciprocal %118 {approx = true} : vector<8x240xf32> -> vector<8x240xf32>
    %c0_107 = arith.constant 0 : index
    %c0_108 = arith.constant 0 : index
    %120 = vector.load %arg12[%c0_107, %c0_108] : memref<8x240xf32, #tpu.memory_space<vmem>>, vector<8x240xf32>
    tpu.vector_store %arg12[%c0_107, %c0_108], %119 {strides = array<i32>} : memref<8x240xf32, #tpu.memory_space<vmem>>, vector<8x240xf32>,
    return
  }
}

</mosaic_0001>

<llo_original>
// kernel: tpu_custom_call.1
$region0: #{tpu_custom_call.1}
  #allocation0 [shape = 'u32[]', space=smem, size = 0x4, offset = 0x4, fixed_abs, tag = 'smem constant byte address 0x4 - core index']
  #allocation1 [shape = 'u32[144,128]{1,0:T(1,128)}', space=vmem, size = 0x12000, scoped, tag = 'internal scratch']
  #allocation2 [shape = 'f32[248,48]{1,0:T(8,128)}', space=vmem, size = 0x1f000, scoped, tag = 'scratch operand']
  #allocation3 [shape = 'f32[248,24]{1,0:T(8,128)}', space=vmem, size = 0x1f000, scoped, tag = 'scratch operand']
  #allocation4 [shape = 'f32[1,1]{1,0:T(1,128)S(1)}', space=vmem, size = 0x200, scoped, tag = 'scoped memory for tpu_custom_call.1']
  %s0 = inlined_call_operand.vmem [shape: f32[248,112], index: 0, kind: input, shape index: {}]
  %s1 = inlined_call_operand.vmem [shape: f32[240,1], index: 1, kind: input, shape index: {}]
  %s2 = inlined_call_operand.vmem [shape: bf16[3,112,48], index: 2, kind: input, shape index: {}]
  %s3 = inlined_call_operand.vmem [shape: f32[1,48], index: 3, kind: input, shape index: {}]
  %s4 = inlined_call_operand.vmem [shape: f32[48,48], index: 4, kind: input, shape index: {}]
  %s5 = inlined_call_operand.vmem [shape: bf16[3,48,24], index: 5, kind: input, shape index: {}]
  %s6 = inlined_call_operand.vmem [shape: f32[1,24], index: 6, kind: input, shape index: {}]
  %s7 = inlined_call_operand.vmem [shape: f32[24,24], index: 7, kind: input, shape index: {}]
  %s8 = inlined_call_operand.vmem [shape: bf16[3,24,8], index: 8, kind: input, shape index: {}]
  %s9 = inlined_call_operand.vmem [shape: f32[1,8], index: 9, kind: input, shape index: {}]
  %s10 = inlined_call_operand.vmem [shape: f32[8,8], index: 10, kind: input, shape index: {}]
  %s11 = inlined_call_operand.<no memory space> [shape: f32[1,1], index: 11, kind: input, shape index: {}]
  %s12 = inlined_call_operand.hbm [shape: f32[8,240], index: 12, kind: output, shape index: {}]
  %s13 = sld [smem:[#allocation0]]
  $region58: #{tpu_custom_call.1} parent=0
    _
  %s15 = ssub.s32 1, %s13
  %s16 = scalar_select 0, %s15, %s13
  %v17 = vstv %s11
  %18 = vst [vmem:[#allocation4] sm:$0x1] %v17
  $region1: #{tpu_custom_call.1} parent=0
    #allocation5 [shape = 'u8[8192]{0}', space=vmem, size = 0x2000, scoped, tag = 'output window, operand 0, single buffered']
    #allocation6 [shape = 's32[1]{0}', space=sflag, size = 0x4, scoped, tag = 'scoped memory for tpu_custom_call.1']
    %19 = vsyncpa [#allocation6], 0
    // Predicated region
    $region2: #{tpu_custom_call.1} parent=1 // pred_check
      _
    $region3: #{tpu_custom_call.1} parent=1 // pred_check_branch
      %21 = sbr.rel (0) target = $region5
    $region4: #{tpu_custom_call.1} parent=1 // pred_region
      _
    $region5: #{tpu_custom_call.1} parent=1 // pred_fallthru
      _
    // Predicated region
    $region6: #{tpu_custom_call.1} parent=1 // pred_check
      _
    $region7: #{tpu_custom_call.1} parent=1 // pred_check_branch
      %23 = sbr.rel (0) target = $region9
    $region8: #{tpu_custom_call.1} parent=1 // pred_region
      _
    $region9: #{tpu_custom_call.1} parent=1 // pred_fallthru
      _
    // Predicated region
    $region10: #{tpu_custom_call.1} parent=1 // pred_check
      _
    $region11: #{tpu_custom_call.1} parent=1 // pred_check_branch
      %25 = sbr.rel (0) target = $region13
    $region12: #{tpu_custom_call.1} parent=1 // pred_region
      _
    $region13: #{tpu_custom_call.1} parent=1 // pred_fallthru
      _
    // Predicated region
    $region14: #{tpu_custom_call.1} parent=1 // pred_check
      _
    $region15: #{tpu_custom_call.1} parent=1 // pred_check_branch
      %27 = sbr.rel (0) target = $region17
    $region16: #{tpu_custom_call.1} parent=1 // pred_region
      _
    $region17: #{tpu_custom_call.1} parent=1 // pred_fallthru
      _
    // Predicated region
    $region18: #{tpu_custom_call.1} parent=1 // pred_check
      _
    $region19: #{tpu_custom_call.1} parent=1 // pred_check_branch
      %29 = sbr.rel (0) target = $region21
    $region20: #{tpu_custom_call.1} parent=1 // pred_region
      _
    $region21: #{tpu_custom_call.1} parent=1 // pred_fallthru
      _
    // Predicated region
    $region22: #{tpu_custom_call.1} parent=1 // pred_check
      _
    $region23: #{tpu_custom_call.1} parent=1 // pred_check_branch
      %31 = sbr.rel (0) target = $region25
    $region24: #{tpu_custom_call.1} parent=1 // pred_region
      _
    $region25: #{tpu_custom_call.1} parent=1 // pred_fallthru
      _
    // Predicated region
    $region26: #{tpu_custom_call.1} parent=1 // pred_check
      _
    $region27: #{tpu_custom_call.1} parent=1 // pred_check_branch
      %33 = sbr.rel (0) target = $region29
    $region28: #{tpu_custom_call.1} parent=1 // pred_region
      _
    $region29: #{tpu_custom_call.1} parent=1 // pred_fallthru
      _
    // Predicated region
    $region30: #{tpu_custom_call.1} parent=1 // pred_check
      _
    $region31: #{tpu_custom_call.1} parent=1 // pred_check_branch
      %35 = sbr.rel (0) target = $region33
    $region32: #{tpu_custom_call.1} parent=1 // pred_region
      _
    $region33: #{tpu_custom_call.1} parent=1 // pred_fallthru
      _
    // Predicated region
    $region34: #{tpu_custom_call.1} parent=1 // pred_check
      _
    $region35: #{tpu_custom_call.1} parent=1 // pred_check_branch
      %37 = sbr.rel (0) target = $region37
    $region36: #{tpu_custom_call.1} parent=1 // pred_region
      _
    $region37: #{tpu_custom_call.1} parent=1 // pred_fallthru
      _
    // Predicated region
    $region38: #{tpu_custom_call.1} parent=1 // pred_check
      _
    $region39: #{tpu_custom_call.1} parent=1 // pred_check_branch
      %39 = sbr.rel (0) target = $region41
    $region40: #{tpu_custom_call.1} parent=1 // pred_region
      _
    $region41: #{tpu_custom_call.1} parent=1 // pred_fallthru
      _
    // Predicated region
    $region42: #{tpu_custom_call.1} parent=1 // pred_check
      _
    $region43: #{tpu_custom_call.1} parent=1 // pred_check_branch
      %41 = sbr.rel (0) target = $region45
    $region44: #{tpu_custom_call.1} parent=1 // pred_region
      _
    $region45: #{tpu_custom_call.1} parent=1 // pred_fallthru
      _
    // Predicated region
    $region46: #{tpu_custom_call.1} parent=1 // pred_check
      _
    $region47: #{tpu_custom_call.1} parent=1 // pred_check_branch
      %43 = sbr.rel (0) target = $region49
    $region48: #{tpu_custom_call.1} parent=1 // pred_region
      _
    $region49: #{tpu_custom_call.1} parent=1 // pred_fallthru
      _
    %vm45 = vcmask 392192
    %46 = vst.msk [vmem:[#allocation2 + $0xf0] sm:$0xff] %vm45, 0.0
    %vm47 = vcmask 195584
    %48 = vst.msk [vmem:[#allocation3 + $0xf0] sm:$0xff] %vm47, 0.0
    %v49 = vld [vmem:[%s0] sm:$0xff]
    %v50 = vld [vmem:[%s0 + $0x8] sm:$0xff]
    %v51 = vld [vmem:[%s0 + $0x10] sm:$0xff]
    %v52 = vld [vmem:[%s0 + $0x18] sm:$0xff]
    %v53 = vld [vmem:[%s0 + $0x20] sm:$0xff]
    %v54 = vld [vmem:[%s0 + $0x28] sm:$0xff]
    %v55 = vld [vmem:[%s0 + $0x30] sm:$0xff]
    %v56 = vld [vmem:[%s0 + $0x38] sm:$0xff]
    %v57 = vld [vmem:[%s0 + $0x40] sm:$0xff]
    %v58 = vld [vmem:[%s0 + $0x48] sm:$0xff]
    %v59 = vld [vmem:[%s0 + $0x50] sm:$0xff]
    %v60 = vld [vmem:[%s0 + $0x58] sm:$0xff]
    %v61 = vld [vmem:[%s0 + $0x60] sm:$0xff]
    %v62 = vld [vmem:[%s0 + $0x68] sm:$0xff]
    %v63 = vld [vmem:[%s0 + $0x70] sm:$0xff]
    %v64 = vld [vmem:[%s0 + $0x78] sm:$0xff]
    %v65 = vld [vmem:[%s0 + $0x80] sm:$0xff]
    %v66 = vld [vmem:[%s0 + $0x88] sm:$0xff]
    %v67 = vld [vmem:[%s0 + $0x90] sm:$0xff]
    %v68 = vld [vmem:[%s0 + $0x98] sm:$0xff]
    %v69 = vld [vmem:[%s0 + $0xa0] sm:$0xff]
    %v70 = vld [vmem:[%s0 + $0xa8] sm:$0xff]
    %v71 = vld [vmem:[%s0 + $0xb0] sm:$0xff]
    %v72 = vld [vmem:[%s0 + $0xb8] sm:$0xff]
    %v73 = vld [vmem:[%s0 + $0xc0] sm:$0xff]
    %v74 = vld [vmem:[%s0 + $0xc8] sm:$0xff]
    %v75 = vld [vmem:[%s0 + $0xd0] sm:$0xff]
    %v76 = vld [vmem:[%s0 + $0xd8] sm:$0xff]
    %v77 = vld [vmem:[%s0 + $0xe0] sm:$0xff]
    %v78 = vld [vmem:[%s0 + $0xe8] sm:$0xff]
    %v79 = vpack.c.bf16 %v50, %v49
    %v80 = vpack.c.bf16 %v52, %v51
    %v81 = vpack.c.bf16 %v54, %v53
    %v82 = vpack.c.bf16 %v56, %v55
    %v83 = vpack.c.bf16 %v58, %v57
    %v84 = vpack.c.bf16 %v60, %v59
    %v85 = vpack.c.bf16 %v62, %v61
    %v86 = vpack.c.bf16 %v64, %v63
    %v87 = vpack.c.bf16 %v66, %v65
    %v88 = vpack.c.bf16 %v68, %v67
    %v89 = vpack.c.bf16 %v70, %v69
    %v90 = vpack.c.bf16 %v72, %v71
    %v91 = vpack.c.bf16 %v74, %v73
    %v92 = vpack.c.bf16 %v76, %v75
    %v93 = vpack.c.bf16 %v78, %v77
    %v94 = vld [vmem:[%s2] sm:$0xf]
    %v95 = vld [vmem:[%s2 + $0x4] sm:$0xf]
    %v96 = vld [vmem:[%s2 + $0x8] sm:$0xf]
    %v97 = vld [vmem:[%s2 + $0xc] sm:$0xf]
    %v98 = vld [vmem:[%s2 + $0x10] sm:$0xf]
    %v99 = vld [vmem:[%s2 + $0x14] sm:$0xf]
    %v100 = vld [vmem:[%s2 + $0x18] sm:$0xf]
    %v101 = vld [vmem:[%s2 + $0x1c] sm:$0xf]
    %v102 = vld [vmem:[%s2 + $0x20] sm:$0xf]
    %v103 = vld [vmem:[%s2 + $0x24] sm:$0xf]
    %v104 = vld [vmem:[%s2 + $0x28] sm:$0xf]
    %v105 = vld [vmem:[%s2 + $0x2c] sm:$0xf]
    %v106 = vld [vmem:[%s2 + $0x30] sm:$0xf]
    %v107 = vld [vmem:[%s2 + $0x34] sm:$0xf]
    %v108 = vld [vmem:[%s0 + $0x1] sm:$0xff]
    %v109 = vld [vmem:[%s0 + $0x9] sm:$0xff]
    %v110 = vld [vmem:[%s0 + $0x11] sm:$0xff]
    %v111 = vld [vmem:[%s0 + $0x19] sm:$0xff]
    %v112 = vld [vmem:[%s0 + $0x21] sm:$0xff]
    %v113 = vld [vmem:[%s0 + $0x29] sm:$0xff]
    %v114 = vld [vmem:[%s0 + $0x31] sm:$0xff]
    %v115 = vld [vmem:[%s0 + $0x39] sm:$0xff]
    %v116 = vld [vmem:[%s0 + $0x41] sm:$0xff]
    %v117 = vld [vmem:[%s0 + $0x49] sm:$0xff]
    %v118 = vld [vmem:[%s0 + $0x51] sm:$0xff]
    %v119 = vld [vmem:[%s0 + $0x59] sm:$0xff]
    %v120 = vld [vmem:[%s0 + $0x61] sm:$0xff]
    %v121 = vld [vmem:[%s0 + $0x69] sm:$0xff]
    %v122 = vld [vmem:[%s0 + $0x71] sm:$0xff]
    %v123 = vld [vmem:[%s0 + $0x79] sm:$0xff]
    %v124 = vld [vmem:[%s0 + $0x81] sm:$0xff]
    %v125 = vld [vmem:[%s0 + $0x89] sm:$0xff]
    %v126 = vld [vmem:[%s0 + $0x91] sm:$0xff]
    %v127 = vld [vmem:[%s0 + $0x99] sm:$0xff]
    %v128 = vld [vmem:[%s0 + $0xa1] sm:$0xff]
    %v129 = vld [vmem:[%s0 + $0xa9] sm:$0xff]
    %v130 = vld [vmem:[%s0 + $0xb1] sm:$0xff]
    %v131 = vld [vmem:[%s0 + $0xb9] sm:$0xff]
    %v132 = vld [vmem:[%s0 + $0xc1] sm:$0xff]
    %v133 = vld [vmem:[%s0 + $0xc9] sm:$0xff]
    %v134 = vld [vmem:[%s0 + $0xd1] sm:$0xff]
    %v135 = vld [vmem:[%s0 + $0xd9] sm:$0xff]
    %v136 = vld [vmem:[%s0 + $0xe1] sm:$0xff]
    %v137 = vld [vmem:[%s0 + $0xe9] sm:$0xff]
    %v138 = vpack.c.bf16 %v109, %v108
    %v139 = vpack.c.bf16 %v111, %v110
    %v140 = vpack.c.bf16 %v113, %v112
    %v141 = vpack.c.bf16 %v115, %v114
    %v142 = vpack.c.bf16 %v117, %v116
    %v143 = vpack.c.bf16 %v119, %v118
    %v144 = vpack.c.bf16 %v121, %v120
    %v145 = vpack.c.bf16 %v123, %v122
    %v146 = vpack.c.bf16 %v125, %v124
    %v147 = vpack.c.bf16 %v127, %v126
    %v148 = vpack.c.bf16 %v129, %v128
    %v149 = vpack.c.bf16 %v131, %v130
    %v150 = vpack.c.bf16 %v133, %v132
    %v151 = vpack.c.bf16 %v135, %v134
    %v152 = vpack.c.bf16 %v137, %v136
    %s153 = scalar_lea.vmem %s2, 56
    %v154 = vld [vmem:[%s153] sm:$0xf]
    %v155 = vld [vmem:[%s153 + $0x4] sm:$0xf]
    %v156 = vld [vmem:[%s153 + $0x8] sm:$0xf]
    %v157 = vld [vmem:[%s153 + $0xc] sm:$0xf]
    %v158 = vld [vmem:[%s153 + $0x10] sm:$0xf]
    %v159 = vld [vmem:[%s153 + $0x14] sm:$0xf]
    %v160 = vld [vmem:[%s153 + $0x18] sm:$0xf]
    %v161 = vld [vmem:[%s153 + $0x1c] sm:$0xf]
    %v162 = vld [vmem:[%s153 + $0x20] sm:$0xf]
    %v163 = vld [vmem:[%s153 + $0x24] sm:$0xf]
    %v164 = vld [vmem:[%s153 + $0x28] sm:$0xf]
    %v165 = vld [vmem:[%s153 + $0x2c] sm:$0xf]
    %v166 = vld [vmem:[%s153 + $0x30] sm:$0xf]
    %v167 = vld [vmem:[%s153 + $0x34] sm:$0xf]
    %v182 = vunpack.c.l.b16 %v154
    %v183 = vunpack.c.l.b16 %v155
    %v184 = vunpack.c.l.b16 %v156
    %v185 = vunpack.c.l.b16 %v157
    %v186 = vunpack.c.l.b16 %v158
    %v187 = vunpack.c.l.b16 %v159
    %v188 = vunpack.c.l.b16 %v160
    %v189 = vunpack.c.l.b16 %v161
    %v190 = vunpack.c.l.b16 %v162
    %v191 = vunpack.c.l.b16 %v163
    %v192 = vunpack.c.l.b16 %v164
    %v193 = vunpack.c.l.b16 %v165
    %v194 = vunpack.c.l.b16 %v166
    %v195 = vunpack.c.l.b16 %v167
    %v196 = vpack.c.b16 %v183, %v182
    %v197 = vpack.c.b16 %v185, %v184
    %v198 = vpack.c.b16 %v187, %v186
    %v199 = vpack.c.b16 %v189, %v188
    %v200 = vpack.c.b16 %v191, %v190
    %v201 = vpack.c.b16 %v193, %v192
    %v202 = vpack.c.b16 %v195, %v194
    %vm210 = vcmask 916480
    %v212 = vsel %vm210, %v138, 0
    %v215 = vsel %vm210, %v139, 0
    %v218 = vsel %vm210, %v140, 0
    %v221 = vsel %vm210, %v141, 0
    %v224 = vsel %vm210, %v142, 0
    %v227 = vsel %vm210, %v143, 0
    %v230 = vsel %vm210, %v144, 0
    %v233 = vsel %vm210, %v145, 0
    %v236 = vsel %vm210, %v146, 0
    %v239 = vsel %vm210, %v147, 0
    %v242 = vsel %vm210, %v148, 0
    %v245 = vsel %vm210, %v149, 0
    %v248 = vsel %vm210, %v150, 0
    %v251 = vsel %vm210, %v151, 0
    %v254 = vsel %vm210, %v152, 0
    %256 = vmatprep.subr.bf16.mxu0 0
    %257 = vmatpush1.bf16.msra.mxu0 %v196
    %258 = vmatprep.subr.bf16.mxu0 0
    %259 = vmatpush1.bf16.msra.mxu0 %v197
    %260 = vmatprep.subr.bf16.mxu0 0
    %261 = vmatpush1.bf16.msra.mxu0 %v198
    %262 = vmatprep.subr.bf16.mxu0 0
    %263 = vmatpush1.bf16.msra.mxu0 %v199
    %264 = vmatprep.subr.bf16.mxu0 0
    %265 = vmatpush1.bf16.msra.mxu0 %v200
    %266 = vmatprep.subr.bf16.mxu0 0
    %267 = vmatpush1.bf16.msra.mxu0 %v201
    %268 = vmatprep.subr.bf16.mxu0 0
    %269 = vmatpush1.bf16.msra.mxu0 %v202
    %270 = vmatprep.subr.bf16.mxu0 0
    %271 = vmatpush1.bf16.msra.mxu0 0
    %272 = vmatprep.subr.bf16.mxu0 0
    %273 = vmatpush1.bf16.msra.mxu0 0
    %274 = vmatprep.subr.bf16.mxu0 0
    %275 = vmatpush1.bf16.msra.mxu0 0
    %276 = vmatprep.subr.bf16.mxu0 0
    %277 = vmatpush1.bf16.msra.mxu0 0
    %278 = vmatprep.subr.bf16.mxu0 0
    %279 = vmatpush1.bf16.msra.mxu0 0
    %280 = vmatprep.subr.bf16.mxu0 0
    %281 = vmatpush1.bf16.msra.mxu0 0
    %282 = vmatprep.subr.bf16.mxu0 0
    %283 = vmatpush1.bf16.msra.mxu0 0
    %284 = vmatprep.subr.bf16.mxu0 0
    %285 = vmatpush1.bf16.msra.mxu0 0
    %286 = vmatprep.subr.bf16.mxu0 0
    %287 = vmatpush1.bf16.msra.mxu0 0
    %288 = vmatprep.mubr.bf16.mxu0 0
    %289 = vmatmul.mubr.bf16.gmra.mrb[0].mxu0 %v212
    %v290 = vpop.f32.mrb[0].mxu0
    %v291 = vadd.f32 0.0, %v290
    %v292 = vpop.f32.mrb[0].mxu0
    %v293 = vpop.f32.mrb[0].mxu0
    %v294 = vadd.f32 0.0, %v293
    %v295 = vpop.f32.mrb[0].mxu0
    %296 = vmatprep.mubr.bf16.mxu0 0
    %297 = vmatmul.mubr.bf16.gmra.mrb[0].mxu0 %v215
    %v298 = vpop.f32.mrb[0].mxu0
    %v299 = vadd.f32 0.0, %v298
    %v300 = vpop.f32.mrb[0].mxu0
    %v301 = vpop.f32.mrb[0].mxu0
    %v302 = vadd.f32 0.0, %v301
    %v303 = vpop.f32.mrb[0].mxu0
    %304 = vmatprep.mubr.bf16.mxu0 0
    %305 = vmatmul.mubr.bf16.gmra.mrb[0].mxu0 %v218
    %v306 = vpop.f32.mrb[0].mxu0
    %v307 = vadd.f32 0.0, %v306
    %v308 = vpop.f32.mrb[0].mxu0
    %v309 = vpop.f32.mrb[0].mxu0
    %v310 = vadd.f32 0.0, %v309
    %v311 = vpop.f32.mrb[0].mxu0
    %312 = vmatprep.mubr.bf16.mxu0 0
    %313 = vmatmul.mubr.bf16.gmra.mrb[0].mxu0 %v221
    %v314 = vpop.f32.mrb[0].mxu0
    %v315 = vadd.f32 0.0, %v314
    %v316 = vpop.f32.mrb[0].mxu0
    %v317 = vpop.f32.mrb[0].mxu0
    %v318 = vadd.f32 0.0, %v317
    %v319 = vpop.f32.mrb[0].mxu0
    %320 = vmatprep.mubr.bf16.mxu0 0
    %321 = vmatmul.mubr.bf16.gmra.mrb[0].mxu0 %v224
    %v322 = vpop.f32.mrb[0].mxu0
    %v323 = vadd.f32 0.0, %v322
    %v324 = vpop.f32.mrb[0].mxu0
    %v325 = vpop.f32.mrb[0].mxu0
    %v326 = vadd.f32 0.0, %v325
    %v327 = vpop.f32.mrb[0].mxu0
    %328 = vmatprep.mubr.bf16.mxu0 0
    %329 = vmatmul.mubr.bf16.gmra.mrb[0].mxu0 %v227
    %v330 = vpop.f32.mrb[0].mxu0
    %v331 = vadd.f32 0.0, %v330
    %v332 = vpop.f32.mrb[0].mxu0
    %v333 = vpop.f32.mrb[0].mxu0
    %v334 = vadd.f32 0.0, %v333
    %v335 = vpop.f32.mrb[0].mxu0
    %336 = vmatprep.mubr.bf16.mxu0 0
    %337 = vmatmul.mubr.bf16.gmra.mrb[0].mxu0 %v230
    %v338 = vpop.f32.mrb[0].mxu0
    %v339 = vadd.f32 0.0, %v338
    %v340 = vpop.f32.mrb[0].mxu0
    %v341 = vpop.f32.mrb[0].mxu0
    %v342 = vadd.f32 0.0, %v341
    %v343 = vpop.f32.mrb[0].mxu0
    %344 = vmatprep.mubr.bf16.mxu0 0
    %345 = vmatmul.mubr.bf16.gmra.mrb[0].mxu0 %v233
    %v346 = vpop.f32.mrb[0].mxu0
    %v347 = vadd.f32 0.0, %v346
    %v348 = vpop.f32.mrb[0].mxu0
    %v349 = vpop.f32.mrb[0].mxu0
    %v350 = vadd.f32 0.0, %v349
    %v351 = vpop.f32.mrb[0].mxu0
    %352 = vmatprep.mubr.bf16.mxu0 0
    %353 = vmatmul.mubr.bf16.gmra.mrb[0].mxu0 %v236
    %v354 = vpop.f32.mrb[0].mxu0
    %v355 = vadd.f32 0.0, %v354
    %v356 = vpop.f32.mrb[0].mxu0
    %v357 = vpop.f32.mrb[0].mxu0
    %v358 = vadd.f32 0.0, %v357
    %v359 = vpop.f32.mrb[0].mxu0
    %360 = vmatprep.mubr.bf16.mxu0 0
    %361 = vmatmul.mubr.bf16.gmra.mrb[0].mxu0 %v239
    %v362 = vpop.f32.mrb[0].mxu0
    %v363 = vadd.f32 0.0, %v362
    %v364 = vpop.f32.mrb[0].mxu0
    %v365 = vpop.f32.mrb[0].mxu0
    %v366 = vadd.f32 0.0, %v365
    %v367 = vpop.f32.mrb[0].mxu0
    %368 = vmatprep.mubr.bf16.mxu0 0
    %369 = vmatmul.mubr.bf16.gmra.mrb[0].mxu0 %v242
    %v370 = vpop.f32.mrb[0].mxu0
    %v371 = vadd.f32 0.0, %v370
    %v372 = vpop.f32.mrb[0].mxu0
    %v373 = vpop.f32.mrb[0].mxu0
    %v374 = vadd.f32 0.0, %v373
    %v375 = vpop.f32.mrb[0].mxu0
    %376 = vmatprep.mubr.bf16.mxu0 0
    %377 = vmatmul.mubr.bf16.gmra.mrb[0].mxu0 %v245
    %v378 = vpop.f32.mrb[0].mxu0
    %v379 = vadd.f32 0.0, %v378
    %v380 = vpop.f32.mrb[0].mxu0
    %v381 = vpop.f32.mrb[0].mxu0
    %v382 = vadd.f32 0.0, %v381
    %v383 = vpop.f32.mrb[0].mxu0
    %384 = vmatprep.mubr.bf16.mxu0 0
    %385 = vmatmul.mubr.bf16.gmra.mrb[0].mxu0 %v248
    %v386 = vpop.f32.mrb[0].mxu0
    %v387 = vadd.f32 0.0, %v386
    %v388 = vpop.f32.mrb[0].mxu0
    %v389 = vpop.f32.mrb[0].mxu0
    %v390 = vadd.f32 0.0, %v389
    %v391 = vpop.f32.mrb[0].mxu0
    %392 = vmatprep.mubr.bf16.mxu0 0
    %393 = vmatmul.mubr.bf16.gmra.mrb[0].mxu0 %v251
    %v394 = vpop.f32.mrb[0].mxu0
    %v395 = vadd.f32 0.0, %v394
    %v396 = vpop.f32.mrb[0].mxu0
    %v397 = vpop.f32.mrb[0].mxu0
    %v398 = vadd.f32 0.0, %v397
    %v399 = vpop.f32.mrb[0].mxu0
    %400 = vmatprep.mubr.bf16.mxu0 0
    %401 = vmatmul.mubr.bf16.gmra.mrb[0].mxu0 %v254
    %v402 = vpop.f32.mrb[0].mxu0
    %v403 = vadd.f32 0.0, %v402
    %v404 = vpop.f32.mrb[0].mxu0
    %v405 = vpop.f32.mrb[0].mxu0
    %v406 = vadd.f32 0.0, %v405
    %v407 = vpop.f32.mrb[0].mxu0
    %408 = vdwg.mxu0
    %v423 = vunpack.c.l.b16 %v94
    %v424 = vunpack.c.l.b16 %v95
    %v425 = vunpack.c.l.b16 %v96
    %v426 = vunpack.c.l.b16 %v97
    %v427 = vunpack.c.l.b16 %v98
    %v428 = vunpack.c.l.b16 %v99
    %v429 = vunpack.c.l.b16 %v100
    %v430 = vunpack.c.l.b16 %v101
    %v431 = vunpack.c.l.b16 %v102
    %v432 = vunpack.c.l.b16 %v103
    %v433 = vunpack.c.l.b16 %v104
    %v434 = vunpack.c.l.b16 %v105
    %v435 = vunpack.c.l.b16 %v106
    %v436 = vunpack.c.l.b16 %v107
    %v437 = vpack.c.b16 %v424, %v423
    %v438 = vpack.c.b16 %v426, %v425
    %v439 = vpack.c.b16 %v428, %v427
    %v440 = vpack.c.b16 %v430, %v429
    %v441 = vpack.c.b16 %v432, %v431
    %v442 = vpack.c.b16 %v434, %v433
    %v443 = vpack.c.b16 %v436, %v435
    %v452 = vsel %vm210, %v79, 0
    %v455 = vsel %vm210, %v80, 0
    %v458 = vsel %vm210, %v81, 0
    %v461 = vsel %vm210, %v82, 0
    %v464 = vsel %vm210, %v83, 0
    %v467 = vsel %vm210, %v84, 0
    %v470 = vsel %vm210, %v85, 0
    %v473 = vsel %vm210, %v86, 0
    %v476 = vsel %vm210, %v87, 0
    %v479 = vsel %vm210, %v88, 0
    %v482 = vsel %vm210, %v89, 0
    %v485 = vsel %vm210, %v90, 0
    %v488 = vsel %vm210, %v91, 0
    %v491 = vsel %vm210, %v92, 0
    %v494 = vsel %vm210, %v93, 0
    %496 = vmatprep.subr.bf16.mxu0 0
    %497 = vmatpush1.bf16.msra.mxu0 %v437
    %498 = vmatprep.subr.bf16.mxu0 0
    %499 = vmatpush1.bf16.msra.mxu0 %v438
    %500 = vmatprep.subr.bf16.mxu0 0
    %501 = vmatpush1.bf16.msra.mxu0 %v439
    %502 = vmatprep.subr.bf16.mxu0 0
    %503 = vmatpush1.bf16.msra.mxu0 %v440
    %504 = vmatprep.subr.bf16.mxu0 0
    %505 = vmatpush1.bf16.msra.mxu0 %v441
    %506 = vmatprep.subr.bf16.mxu0 0
    %507 = vmatpush1.bf16.msra.mxu0 %v442
    %508 = vmatprep.subr.bf16.mxu0 0
    %509 = vmatpush1.bf16.msra.mxu0 %v443
    %510 = vmatprep.subr.bf16.mxu0 0
    %511 = vmatpush1.bf16.msra.mxu0 0
    %512 = vmatprep.subr.bf16.mxu0 0
    %513 = vmatpush1.bf16.msra.mxu0 0
    %514 = vmatprep.subr.bf16.mxu0 0
    %515 = vmatpush1.bf16.msra.mxu0 0
    %516 = vmatprep.subr.bf16.mxu0 0
    %517 = vmatpush1.bf16.msra.mxu0 0
    %518 = vmatprep.subr.bf16.mxu0 0
    %519 = vmatpush1.bf16.msra.mxu0 0
    %520 = vmatprep.subr.bf16.mxu0 0
    %521 = vmatpush1.bf16.msra.mxu0 0
    %522 = vmatprep.subr.bf16.mxu0 0
    %523 = vmatpush1.bf16.msra.mxu0 0
    %524 = vmatprep.subr.bf16.mxu0 0
    %525 = vmatpush1.bf16.msra.mxu0 0
    %526 = vmatprep.subr.bf16.mxu0 0
    %527 = vmatpush1.bf16.msra.mxu0 0
    %528 = vmatprep.mubr.bf16.mxu0 0
    %529 = vmatmul.mubr.bf16.gmra.mrb[0].mxu0 %v452
    %v530 = vpop.f32.mrb[0].mxu0
    %v531 = vadd.f32 %v291, %v530
    %v532 = vpop.f32.mrb[0].mxu0
    %v533 = vpop.f32.mrb[0].mxu0
    %v534 = vadd.f32 %v294, %v533
    %v535 = vpop.f32.mrb[0].mxu0
    %536 = vmatprep.mubr.bf16.mxu0 0
    %537 = vmatmul.mubr.bf16.gmra.mrb[0].mxu0 %v455
    %v538 = vpop.f32.mrb[0].mxu0
    %v539 = vadd.f32 %v299, %v538
    %v540 = vpop.f32.mrb[0].mxu0
    %v541 = vpop.f32.mrb[0].mxu0
    %v542 = vadd.f32 %v302, %v541
    %v543 = vpop.f32.mrb[0].mxu0
    %544 = vmatprep.mubr.bf16.mxu0 0
    %545 = vmatmul.mubr.bf16.gmra.mrb[0].mxu0 %v458
    %v546 = vpop.f32.mrb[0].mxu0
    %v547 = vadd.f32 %v307, %v546
    %v548 = vpop.f32.mrb[0].mxu0
    %v549 = vpop.f32.mrb[0].mxu0
    %v550 = vadd.f32 %v310, %v549
    %v551 = vpop.f32.mrb[0].mxu0
    %552 = vmatprep.mubr.bf16.mxu0 0
    %553 = vmatmul.mubr.bf16.gmra.mrb[0].mxu0 %v461
    %v554 = vpop.f32.mrb[0].mxu0
    %v555 = vadd.f32 %v315, %v554
    %v556 = vpop.f32.mrb[0].mxu0
    %v557 = vpop.f32.mrb[0].mxu0
    %v558 = vadd.f32 %v318, %v557
    %v559 = vpop.f32.mrb[0].mxu0
    %560 = vmatprep.mubr.bf16.mxu0 0
    %561 = vmatmul.mubr.bf16.gmra.mrb[0].mxu0 %v464
    %v562 = vpop.f32.mrb[0].mxu0
    %v563 = vadd.f32 %v323, %v562
    %v564 = vpop.f32.mrb[0].mxu0
    %v565 = vpop.f32.mrb[0].mxu0
    %v566 = vadd.f32 %v326, %v565
    %v567 = vpop.f32.mrb[0].mxu0
    %568 = vmatprep.mubr.bf16.mxu0 0
    %569 = vmatmul.mubr.bf16.gmra.mrb[0].mxu0 %v467
    %v570 = vpop.f32.mrb[0].mxu0
    %v571 = vadd.f32 %v331, %v570
    %v572 = vpop.f32.mrb[0].mxu0
    %v573 = vpop.f32.mrb[0].mxu0
    %v574 = vadd.f32 %v334, %v573
    %v575 = vpop.f32.mrb[0].mxu0
    %576 = vmatprep.mubr.bf16.mxu0 0
    %577 = vmatmul.mubr.bf16.gmra.mrb[0].mxu0 %v470
    %v578 = vpop.f32.mrb[0].mxu0
    %v579 = vadd.f32 %v339, %v578
    %v580 = vpop.f32.mrb[0].mxu0
    %v581 = vpop.f32.mrb[0].mxu0
    %v582 = vadd.f32 %v342, %v581
    %v583 = vpop.f32.mrb[0].mxu0
    %584 = vmatprep.mubr.bf16.mxu0 0
    %585 = vmatmul.mubr.bf16.gmra.mrb[0].mxu0 %v473
    %v586 = vpop.f32.mrb[0].mxu0
    %v587 = vadd.f32 %v347, %v586
    %v588 = vpop.f32.mrb[0].mxu0
    %v589 = vpop.f32.mrb[0].mxu0
    %v590 = vadd.f32 %v350, %v589
    %v591 = vpop.f32.mrb[0].mxu0
    %592 = vmatprep.mubr.bf16.mxu0 0
    %593 = vmatmul.mubr.bf16.gmra.mrb[0].mxu0 %v476
    %v594 = vpop.f32.mrb[0].mxu0
    %v595 = vadd.f32 %v355, %v594
    %v596 = vpop.f32.mrb[0].mxu0
    %v597 = vpop.f32.mrb[0].mxu0
    %v598 = vadd.f32 %v358, %v597
    %v599 = vpop.f32.mrb[0].mxu0
    %600 = vmatprep.mubr.bf16.mxu0 0
    %601 = vmatmul.mubr.bf16.gmra.mrb[0].mxu0 %v479
    %v602 = vpop.f32.mrb[0].mxu0
    %v603 = vadd.f32 %v363, %v602
    %v604 = vpop.f32.mrb[0].mxu0
    %v605 = vpop.f32.mrb[0].mxu0
    %v606 = vadd.f32 %v366, %v605
    %v607 = vpop.f32.mrb[0].mxu0
    %608 = vmatprep.mubr.bf16.mxu0 0
    %609 = vmatmul.mubr.bf16.gmra.mrb[0].mxu0 %v482
    %v610 = vpop.f32.mrb[0].mxu0
    %v611 = vadd.f32 %v371, %v610
    %v612 = vpop.f32.mrb[0].mxu0
    %v613 = vpop.f32.mrb[0].mxu0
    %v614 = vadd.f32 %v374, %v613
    %v615 = vpop.f32.mrb[0].mxu0
    %616 = vmatprep.mubr.bf16.mxu0 0
    %617 = vmatmul.mubr.bf16.gmra.mrb[0].mxu0 %v485
    %v618 = vpop.f32.mrb[0].mxu0
    %v619 = vadd.f32 %v379, %v618
    %v620 = vpop.f32.mrb[0].mxu0
    %v621 = vpop.f32.mrb[0].mxu0
    %v622 = vadd.f32 %v382, %v621
    %v623 = vpop.f32.mrb[0].mxu0
    %624 = vmatprep.mubr.bf16.mxu0 0
    %625 = vmatmul.mubr.bf16.gmra.mrb[0].mxu0 %v488
    %v626 = vpop.f32.mrb[0].mxu0
    %v627 = vadd.f32 %v387, %v626
    %v628 = vpop.f32.mrb[0].mxu0
    %v629 = vpop.f32.mrb[0].mxu0
    %v630 = vadd.f32 %v390, %v629
    %v631 = vpop.f32.mrb[0].mxu0
    %632 = vmatprep.mubr.bf16.mxu0 0
    %633 = vmatmul.mubr.bf16.gmra.mrb[0].mxu0 %v491
    %v634 = vpop.f32.mrb[0].mxu0
    %v635 = vadd.f32 %v395, %v634
    %v636 = vpop.f32.mrb[0].mxu0
    %v637 = vpop.f32.mrb[0].mxu0
    %v638 = vadd.f32 %v398, %v637
    %v639 = vpop.f32.mrb[0].mxu0
    %640 = vmatprep.mubr.bf16.mxu0 0
    %641 = vmatmul.mubr.bf16.gmra.mrb[0].mxu0 %v494
    %v642 = vpop.f32.mrb[0].mxu0
    %v643 = vadd.f32 %v403, %v642
    %v644 = vpop.f32.mrb[0].mxu0
    %v645 = vpop.f32.mrb[0].mxu0
    %v646 = vadd.f32 %v406, %v645
    %v647 = vpop.f32.mrb[0].mxu0
    %648 = vdwg.mxu0
    %v649 = vld [vmem:[%s0 + $0x2] sm:$0xff]
    %v650 = vld [vmem:[%s0 + $0xa] sm:$0xff]
    %v651 = vld [vmem:[%s0 + $0x12] sm:$0xff]
    %v652 = vld [vmem:[%s0 + $0x1a] sm:$0xff]
    %v653 = vld [vmem:[%s0 + $0x22] sm:$0xff]
    %v654 = vld [vmem:[%s0 + $0x2a] sm:$0xff]
    %v655 = vld [vmem:[%s0 + $0x32] sm:$0xff]
    %v656 = vld [vmem:[%s0 + $0x3a] sm:$0xff]
    %v657 = vld [vmem:[%s0 + $0x42] sm:$0xff]
    %v658 = vld [vmem:[%s0 + $0x4a] sm:$0xff]
    %v659 = vld [vmem:[%s0 + $0x52] sm:$0xff]
    %v660 = vld [vmem:[%s0 + $0x5a] sm:$0xff]
    %v661 = vld [vmem:[%s0 + $0x62] sm:$0xff]
    %v662 = vld [vmem:[%s0 + $0x6a] sm:$0xff]
    %v663 = vld [vmem:[%s0 + $0x72] sm:$0xff]
    %v664 = vld [vmem:[%s0 + $0x7a] sm:$0xff]
    %v665 = vld [vmem:[%s0 + $0x82] sm:$0xff]
    %v666 = vld [vmem:[%s0 + $0x8a] sm:$0xff]
    %v667 = vld [vmem:[%s0 + $0x92] sm:$0xff]
    %v668 = vld [vmem:[%s0 + $0x9a] sm:$0xff]
    %v669 = vld [vmem:[%s0 + $0xa2] sm:$0xff]
    %v670 = vld [vmem:[%s0 + $0xaa] sm:$0xff]
    %v671 = vld [vmem:[%s0 + $0xb2] sm:$0xff]
    %v672 = vld [vmem:[%s0 + $0xba] sm:$0xff]
    %v673 = vld [vmem:[%s0 + $0xc2] sm:$0xff]
    %v674 = vld [vmem:[%s0 + $0xca] sm:$0xff]
    %v675 = vld [vmem:[%s0 + $0xd2] sm:$0xff]
    %v676 = vld [vmem:[%s0 + $0xda] sm:$0xff]
    %v677 = vld [vmem:[%s0 + $0xe2] sm:$0xff]
    %v678 = vld [vmem:[%s0 + $0xea] sm:$0xff]
    %v679 = vpack.c.bf16 %v650, %v649
    %v680 = vpack.c.bf16 %v652, %v651
    %v681 = vpack.c.bf16 %v654, %v653
    %v682 = vpack.c.bf16 %v656, %v655
    %v683 = vpack.c.bf16 %v658, %v657
    %v684 = vpack.c.bf16 %v660, %v659
    %v685 = vpack.c.bf16 %v662, %v661
    %v686 = vpack.c.bf16 %v664, %v663
    %v687 = vpack.c.bf16 %v666, %v665
    %v688 = vpack.c.bf16 %v668, %v667
    %v689 = vpack.c.bf16 %v670, %v669
    %v690 = vpack.c.bf16 %v672, %v671
    %v691 = vpack.c.bf16 %v674, %v673
    %v692 = vpack.c.bf16 %v676, %v675
    %v693 = vpack.c.bf16 %v678, %v677
    %s694 = scalar_lea.vmem %s2, 112
    %v695 = vld [vmem:[%s694] sm:$0xf]
    %v696 = vld [vmem:[%s694 + $0x4] sm:$0xf]
    %v697 = vld [vmem:[%s694 + $0x8] sm:$0xf]
    %v698 = vld [vmem:[%s694 + $0xc] sm:$0xf]
    %v699 = vld [vmem:[%s694 + $0x10] sm:$0xf]
    %v700 = vld [vmem:[%s694 + $0x14] sm:$0xf]
    %v701 = vld [vmem:[%s694 + $0x18] sm:$0xf]
    %v702 = vld [vmem:[%s694 + $0x1c] sm:$0xf]
    %v703 = vld [vmem:[%s694 + $0x20] sm:$0xf]
    %v704 = vld [vmem:[%s694 + $0x24] sm:$0xf]
    %v705 = vld [vmem:[%s694 + $0x28] sm:$0xf]
    %v706 = vld [vmem:[%s694 + $0x2c] sm:$0xf]
    %v707 = vld [vmem:[%s694 + $0x30] sm:$0xf]
    %v708 = vld [vmem:[%s694 + $0x34] sm:$0xf]
    %v723 = vunpack.c.l.b16 %v695
    %v724 = vunpack.c.l.b16 %v696
    %v725 = vunpack.c.l.b16 %v697
    %v726 = vunpack.c.l.b16 %v698
    %v727 = vunpack.c.l.b16 %v699
    %v728 = vunpack.c.l.b16 %v700
    %v729 = vunpack.c.l.b16 %v701
    %v730 = vunpack.c.l.b16 %v702
    %v731 = vunpack.c.l.b16 %v703
    %v732 = vunpack.c.l.b16 %v704
    %v733 = vunpack.c.l.b16 %v705
    %v734 = vunpack.c.l.b16 %v706
    %v735 = vunpack.c.l.b16 %v707
    %v736 = vunpack.c.l.b16 %v708
    %v737 = vpack.c.b16 %v724, %v723
    %v738 = vpack.c.b16 %v726, %v725
    %v739 = vpack.c.b16 %v728, %v727
    %v740 = vpack.c.b16 %v730, %v729
    %v741 = vpack.c.b16 %v732, %v731
    %v742 = vpack.c.b16 %v734, %v733
    %v743 = vpack.c.b16 %v736, %v735
    %v752 = vsel %vm210, %v679, 0
    %v755 = vsel %vm210, %v680, 0
    %v758 = vsel %vm210, %v681, 0
    %v761 = vsel %vm210, %v682, 0
    %v764 = vsel %vm210, %v683, 0
    %v767 = vsel %vm210, %v684, 0
    %v770 = vsel %vm210, %v685, 0
    %v773 = vsel %vm210, %v686, 0
    %v776 = vsel %vm210, %v687, 0
    %v779 = vsel %vm210, %v688, 0
    %v782 = vsel %vm210, %v689, 0
    %v785 = vsel %vm210, %v690, 0
    %v788 = vsel %vm210, %v691, 0
    %v791 = vsel %vm210, %v692, 0
    %v794 = vsel %vm210, %v693, 0
    %796 = vmatprep.subr.bf16.mxu0 0
    %797 = vmatpush1.bf16.msra.mxu0 %v737
    %798 = vmatprep.subr.bf16.mxu0 0
    %799 = vmatpush1.bf16.msra.mxu0 %v738
    %800 = vmatprep.subr.bf16.mxu0 0
    %801 = vmatpush1.bf16.msra.mxu0 %v739
    %802 = vmatprep.subr.bf16.mxu0 0
    %803 = vmatpush1.bf16.msra.mxu0 %v740
    %804 = vmatprep.subr.bf16.mxu0 0
    %805 = vmatpush1.bf16.msra.mxu0 %v741
    %806 = vmatprep.subr.bf16.mxu0 0
    %807 = vmatpush1.bf16.msra.mxu0 %v742
    %808 = vmatprep.subr.bf16.mxu0 0
    %809 = vmatpush1.bf16.msra.mxu0 %v743
    %810 = vmatprep.subr.bf16.mxu0 0
    %811 = vmatpush1.bf16.msra.mxu0 0
    %812 = vmatprep.subr.bf16.mxu0 0
    %813 = vmatpush1.bf16.msra.mxu0 0
    %814 = vmatprep.subr.bf16.mxu0 0
    %815 = vmatpush1.bf16.msra.mxu0 0
    %816 = vmatprep.subr.bf16.mxu0 0
    %817 = vmatpush1.bf16.msra.mxu0 0
    %818 = vmatprep.subr.bf16.mxu0 0
    %819 = vmatpush1.bf16.msra.mxu0 0
    %820 = vmatprep.subr.bf16.mxu0 0
    %821 = vmatpush1.bf16.msra.mxu0 0
    %822 = vmatprep.subr.bf16.mxu0 0
    %823 = vmatpush1.bf16.msra.mxu0 0
    %824 = vmatprep.subr.bf16.mxu0 0
    %825 = vmatpush1.bf16.msra.mxu0 0
    %826 = vmatprep.subr.bf16.mxu0 0
    %827 = vmatpush1.bf16.msra.mxu0 0
    %828 = vmatprep.mubr.bf16.mxu0 0
    %829 = vmatmul.mubr.bf16.gmra.mrb[0].mxu0 %v752
    %v830 = vpop.f32.mrb[0].mxu0
    %v831 = vadd.f32 0.0, %v830
    %v832 = vpop.f32.mrb[0].mxu0
    %v833 = vpop.f32.mrb[0].mxu0
    %v834 = vadd.f32 0.0, %v833
    %v835 = vpop.f32.mrb[0].mxu0
    %836 = vmatprep.mubr.bf16.mxu0 0
    %837 = vmatmul.mubr.bf16.gmra.mrb[0].mxu0 %v755
    %v838 = vpop.f32.mrb[0].mxu0
    %v839 = vadd.f32 0.0, %v838
    %v840 = vpop.f32.mrb[0].mxu0
    %v841 = vpop.f32.mrb[0].mxu0
    %v842 = vadd.f32 0.0, %v841
    %v843 = vpop.f32.mrb[0].mxu0
    %844 = vmatprep.mubr.bf16.mxu0 0
    %845 = vmatmul.mubr.bf16.gmra.mrb[0].mxu0 %v758
    %v846 = vpop.f32.mrb[0].mxu0
    %v847 = vadd.f32 0.0, %v846
    %v848 = vpop.f32.mrb[0].mxu0
    %v849 = vpop.f32.mrb[0].mxu0
    %v850 = vadd.f32 0.0, %v849
    %v851 = vpop.f32.mrb[0].mxu0
    %852 = vmatprep.mubr.bf16.mxu0 0
    %853 = vmatmul.mubr.bf16.gmra.mrb[0].mxu0 %v761
    %v854 = vpop.f32.mrb[0].mxu0
    %v855 = vadd.f32 0.0, %v854
    %v856 = vpop.f32.mrb[0].mxu0
    %v857 = vpop.f32.mrb[0].mxu0
    %v858 = vadd.f32 0.0, %v857
    %v859 = vpop.f32.mrb[0].mxu0
    %860 = vmatprep.mubr.bf16.mxu0 0
    %861 = vmatmul.mubr.bf16.gmra.mrb[0].mxu0 %v764
    %v862 = vpop.f32.mrb[0].mxu0
    %v863 = vadd.f32 0.0, %v862
    %v864 = vpop.f32.mrb[0].mxu0
    %v865 = vpop.f32.mrb[0].mxu0
    %v866 = vadd.f32 0.0, %v865
    %v867 = vpop.f32.mrb[0].mxu0
    %868 = vmatprep.mubr.bf16.mxu0 0
    %869 = vmatmul.mubr.bf16.gmra.mrb[0].mxu0 %v767
    %v870 = vpop.f32.mrb[0].mxu0
    %v871 = vadd.f32 0.0, %v870
    %v872 = vpop.f32.mrb[0].mxu0
    %v873 = vpop.f32.mrb[0].mxu0
    %v874 = vadd.f32 0.0, %v873
    %v875 = vpop.f32.mrb[0].mxu0
    %876 = vmatprep.mubr.bf16.mxu0 0
    %877 = vmatmul.mubr.bf16.gmra.mrb[0].mxu0 %v770
    %v878 = vpop.f32.mrb[0].mxu0
    %v879 = vadd.f32 0.0, %v878
    %v880 = vpop.f32.mrb[0].mxu0
    %v881 = vpop.f32.mrb[0].mxu0
    %v882 = vadd.f32 0.0, %v881
    %v883 = vpop.f32.mrb[0].mxu0
    %884 = vmatprep.mubr.bf16.mxu0 0
    %885 = vmatmul.mubr.bf16.gmra.mrb[0].mxu0 %v773
    %v886 = vpop.f32.mrb[0].mxu0
    %v887 = vadd.f32 0.0, %v886
    %v888 = vpop.f32.mrb[0].mxu0
    %v889 = vpop.f32.mrb[0].mxu0
    %v890 = vadd.f32 0.0, %v889
    %v891 = vpop.f32.mrb[0].mxu0
    %892 = vmatprep.mubr.bf16.mxu0 0
    %893 = vmatmul.mubr.bf16.gmra.mrb[0].mxu0 %v776
    %v894 = vpop.f32.mrb[0].mxu0
    %v895 = vadd.f32 0.0, %v894
    %v896 = vpop.f32.mrb[0].mxu0
    %v897 = vpop.f32.mrb[0].mxu0
    %v898 = vadd.f32 0.0, %v897
    %v899 = vpop.f32.mrb[0].mxu0
    %900 = vmatprep.mubr.bf16.mxu0 0
    %901 = vmatmul.mubr.bf16.gmra.mrb[0].mxu0 %v779
    %v902 = vpop.f32.mrb[0].mxu0
    %v903 = vadd.f32 0.0, %v902
    %v904 = vpop.f32.mrb[0].mxu0
    %v905 = vpop.f32.mrb[0].mxu0
    %v906 = vadd.f32 0.0, %v905
    %v907 = vpop.f32.mrb[0].mxu0
    %908 = vmatprep.mubr.bf16.mxu0 0
    %909 = vmatmul.mubr.bf16.gmra.mrb[0].mxu0 %v782
    %v910 = vpop.f32.mrb[0].mxu0
    %v911 = vadd.f32 0.0, %v910
    %v912 = vpop.f32.mrb[0].mxu0
    %v913 = vpop.f32.mrb[0].mxu0
    %v914 = vadd.f32 0.0, %v913
    %v915 = vpop.f32.mrb[0].mxu0
    %916 = vmatprep.mubr.bf16.mxu0 0
    %917 = vmatmul.mubr.bf16.gmra.mrb[0].mxu0 %v785
    %v918 = vpop.f32.mrb[0].mxu0
    %v919 = vadd.f32 0.0, %v918
    %v920 = vpop.f32.mrb[0].mxu0
    %v921 = vpop.f32.mrb[0].mxu0
    %v922 = vadd.f32 0.0, %v921
    %v923 = vpop.f32.mrb[0].mxu0
    %924 = vmatprep.mubr.bf16.mxu0 0
    %925 = vmatmul.mubr.bf16.gmra.mrb[0].mxu0 %v788
    %v926 = vpop.f32.mrb[0].mxu0
    %v927 = vadd.f32 0.0, %v926
    %v928 = vpop.f32.mrb[0].mxu0
    %v929 = vpop.f32.mrb[0].mxu0
    %v930 = vadd.f32 0.0, %v929
    %v931 = vpop.f32.mrb[0].mxu0
    %932 = vmatprep.mubr.bf16.mxu0 0
    %933 = vmatmul.mubr.bf16.gmra.mrb[0].mxu0 %v791
    %v934 = vpop.f32.mrb[0].mxu0
    %v935 = vadd.f32 0.0, %v934
    %v936 = vpop.f32.mrb[0].mxu0
    %v937 = vpop.f32.mrb[0].mxu0
    %v938 = vadd.f32 0.0, %v937
    %v939 = vpop.f32.mrb[0].mxu0
    %940 = vmatprep.mubr.bf16.mxu0 0
    %941 = vmatmul.mubr.bf16.gmra.mrb[0].mxu0 %v794
    %v942 = vpop.f32.mrb[0].mxu0
    %v943 = vadd.f32 0.0, %v942
    %v944 = vpop.f32.mrb[0].mxu0
    %v945 = vpop.f32.mrb[0].mxu0
    %v946 = vadd.f32 0.0, %v945
    %v947 = vpop.f32.mrb[0].mxu0
    %948 = vdwg.mxu0
    %v949 = vadd.f32 %v531, %v831
    %v950 = vadd.f32 %v534, %v834
    %v951 = vadd.f32 %v539, %v839
    %v952 = vadd.f32 %v542, %v842
    %v953 = vadd.f32 %v547, %v847
    %v954 = vadd.f32 %v550, %v850
    %v955 = vadd.f32 %v555, %v855
    %v956 = vadd.f32 %v558, %v858
    %v957 = vadd.f32 %v563, %v863
    %v958 = vadd.f32 %v566, %v866
    %v959 = vadd.f32 %v571, %v871
    %v960 = vadd.f32 %v574, %v874
    %v961 = vadd.f32 %v579, %v879
    %v962 = vadd.f32 %v582, %v882
    %v963 = vadd.f32 %v587, %v887
    %v964 = vadd.f32 %v590, %v890
    %v965 = vadd.f32 %v595, %v895
    %v966 = vadd.f32 %v598, %v898
    %v967 = vadd.f32 %v603, %v903
    %v968 = vadd.f32 %v606, %v906
    %v969 = vadd.f32 %v611, %v911
    %v970 = vadd.f32 %v614, %v914
    %v971 = vadd.f32 %v619, %v919
    %v972 = vadd.f32 %v622, %v922
    %v973 = vadd.f32 %v627, %v927
    %v974 = vadd.f32 %v630, %v930
    %v975 = vadd.f32 %v635, %v935
    %v976 = vadd.f32 %v638, %v938
    %v977 = vadd.f32 %v643, %v943
    %v978 = vadd.f32 %v646, %v946
    %979 = vmatprep.subr.bf16.mxu0 0
    %980 = vmatpush1.bf16.msra.mxu0 %v196
    %981 = vmatprep.subr.bf16.mxu0 0
    %982 = vmatpush1.bf16.msra.mxu0 %v197
    %983 = vmatprep.subr.bf16.mxu0 0
    %984 = vmatpush1.bf16.msra.mxu0 %v198
    %985 = vmatprep.subr.bf16.mxu0 0
    %986 = vmatpush1.bf16.msra.mxu0 %v199
    %987 = vmatprep.subr.bf16.mxu0 0
    %988 = vmatpush1.bf16.msra.mxu0 %v200
    %989 = vmatprep.subr.bf16.mxu0 0
    %990 = vmatpush1.bf16.msra.mxu0 %v201
    %991 = vmatprep.subr.bf16.mxu0 0
    %992 = vmatpush1.bf16.msra.mxu0 %v202
    %993 = vmatprep.subr.bf16.mxu0 0
    %994 = vmatpush1.bf16.msra.mxu0 0
    %995 = vmatprep.subr.bf16.mxu0 0
    %996 = vmatpush1.bf16.msra.mxu0 0
    %997 = vmatprep.subr.bf16.mxu0 0
    %998 = vmatpush1.bf16.msra.mxu0 0
    %999 = vmatprep.subr.bf16.mxu0 0
    %1000 = vmatpush1.bf16.msra.mxu0 0
    %1001 = vmatprep.subr.bf16.mxu0 0
    %1002 = vmatpush1.bf16.msra.mxu0 0
    %1003 = vmatprep.subr.bf16.mxu0 0
    %1004 = vmatpush1.bf16.msra.mxu0 0
    %1005 = vmatprep.subr.bf16.mxu0 0
    %1006 = vmatpush1.bf16.msra.mxu0 0
    %1007 = vmatprep.subr.bf16.mxu0 0
    %1008 = vmatpush1.bf16.msra.mxu0 0
    %1009 = vmatprep.subr.bf16.mxu0 0
    %1010 = vmatpush1.bf16.msra.mxu0 0
    %1011 = vmatprep.mubr.bf16.mxu0 0
    %1012 = vmatmul.mubr.bf16.gmra.mrb[0].mxu0 %v752
    %v1013 = vpop.f32.mrb[0].mxu0
    %v1014 = vadd.f32 0.0, %v1013
    %v1015 = vpop.f32.mrb[0].mxu0
    %v1016 = vpop.f32.mrb[0].mxu0
    %v1017 = vadd.f32 0.0, %v1016
    %v1018 = vpop.f32.mrb[0].mxu0
    %1019 = vmatprep.mubr.bf16.mxu0 0
    %1020 = vmatmul.mubr.bf16.gmra.mrb[0].mxu0 %v755
    %v1021 = vpop.f32.mrb[0].mxu0
    %v1022 = vadd.f32 0.0, %v1021
    %v1023 = vpop.f32.mrb[0].mxu0
    %v1024 = vpop.f32.mrb[0].mxu0
    %v1025 = vadd.f32 0.0, %v1024
    %v1026 = vpop.f32.mrb[0].mxu0
    %1027 = vmatprep.mubr.bf16.mxu0 0
    %1028 = vmatmul.mubr.bf16.gmra.mrb[0].mxu0 %v758
    %v1029 = vpop.f32.mrb[0].mxu0
    %v1030 = vadd.f32 0.0, %v1029
    %v1031 = vpop.f32.mrb[0].mxu0
    %v1032 = vpop.f32.mrb[0].mxu0
    %v1033 = vadd.f32 0.0, %v1032
    %v1034 = vpop.f32.mrb[0].mxu0
    %1035 = vmatprep.mubr.bf16.mxu0 0
    %1036 = vmatmul.mubr.bf16.gmra.mrb[0].mxu0 %v761
    %v1037 = vpop.f32.mrb[0].mxu0
    %v1038 = vadd.f32 0.0, %v1037
    %v1039 = vpop.f32.mrb[0].mxu0
    %v1040 = vpop.f32.mrb[0].mxu0
    %v1041 = vadd.f32 0.0, %v1040
    %v1042 = vpop.f32.mrb[0].mxu0
    %1043 = vmatprep.mubr.bf16.mxu0 0
    %1044 = vmatmul.mubr.bf16.gmra.mrb[0].mxu0 %v764
    %v1045 = vpop.f32.mrb[0].mxu0
    %v1046 = vadd.f32 0.0, %v1045
    %v1047 = vpop.f32.mrb[0].mxu0
    %v1048 = vpop.f32.mrb[0].mxu0
    %v1049 = vadd.f32 0.0, %v1048
    %v1050 = vpop.f32.mrb[0].mxu0
    %1051 = vmatprep.mubr.bf16.mxu0 0
    %1052 = vmatmul.mubr.bf16.gmra.mrb[0].mxu0 %v767
    %v1053 = vpop.f32.mrb[0].mxu0
    %v1054 = vadd.f32 0.0, %v1053
    %v1055 = vpop.f32.mrb[0].mxu0
    %v1056 = vpop.f32.mrb[0].mxu0
    %v1057 = vadd.f32 0.0, %v1056
    %v1058 = vpop.f32.mrb[0].mxu0
    %1059 = vmatprep.mubr.bf16.mxu0 0
    %1060 = vmatmul.mubr.bf16.gmra.mrb[0].mxu0 %v770
    %v1061 = vpop.f32.mrb[0].mxu0
    %v1062 = vadd.f32 0.0, %v1061
    %v1063 = vpop.f32.mrb[0].mxu0
    %v1064 = vpop.f32.mrb[0].mxu0
    %v1065 = vadd.f32 0.0, %v1064
    %v1066 = vpop.f32.mrb[0].mxu0
    %1067 = vmatprep.mubr.bf16.mxu0 0
    %1068 = vmatmul.mubr.bf16.gmra.mrb[0].mxu0 %v773
    %v1069 = vpop.f32.mrb[0].mxu0
    %v1070 = vadd.f32 0.0, %v1069
    %v1071 = vpop.f32.mrb[0].mxu0
    %v1072 = vpop.f32.mrb[0].mxu0
    %v1073 = vadd.f32 0.0, %v1072
    %v1074 = vpop.f32.mrb[0].mxu0
    %1075 = vmatprep.mubr.bf16.mxu0 0
    %1076 = vmatmul.mubr.bf16.gmra.mrb[0].mxu0 %v776
    %v1077 = vpop.f32.mrb[0].mxu0
    %v1078 = vadd.f32 0.0, %v1077
    %v1079 = vpop.f32.mrb[0].mxu0
    %v1080 = vpop.f32.mrb[0].mxu0
    %v1081 = vadd.f32 0.0, %v1080
    %v1082 = vpop.f32.mrb[0].mxu0
    %1083 = vmatprep.mubr.bf16.mxu0 0
    %1084 = vmatmul.mubr.bf16.gmra.mrb[0].mxu0 %v779
    %v1085 = vpop.f32.mrb[0].mxu0
    %v1086 = vadd.f32 0.0, %v1085
    %v1087 = vpop.f32.mrb[0].mxu0
    %v1088 = vpop.f32.mrb[0].mxu0
    %v1089 = vadd.f32 0.0, %v1088
    %v1090 = vpop.f32.mrb[0].mxu0
    %1091 = vmatprep.mubr.bf16.mxu0 0
    %1092 = vmatmul.mubr.bf16.gmra.mrb[0].mxu0 %v782
    %v1093 = vpop.f32.mrb[0].mxu0
    %v1094 = vadd.f32 0.0, %v1093
    %v1095 = vpop.f32.mrb[0].mxu0
    %v1096 = vpop.f32.mrb[0].mxu0
    %v1097 = vadd.f32 0.0, %v1096
    %v1098 = vpop.f32.mrb[0].mxu0
    %1099 = vmatprep.mubr.bf16.mxu0 0
    %1100 = vmatmul.mubr.bf16.gmra.mrb[0].mxu0 %v785
    %v1101 = vpop.f32.mrb[0].mxu0
    %v1102 = vadd.f32 0.0, %v1101
    %v1103 = vpop.f32.mrb[0].mxu0
    %v1104 = vpop.f32.mrb[0].mxu0
    %v1105 = vadd.f32 0.0, %v1104
    %v1106 = vpop.f32.mrb[0].mxu0
    %1107 = vmatprep.mubr.bf16.mxu0 0
    %1108 = vmatmul.mubr.bf16.gmra.mrb[0].mxu0 %v788
    %v1109 = vpop.f32.mrb[0].mxu0
    %v1110 = vadd.f32 0.0, %v1109
    %v1111 = vpop.f32.mrb[0].mxu0
    %v1112 = vpop.f32.mrb[0].mxu0
    %v1113 = vadd.f32 0.0, %v1112
    %v1114 = vpop.f32.mrb[0].mxu0
    %1115 = vmatprep.mubr.bf16.mxu0 0
    %1116 = vmatmul.mubr.bf16.gmra.mrb[0].mxu0 %v791
    %v1117 = vpop.f32.mrb[0].mxu0
    %v1118 = vadd.f32 0.0, %v1117
    %v1119 = vpop.f32.mrb[0].mxu0
    %v1120 = vpop.f32.mrb[0].mxu0
    %v1121 = vadd.f32 0.0, %v1120
    %v1122 = vpop.f32.mrb[0].mxu0
    %1123 = vmatprep.mubr.bf16.mxu0 0
    %1124 = vmatmul.mubr.bf16.gmra.mrb[0].mxu0 %v794
    %v1125 = vpop.f32.mrb[0].mxu0
    %v1126 = vadd.f32 0.0, %v1125
    %v1127 = vpop.f32.mrb[0].mxu0
    %v1128 = vpop.f32.mrb[0].mxu0
    %v1129 = vadd.f32 0.0, %v1128
    %v1130 = vpop.f32.mrb[0].mxu0
    %1131 = vdwg.mxu0
    %1132 = vmatprep.subr.bf16.mxu0 0
    %1133 = vmatpush1.bf16.msra.mxu0 %v437
    %1134 = vmatprep.subr.bf16.mxu0 0
    %1135 = vmatpush1.bf16.msra.mxu0 %v438
    %1136 = vmatprep.subr.bf16.mxu0 0
    %1137 = vmatpush1.bf16.msra.mxu0 %v439
    %1138 = vmatprep.subr.bf16.mxu0 0
    %1139 = vmatpush1.bf16.msra.mxu0 %v440
    %1140 = vmatprep.subr.bf16.mxu0 0
    %1141 = vmatpush1.bf16.msra.mxu0 %v441
    %1142 = vmatprep.subr.bf16.mxu0 0
    %1143 = vmatpush1.bf16.msra.mxu0 %v442
    %1144 = vmatprep.subr.bf16.mxu0 0
    %1145 = vmatpush1.bf16.msra.mxu0 %v443
    %1146 = vmatprep.subr.bf16.mxu0 0
    %1147 = vmatpush1.bf16.msra.mxu0 0
    %1148 = vmatprep.subr.bf16.mxu0 0
    %1149 = vmatpush1.bf16.msra.mxu0 0
    %1150 = vmatprep.subr.bf16.mxu0 0
    %1151 = vmatpush1.bf16.msra.mxu0 0
    %1152 = vmatprep.subr.bf16.mxu0 0
    %1153 = vmatpush1.bf16.msra.mxu0 0
    %1154 = vmatprep.subr.bf16.mxu0 0
    %1155 = vmatpush1.bf16.msra.mxu0 0
    %1156 = vmatprep.subr.bf16.mxu0 0
    %1157 = vmatpush1.bf16.msra.mxu0 0
    %1158 = vmatprep.subr.bf16.mxu0 0
    %1159 = vmatpush1.bf16.msra.mxu0 0
    %1160 = vmatprep.subr.bf16.mxu0 0
    %1161 = vmatpush1.bf16.msra.mxu0 0
    %1162 = vmatprep.subr.bf16.mxu0 0
    %1163 = vmatpush1.bf16.msra.mxu0 0
    %1164 = vmatprep.mubr.bf16.mxu0 0
    %1165 = vmatmul.mubr.bf16.gmra.mrb[0].mxu0 %v212
    %v1166 = vpop.f32.mrb[0].mxu0
    %v1167 = vadd.f32 %v1014, %v1166
    %v1168 = vpop.f32.mrb[0].mxu0
    %v1169 = vpop.f32.mrb[0].mxu0
    %v1170 = vadd.f32 %v1017, %v1169
    %v1171 = vpop.f32.mrb[0].mxu0
    %1172 = vmatprep.mubr.bf16.mxu0 0
    %1173 = vmatmul.mubr.bf16.gmra.mrb[0].mxu0 %v215
    %v1174 = vpop.f32.mrb[0].mxu0
    %v1175 = vadd.f32 %v1022, %v1174
    %v1176 = vpop.f32.mrb[0].mxu0
    %v1177 = vpop.f32.mrb[0].mxu0
    %v1178 = vadd.f32 %v1025, %v1177
    %v1179 = vpop.f32.mrb[0].mxu0
    %1180 = vmatprep.mubr.bf16.mxu0 0
    %1181 = vmatmul.mubr.bf16.gmra.mrb[0].mxu0 %v218
    %v1182 = vpop.f32.mrb[0].mxu0
    %v1183 = vadd.f32 %v1030, %v1182
    %v1184 = vpop.f32.mrb[0].mxu0
    %v1185 = vpop.f32.mrb[0].mxu0
    %v1186 = vadd.f32 %v1033, %v1185
    %v1187 = vpop.f32.mrb[0].mxu0
    %1188 = vmatprep.mubr.bf16.mxu0 0
    %1189 = vmatmul.mubr.bf16.gmra.mrb[0].mxu0 %v221
    %v1190 = vpop.f32.mrb[0].mxu0
    %v1191 = vadd.f32 %v1038, %v1190
    %v1192 = vpop.f32.mrb[0].mxu0
    %v1193 = vpop.f32.mrb[0].mxu0
    %v1194 = vadd.f32 %v1041, %v1193
    %v1195 = vpop.f32.mrb[0].mxu0
    %1196 = vmatprep.mubr.bf16.mxu0 0
    %1197 = vmatmul.mubr.bf16.gmra.mrb[0].mxu0 %v224
    %v1198 = vpop.f32.mrb[0].mxu0
    %v1199 = vadd.f32 %v1046, %v1198
    %v1200 = vpop.f32.mrb[0].mxu0
    %v1201 = vpop.f32.mrb[0].mxu0
    %v1202 = vadd.f32 %v1049, %v1201
    %v1203 = vpop.f32.mrb[0].mxu0
    %1204 = vmatprep.mubr.bf16.mxu0 0
    %1205 = vmatmul.mubr.bf16.gmra.mrb[0].mxu0 %v227
    %v1206 = vpop.f32.mrb[0].mxu0
    %v1207 = vadd.f32 %v1054, %v1206
    %v1208 = vpop.f32.mrb[0].mxu0
    %v1209 = vpop.f32.mrb[0].mxu0
    %v1210 = vadd.f32 %v1057, %v1209
    %v1211 = vpop.f32.mrb[0].mxu0
    %1212 = vmatprep.mubr.bf16.mxu0 0
    %1213 = vmatmul.mubr.bf16.gmra.mrb[0].mxu0 %v230
    %v1214 = vpop.f32.mrb[0].mxu0
    %v1215 = vadd.f32 %v1062, %v1214
    %v1216 = vpop.f32.mrb[0].mxu0
    %v1217 = vpop.f32.mrb[0].mxu0
    %v1218 = vadd.f32 %v1065, %v1217
    %v1219 = vpop.f32.mrb[0].mxu0
    %1220 = vmatprep.mubr.bf16.mxu0 0
    %1221 = vmatmul.mubr.bf16.gmra.mrb[0].mxu0 %v233
    %v1222 = vpop.f32.mrb[0].mxu0
    %v1223 = vadd.f32 %v1070, %v1222
    %v1224 = vpop.f32.mrb[0].mxu0
    %v1225 = vpop.f32.mrb[0].mxu0
    %v1226 = vadd.f32 %v1073, %v1225
    %v1227 = vpop.f32.mrb[0].mxu0
    %1228 = vmatprep.mubr.bf16.mxu0 0
    %1229 = vmatmul.mubr.bf16.gmra.mrb[0].mxu0 %v236
    %v1230 = vpop.f32.mrb[0].mxu0
    %v1231 = vadd.f32 %v1078, %v1230
    %v1232 = vpop.f32.mrb[0].mxu0
    %v1233 = vpop.f32.mrb[0].mxu0
    %v1234 = vadd.f32 %v1081, %v1233
    %v1235 = vpop.f32.mrb[0].mxu0
    %1236 = vmatprep.mubr.bf16.mxu0 0
    %1237 = vmatmul.mubr.bf16.gmra.mrb[0].mxu0 %v239
    %v1238 = vpop.f32.mrb[0].mxu0
    %v1239 = vadd.f32 %v1086, %v1238
    %v1240 = vpop.f32.mrb[0].mxu0
    %v1241 = vpop.f32.mrb[0].mxu0
    %v1242 = vadd.f32 %v1089, %v1241
    %v1243 = vpop.f32.mrb[0].mxu0
    %1244 = vmatprep.mubr.bf16.mxu0 0
    %1245 = vmatmul.mubr.bf16.gmra.mrb[0].mxu0 %v242
    %v1246 = vpop.f32.mrb[0].mxu0
    %v1247 = vadd.f32 %v1094, %v1246
    %v1248 = vpop.f32.mrb[0].mxu0
    %v1249 = vpop.f32.mrb[0].mxu0
    %v1250 = vadd.f32 %v1097, %v1249
    %v1251 = vpop.f32.mrb[0].mxu0
    %1252 = vmatprep.mubr.bf16.mxu0 0
    %1253 = vmatmul.mubr.bf16.gmra.mrb[0].mxu0 %v245
    %v1254 = vpop.f32.mrb[0].mxu0
    %v1255 = vadd.f32 %v1102, %v1254
    %v1256 = vpop.f32.mrb[0].mxu0
    %v1257 = vpop.f32.mrb[0].mxu0
    %v1258 = vadd.f32 %v1105, %v1257
    %v1259 = vpop.f32.mrb[0].mxu0
    %1260 = vmatprep.mubr.bf16.mxu0 0
    %1261 = vmatmul.mubr.bf16.gmra.mrb[0].mxu0 %v248
    %v1262 = vpop.f32.mrb[0].mxu0
    %v1263 = vadd.f32 %v1110, %v1262
    %v1264 = vpop.f32.mrb[0].mxu0
    %v1265 = vpop.f32.mrb[0].mxu0
    %v1266 = vadd.f32 %v1113, %v1265
    %v1267 = vpop.f32.mrb[0].mxu0
    %1268 = vmatprep.mubr.bf16.mxu0 0
    %1269 = vmatmul.mubr.bf16.gmra.mrb[0].mxu0 %v251
    %v1270 = vpop.f32.mrb[0].mxu0
    %v1271 = vadd.f32 %v1118, %v1270
    %v1272 = vpop.f32.mrb[0].mxu0
    %v1273 = vpop.f32.mrb[0].mxu0
    %v1274 = vadd.f32 %v1121, %v1273
    %v1275 = vpop.f32.mrb[0].mxu0
    %1276 = vmatprep.mubr.bf16.mxu0 0
    %1277 = vmatmul.mubr.bf16.gmra.mrb[0].mxu0 %v254
    %v1278 = vpop.f32.mrb[0].mxu0
    %v1279 = vadd.f32 %v1126, %v1278
    %v1280 = vpop.f32.mrb[0].mxu0
    %v1281 = vpop.f32.mrb[0].mxu0
    %v1282 = vadd.f32 %v1129, %v1281
    %v1283 = vpop.f32.mrb[0].mxu0
    %1284 = vdwg.mxu0
    %v1285 = vld [vmem:[%s0 + $0x3] sm:$0xff]
    %v1286 = vld [vmem:[%s0 + $0xb] sm:$0xff]
    %v1287 = vld [vmem:[%s0 + $0x13] sm:$0xff]
    %v1288 = vld [vmem:[%s0 + $0x1b] sm:$0xff]
    %v1289 = vld [vmem:[%s0 + $0x23] sm:$0xff]
    %v1290 = vld [vmem:[%s0 + $0x2b] sm:$0xff]
    %v1291 = vld [vmem:[%s0 + $0x33] sm:$0xff]
    %v1292 = vld [vmem:[%s0 + $0x3b] sm:$0xff]
    %v1293 = vld [vmem:[%s0 + $0x43] sm:$0xff]
    %v1294 = vld [vmem:[%s0 + $0x4b] sm:$0xff]
    %v1295 = vld [vmem:[%s0 + $0x53] sm:$0xff]
    %v1296 = vld [vmem:[%s0 + $0x5b] sm:$0xff]
    %v1297 = vld [vmem:[%s0 + $0x63] sm:$0xff]
    %v1298 = vld [vmem:[%s0 + $0x6b] sm:$0xff]
    %v1299 = vld [vmem:[%s0 + $0x73] sm:$0xff]
    %v1300 = vld [vmem:[%s0 + $0x7b] sm:$0xff]
    %v1301 = vld [vmem:[%s0 + $0x83] sm:$0xff]
    %v1302 = vld [vmem:[%s0 + $0x8b] sm:$0xff]
    %v1303 = vld [vmem:[%s0 + $0x93] sm:$0xff]
    %v1304 = vld [vmem:[%s0 + $0x9b] sm:$0xff]
    %v1305 = vld [vmem:[%s0 + $0xa3] sm:$0xff]
    %v1306 = vld [vmem:[%s0 + $0xab] sm:$0xff]
    %v1307 = vld [vmem:[%s0 + $0xb3] sm:$0xff]
    %v1308 = vld [vmem:[%s0 + $0xbb] sm:$0xff]
    %v1309 = vld [vmem:[%s0 + $0xc3] sm:$0xff]
    %v1310 = vld [vmem:[%s0 + $0xcb] sm:$0xff]
    %v1311 = vld [vmem:[%s0 + $0xd3] sm:$0xff]
    %v1312 = vld [vmem:[%s0 + $0xdb] sm:$0xff]
    %v1313 = vld [vmem:[%s0 + $0xe3] sm:$0xff]
    %v1314 = vld [vmem:[%s0 + $0xeb] sm:$0xff]
    %v1315 = vpack.c.bf16 %v1286, %v1285
    %v1316 = vpack.c.bf16 %v1288, %v1287
    %v1317 = vpack.c.bf16 %v1290, %v1289
    %v1318 = vpack.c.bf16 %v1292, %v1291
    %v1319 = vpack.c.bf16 %v1294, %v1293
    %v1320 = vpack.c.bf16 %v1296, %v1295
    %v1321 = vpack.c.bf16 %v1298, %v1297
    %v1322 = vpack.c.bf16 %v1300, %v1299
    %v1323 = vpack.c.bf16 %v1302, %v1301
    %v1324 = vpack.c.bf16 %v1304, %v1303
    %v1325 = vpack.c.bf16 %v1306, %v1305
    %v1326 = vpack.c.bf16 %v1308, %v1307
    %v1327 = vpack.c.bf16 %v1310, %v1309
    %v1328 = vpack.c.bf16 %v1312, %v1311
    %v1329 = vpack.c.bf16 %v1314, %v1313
    %v1331 = vsel %vm210, %v1315, 0
    %v1334 = vsel %vm210, %v1316, 0
    %v1337 = vsel %vm210, %v1317, 0
    %v1340 = vsel %vm210, %v1318, 0
    %v1343 = vsel %vm210, %v1319, 0
    %v1346 = vsel %vm210, %v1320, 0
    %v1349 = vsel %vm210, %v1321, 0
    %v1352 = vsel %vm210, %v1322, 0
    %v1355 = vsel %vm210, %v1323, 0
    %v1358 = vsel %vm210, %v1324, 0
    %v1361 = vsel %vm210, %v1325, 0
    %v1364 = vsel %vm210, %v1326, 0
    %v1367 = vsel %vm210, %v1327, 0
    %v1370 = vsel %vm210, %v1328, 0
    %v1373 = vsel %vm210, %v1329, 0
    %1375 = vmatprep.subr.bf16.mxu0 0
    %1376 = vmatpush1.bf16.msra.mxu0 %v737
    %1377 = vmatprep.subr.bf16.mxu0 0
    %1378 = vmatpush1.bf16.msra.mxu0 %v738
    %1379 = vmatprep.subr.bf16.mxu0 0
    %1380 = vmatpush1.bf16.msra.mxu0 %v739
    %1381 = vmatprep.subr.bf16.mxu0 0
    %1382 = vmatpush1.bf16.msra.mxu0 %v740
    %1383 = vmatprep.subr.bf16.mxu0 0
    %1384 = vmatpush1.bf16.msra.mxu0 %v741
    %1385 = vmatprep.subr.bf16.mxu0 0
    %1386 = vmatpush1.bf16.msra.mxu0 %v742
    %1387 = vmatprep.subr.bf16.mxu0 0
    %1388 = vmatpush1.bf16.msra.mxu0 %v743
    %1389 = vmatprep.subr.bf16.mxu0 0
    %1390 = vmatpush1.bf16.msra.mxu0 0
    %1391 = vmatprep.subr.bf16.mxu0 0
    %1392 = vmatpush1.bf16.msra.mxu0 0
    %1393 = vmatprep.subr.bf16.mxu0 0
    %1394 = vmatpush1.bf16.msra.mxu0 0
    %1395 = vmatprep.subr.bf16.mxu0 0
    %1396 = vmatpush1.bf16.msra.mxu0 0
    %1397 = vmatprep.subr.bf16.mxu0 0
    %1398 = vmatpush1.bf16.msra.mxu0 0
    %1399 = vmatprep.subr.bf16.mxu0 0
    %1400 = vmatpush1.bf16.msra.mxu0 0
    %1401 = vmatprep.subr.bf16.mxu0 0
    %1402 = vmatpush1.bf16.msra.mxu0 0
    %1403 = vmatprep.subr.bf16.mxu0 0
    %1404 = vmatpush1.bf16.msra.mxu0 0
    %1405 = vmatprep.subr.bf16.mxu0 0
    %1406 = vmatpush1.bf16.msra.mxu0 0
    %1407 = vmatprep.mubr.bf16.mxu0 0
    %1408 = vmatmul.mubr.bf16.gmra.mrb[0].mxu0 %v1331
    %v1409 = vpop.f32.mrb[0].mxu0
    %v1410 = vadd.f32 0.0, %v1409
    %v1411 = vpop.f32.mrb[0].mxu0
    %v1412 = vpop.f32.mrb[0].mxu0
    %v1413 = vadd.f32 0.0, %v1412
    %v1414 = vpop.f32.mrb[0].mxu0
    %1415 = vmatprep.mubr.bf16.mxu0 0
    %1416 = vmatmul.mubr.bf16.gmra.mrb[0].mxu0 %v1334
    %v1417 = vpop.f32.mrb[0].mxu0
    %v1418 = vadd.f32 0.0, %v1417
    %v1419 = vpop.f32.mrb[0].mxu0
    %v1420 = vpop.f32.mrb[0].mxu0
    %v1421 = vadd.f32 0.0, %v1420
    %v1422 = vpop.f32.mrb[0].mxu0
    %1423 = vmatprep.mubr.bf16.mxu0 0
    %1424 = vmatmul.mubr.bf16.gmra.mrb[0].mxu0 %v1337
    %v1425 = vpop.f32.mrb[0].mxu0
    %v1426 = vadd.f32 0.0, %v1425
    %v1427 = vpop.f32.mrb[0].mxu0
    %v1428 = vpop.f32.mrb[0].mxu0
    %v1429 = vadd.f32 0.0, %v1428
    %v1430 = vpop.f32.mrb[0].mxu0
    %1431 = vmatprep.mubr.bf16.mxu0 0
    %1432 = vmatmul.mubr.bf16.gmra.mrb[0].mxu0 %v1340
    %v1433 = vpop.f32.mrb[0].mxu0
    %v1434 = vadd.f32 0.0, %v1433
    %v1435 = vpop.f32.mrb[0].mxu0
    %v1436 = vpop.f32.mrb[0].mxu0
    %v1437 = vadd.f32 0.0, %v1436
    %v1438 = vpop.f32.mrb[0].mxu0
    %1439 = vmatprep.mubr.bf16.mxu0 0
    %1440 = vmatmul.mubr.bf16.gmra.mrb[0].mxu0 %v1343
    %v1441 = vpop.f32.mrb[0].mxu0
    %v1442 = vadd.f32 0.0, %v1441
    %v1443 = vpop.f32.mrb[0].mxu0
    %v1444 = vpop.f32.mrb[0].mxu0
    %v1445 = vadd.f32 0.0, %v1444
    %v1446 = vpop.f32.mrb[0].mxu0
    %1447 = vmatprep.mubr.bf16.mxu0 0
    %1448 = vmatmul.mubr.bf16.gmra.mrb[0].mxu0 %v1346
    %v1449 = vpop.f32.mrb[0].mxu0
    %v1450 = vadd.f32 0.0, %v1449
    %v1451 = vpop.f32.mrb[0].mxu0
    %v1452 = vpop.f32.mrb[0].mxu0
    %v1453 = vadd.f32 0.0, %v1452
    %v1454 = vpop.f32.mrb[0].mxu0
    %1455 = vmatprep.mubr.bf16.mxu0 0
    %1456 = vmatmul.mubr.bf16.gmra.mrb[0].mxu0 %v1349
    %v1457 = vpop.f32.mrb[0].mxu0
    %v1458 = vadd.f32 0.0, %v1457
    %v1459 = vpop.f32.mrb[0].mxu0
    %v1460 = vpop.f32.mrb[0].mxu0
    %v1461 = vadd.f32 0.0, %v1460
    %v1462 = vpop.f32.mrb[0].mxu0
    %1463 = vmatprep.mubr.bf16.mxu0 0
    %1464 = vmatmul.mubr.bf16.gmra.mrb[0].mxu0 %v1352
    %v1465 = vpop.f32.mrb[0].mxu0
    %v1466 = vadd.f32 0.0, %v1465
    %v1467 = vpop.f32.mrb[0].mxu0
    %v1468 = vpop.f32.mrb[0].mxu0
    %v1469 = vadd.f32 0.0, %v1468
    %v1470 = vpop.f32.mrb[0].mxu0
    %1471 = vmatprep.mubr.bf16.mxu0 0
    %1472 = vmatmul.mubr.bf16.gmra.mrb[0].mxu0 %v1355
    %v1473 = vpop.f32.mrb[0].mxu0
    %v1474 = vadd.f32 0.0, %v1473
    %v1475 = vpop.f32.mrb[0].mxu0
    %v1476 = vpop.f32.mrb[0].mxu0
    %v1477 = vadd.f32 0.0, %v1476
    %v1478 = vpop.f32.mrb[0].mxu0
    %1479 = vmatprep.mubr.bf16.mxu0 0
    %1480 = vmatmul.mubr.bf16.gmra.mrb[0].mxu0 %v1358
    %v1481 = vpop.f32.mrb[0].mxu0
    %v1482 = vadd.f32 0.0, %v1481
    %v1483 = vpop.f32.mrb[0].mxu0
    %v1484 = vpop.f32.mrb[0].mxu0
    %v1485 = vadd.f32 0.0, %v1484
    %v1486 = vpop.f32.mrb[0].mxu0
    %1487 = vmatprep.mubr.bf16.mxu0 0
    %1488 = vmatmul.mubr.bf16.gmra.mrb[0].mxu0 %v1361
    %v1489 = vpop.f32.mrb[0].mxu0
    %v1490 = vadd.f32 0.0, %v1489
    %v1491 = vpop.f32.mrb[0].mxu0
    %v1492 = vpop.f32.mrb[0].mxu0
    %v1493 = vadd.f32 0.0, %v1492
    %v1494 = vpop.f32.mrb[0].mxu0
    %1495 = vmatprep.mubr.bf16.mxu0 0
    %1496 = vmatmul.mubr.bf16.gmra.mrb[0].mxu0 %v1364
    %v1497 = vpop.f32.mrb[0].mxu0
    %v1498 = vadd.f32 0.0, %v1497
    %v1499 = vpop.f32.mrb[0].mxu0
    %v1500 = vpop.f32.mrb[0].mxu0
    %v1501 = vadd.f32 0.0, %v1500
    %v1502 = vpop.f32.mrb[0].mxu0
    %1503 = vmatprep.mubr.bf16.mxu0 0
    %1504 = vmatmul.mubr.bf16.gmra.mrb[0].mxu0 %v1367
    %v1505 = vpop.f32.mrb[0].mxu0
    %v1506 = vadd.f32 0.0, %v1505
    %v1507 = vpop.f32.mrb[0].mxu0
    %v1508 = vpop.f32.mrb[0].mxu0
    %v1509 = vadd.f32 0.0, %v1508
    %v1510 = vpop.f32.mrb[0].mxu0
    %1511 = vmatprep.mubr.bf16.mxu0 0
    %1512 = vmatmul.mubr.bf16.gmra.mrb[0].mxu0 %v1370
    %v1513 = vpop.f32.mrb[0].mxu0
    %v1514 = vadd.f32 0.0, %v1513
    %v1515 = vpop.f32.mrb[0].mxu0
    %v1516 = vpop.f32.mrb[0].mxu0
    %v1517 = vadd.f32 0.0, %v1516
    %v1518 = vpop.f32.mrb[0].mxu0
    %1519 = vmatprep.mubr.bf16.mxu0 0
    %1520 = vmatmul.mubr.bf16.gmra.mrb[0].mxu0 %v1373
    %v1521 = vpop.f32.mrb[0].mxu0
    %v1522 = vadd.f32 0.0, %v1521
    %v1523 = vpop.f32.mrb[0].mxu0
    %v1524 = vpop.f32.mrb[0].mxu0
    %v1525 = vadd.f32 0.0, %v1524
    %v1526 = vpop.f32.mrb[0].mxu0
    %1527 = vdwg.mxu0
    %v1528 = vadd.f32 %v1167, %v1410
    %v1529 = vadd.f32 %v1170, %v1413
    %v1530 = vadd.f32 %v1175, %v1418
    %v1531 = vadd.f32 %v1178, %v1421
    %v1532 = vadd.f32 %v1183, %v1426
    %v1533 = vadd.f32 %v1186, %v1429
    %v1534 = vadd.f32 %v1191, %v1434
    %v1535 = vadd.f32 %v1194, %v1437
    %v1536 = vadd.f32 %v1199, %v1442
    %v1537 = vadd.f32 %v1202, %v1445
    %v1538 = vadd.f32 %v1207, %v1450
    %v1539 = vadd.f32 %v1210, %v1453
    %v1540 = vadd.f32 %v1215, %v1458
    %v1541 = vadd.f32 %v1218, %v1461
    %v1542 = vadd.f32 %v1223, %v1466
    %v1543 = vadd.f32 %v1226, %v1469
    %v1544 = vadd.f32 %v1231, %v1474
    %v1545 = vadd.f32 %v1234, %v1477
    %v1546 = vadd.f32 %v1239, %v1482
    %v1547 = vadd.f32 %v1242, %v1485
    %v1548 = vadd.f32 %v1247, %v1490
    %v1549 = vadd.f32 %v1250, %v1493
    %v1550 = vadd.f32 %v1255, %v1498
    %v1551 = vadd.f32 %v1258, %v1501
    %v1552 = vadd.f32 %v1263, %v1506
    %v1553 = vadd.f32 %v1266, %v1509
    %v1554 = vadd.f32 %v1271, %v1514
    %v1555 = vadd.f32 %v1274, %v1517
    %v1556 = vadd.f32 %v1279, %v1522
    %v1557 = vadd.f32 %v1282, %v1525
    %v1558 = vmax.f32 %v949, %v1528
    %v1559 = vmax.f32 %v950, %v1529
    %v1560 = vmax.f32 %v951, %v1530
    %v1561 = vmax.f32 %v952, %v1531
    %v1562 = vmax.f32 %v953, %v1532
    %v1563 = vmax.f32 %v954, %v1533
    %v1564 = vmax.f32 %v955, %v1534
    %v1565 = vmax.f32 %v956, %v1535
    %v1566 = vmax.f32 %v957, %v1536
    %v1567 = vmax.f32 %v958, %v1537
    %v1568 = vmax.f32 %v959, %v1538
    %v1569 = vmax.f32 %v960, %v1539
    %v1570 = vmax.f32 %v961, %v1540
    %v1571 = vmax.f32 %v962, %v1541
    %v1572 = vmax.f32 %v963, %v1542
    %v1573 = vmax.f32 %v964, %v1543
    %v1574 = vmax.f32 %v965, %v1544
    %v1575 = vmax.f32 %v966, %v1545
    %v1576 = vmax.f32 %v967, %v1546
    %v1577 = vmax.f32 %v968, %v1547
    %v1578 = vmax.f32 %v969, %v1548
    %v1579 = vmax.f32 %v970, %v1549
    %v1580 = vmax.f32 %v971, %v1550
    %v1581 = vmax.f32 %v972, %v1551
    %v1582 = vmax.f32 %v973, %v1552
    %v1583 = vmax.f32 %v974, %v1553
    %v1584 = vmax.f32 %v975, %v1554
    %v1585 = vmax.f32 %v976, %v1555
    %v1586 = vmax.f32 %v977, %v1556
    %v1587 = vmax.f32 %v978, %v1557
    %v1588 = vld [vmem:[%s3] sm:$0x1]
    %v1590 = vlaneseq
    %v1591 = vshrl.u32 %v1590, 7
    %v1592 = vsub.s32 0, %v1591
    %v1593 = vrot.slane %v1588, %v1592
    %v1595 = vadd.f32 %v1558, %v1593
    %v1596 = vadd.f32 %v1559, %v1593
    %v1597 = vadd.f32 %v1560, %v1593
    %v1598 = vadd.f32 %v1561, %v1593
    %v1599 = vadd.f32 %v1562, %v1593
    %v1600 = vadd.f32 %v1563, %v1593
    %v1601 = vadd.f32 %v1564, %v1593
    %v1602 = vadd.f32 %v1565, %v1593
    %v1603 = vadd.f32 %v1566, %v1593
    %v1604 = vadd.f32 %v1567, %v1593
    %v1605 = vadd.f32 %v1568, %v1593
    %v1606 = vadd.f32 %v1569, %v1593
    %v1607 = vadd.f32 %v1570, %v1593
    %v1608 = vadd.f32 %v1571, %v1593
    %v1609 = vadd.f32 %v1572, %v1593
    %v1610 = vadd.f32 %v1573, %v1593
    %v1611 = vadd.f32 %v1574, %v1593
    %v1612 = vadd.f32 %v1575, %v1593
    %v1613 = vadd.f32 %v1576, %v1593
    %v1614 = vadd.f32 %v1577, %v1593
    %v1615 = vadd.f32 %v1578, %v1593
    %v1616 = vadd.f32 %v1579, %v1593
    %v1617 = vadd.f32 %v1580, %v1593
    %v1618 = vadd.f32 %v1581, %v1593
    %v1619 = vadd.f32 %v1582, %v1593
    %v1620 = vadd.f32 %v1583, %v1593
    %v1621 = vadd.f32 %v1584, %v1593
    %v1622 = vadd.f32 %v1585, %v1593
    %v1623 = vadd.f32 %v1586, %v1593
    %v1624 = vadd.f32 %v1587, %v1593
    %v1625 = vmax.f32 %v1595, 0.0
    %v1626 = vmax.f32 %v1596, 0.0
    %v1627 = vmax.f32 %v1597, 0.0
    %v1628 = vmax.f32 %v1598, 0.0
    %v1629 = vmax.f32 %v1599, 0.0
    %v1630 = vmax.f32 %v1600, 0.0
    %v1631 = vmax.f32 %v1601, 0.0
    %v1632 = vmax.f32 %v1602, 0.0
    %v1633 = vmax.f32 %v1603, 0.0
    %v1634 = vmax.f32 %v1604, 0.0
    %v1635 = vmax.f32 %v1605, 0.0
    %v1636 = vmax.f32 %v1606, 0.0
    %v1637 = vmax.f32 %v1607, 0.0
    %v1638 = vmax.f32 %v1608, 0.0
    %v1639 = vmax.f32 %v1609, 0.0
    %v1640 = vmax.f32 %v1610, 0.0
    %v1641 = vmax.f32 %v1611, 0.0
    %v1642 = vmax.f32 %v1612, 0.0
    %v1643 = vmax.f32 %v1613, 0.0
    %v1644 = vmax.f32 %v1614, 0.0
    %v1645 = vmax.f32 %v1615, 0.0
    %v1646 = vmax.f32 %v1616, 0.0
    %v1647 = vmax.f32 %v1617, 0.0
    %v1648 = vmax.f32 %v1618, 0.0
    %v1649 = vmax.f32 %v1619, 0.0
    %v1650 = vmax.f32 %v1620, 0.0
    %v1651 = vmax.f32 %v1621, 0.0
    %v1652 = vmax.f32 %v1622, 0.0
    %v1653 = vmax.f32 %v1623, 0.0
    %v1654 = vmax.f32 %v1624, 0.0
    %v1655 = vld [vmem:[%s4] sm:$0xff]
    %v1656 = vld [vmem:[%s4 + $0x8] sm:$0xff]
    %v1657 = vld [vmem:[%s4 + $0x10] sm:$0xff]
    %v1658 = vld [vmem:[%s4 + $0x18] sm:$0xff]
    %v1659 = vld [vmem:[%s4 + $0x20] sm:$0xff]
    %v1660 = vld [vmem:[%s4 + $0x28] sm:$0xff]
    %v1662 = vsel %vm45, %v1625, 0
    %v1665 = vsel %vm45, %v1626, 0
    %v1668 = vsel %vm45, %v1627, 0
    %v1671 = vsel %vm45, %v1628, 0
    %v1674 = vsel %vm45, %v1629, 0
    %v1677 = vsel %vm45, %v1630, 0
    %v1680 = vsel %vm45, %v1631, 0
    %v1683 = vsel %vm45, %v1632, 0
    %v1686 = vsel %vm45, %v1633, 0
    %v1689 = vsel %vm45, %v1634, 0
    %v1692 = vsel %vm45, %v1635, 0
    %v1695 = vsel %vm45, %v1636, 0
    %v1698 = vsel %vm45, %v1637, 0
    %v1701 = vsel %vm45, %v1638, 0
    %v1704 = vsel %vm45, %v1639, 0
    %v1707 = vsel %vm45, %v1640, 0
    %v1710 = vsel %vm45, %v1641, 0
    %v1713 = vsel %vm45, %v1642, 0
    %v1716 = vsel %vm45, %v1643, 0
    %v1719 = vsel %vm45, %v1644, 0
    %v1722 = vsel %vm45, %v1645, 0
    %v1725 = vsel %vm45, %v1646, 0
    %v1728 = vsel %vm45, %v1647, 0
    %v1731 = vsel %vm45, %v1648, 0
    %v1734 = vsel %vm45, %v1649, 0
    %v1737 = vsel %vm45, %v1650, 0
    %v1740 = vsel %vm45, %v1651, 0
    %v1743 = vsel %vm45, %v1652, 0
    %v1746 = vsel %vm45, %v1653, 0
    %v1749 = vsel %vm45, %v1654, 0
    %1751 = vmatprep.subr.mxu0 0.0
    %1752 = vmatpush1.msra.mxu0 %v1655
    %1753 = vmatprep.subr.mxu0 0.0
    %1754 = vmatpush1.msra.mxu0 %v1656
    %1755 = vmatprep.subr.mxu0 0.0
    %1756 = vmatpush1.msra.mxu0 %v1657
    %1757 = vmatprep.subr.mxu0 0.0
    %1758 = vmatpush1.msra.mxu0 %v1658
    %1759 = vmatprep.subr.mxu0 0.0
    %1760 = vmatpush1.msra.mxu0 %v1659
    %1761 = vmatprep.subr.mxu0 0.0
    %1762 = vmatpush1.msra.mxu0 %v1660
    %1763 = vmatprep.subr.mxu0 0.0
    %1764 = vmatpush1.msra.mxu0 0.0
    %1765 = vmatprep.subr.mxu0 0.0
    %1766 = vmatpush1.msra.mxu0 0.0
    %1767 = vmatprep.subr.mxu0 0.0
    %1768 = vmatpush1.msra.mxu0 0.0
    %1769 = vmatprep.subr.mxu0 0.0
    %1770 = vmatpush1.msra.mxu0 0.0
    %1771 = vmatprep.subr.mxu0 0.0
    %1772 = vmatpush1.msra.mxu0 0.0
    %1773 = vmatprep.subr.mxu0 0.0
    %1774 = vmatpush1.msra.mxu0 0.0
    %1775 = vmatprep.subr.mxu0 0.0
    %1776 = vmatpush1.msra.mxu0 0.0
    %1777 = vmatprep.subr.mxu0 0.0
    %1778 = vmatpush1.msra.mxu0 0.0
    %1779 = vmatprep.subr.mxu0 0.0
    %1780 = vmatpush1.msra.mxu0 0.0
    %1781 = vmatprep.subr.mxu0 0.0
    %1782 = vmatpush1.msra.mxu0 0.0
    %1783 = vmatprep.subr.mxu0 0.0
    %1784 = vmatpush1.msra.mxu0 0.0
    %1785 = vmatprep.subr.mxu0 0.0
    %1786 = vmatpush1.msra.mxu0 0.0
    %1787 = vmatprep.subr.mxu0 0.0
    %1788 = vmatpush1.msra.mxu0 0.0
    %1789 = vmatprep.subr.mxu0 0.0
    %1790 = vmatpush1.msra.mxu0 0.0
    %1791 = vmatprep.subr.mxu0 0.0
    %1792 = vmatpush1.msra.mxu0 0.0
    %1793 = vmatprep.subr.mxu0 0.0
    %1794 = vmatpush1.msra.mxu0 0.0
    %1795 = vmatprep.subr.mxu0 0.0
    %1796 = vmatpush1.msra.mxu0 0.0
    %1797 = vmatprep.subr.mxu0 0.0
    %1798 = vmatpush1.msra.mxu0 0.0
    %1799 = vmatprep.subr.mxu0 0.0
    %1800 = vmatpush1.msra.mxu0 0.0
    %1801 = vmatprep.subr.mxu0 0.0
    %1802 = vmatpush1.msra.mxu0 0.0
    %1803 = vmatprep.subr.mxu0 0.0
    %1804 = vmatpush1.msra.mxu0 0.0
    %1805 = vmatprep.subr.mxu0 0.0
    %1806 = vmatpush1.msra.mxu0 0.0
    %1807 = vmatprep.subr.mxu0 0.0
    %1808 = vmatpush1.msra.mxu0 0.0
    %1809 = vmatprep.subr.mxu0 0.0
    %1810 = vmatpush1.msra.mxu0 0.0
    %1811 = vmatprep.subr.mxu0 0.0
    %1812 = vmatpush1.msra.mxu0 0.0
    %1813 = vmatprep.subr.mxu0 0.0
    %1814 = vmatpush1.msra.mxu0 0.0
    %1815 = vmatprep.mubr.f32.mxu0 0.0
    %1816 = vmatmul.mubr.f32.gmra.mrb[0].mxu0 %v1662
    %v1817 = vpop.f32.mrb[0].mxu0
    %v1818 = vadd.f32 0.0, %v1817
    %v1819 = vpop.f32.mrb[0].mxu0
    %1820 = vmatprep.mubr.f32.mxu0 0.0
    %1821 = vmatmul.mubr.f32.gmra.mrb[0].mxu0 %v1665
    %v1822 = vpop.f32.mrb[0].mxu0
    %v1823 = vadd.f32 0.0, %v1822
    %v1824 = vpop.f32.mrb[0].mxu0
    %1825 = vmatprep.mubr.f32.mxu0 0.0
    %1826 = vmatmul.mubr.f32.gmra.mrb[0].mxu0 %v1668
    %v1827 = vpop.f32.mrb[0].mxu0
    %v1828 = vadd.f32 0.0, %v1827
    %v1829 = vpop.f32.mrb[0].mxu0
    %1830 = vmatprep.mubr.f32.mxu0 0.0
    %1831 = vmatmul.mubr.f32.gmra.mrb[0].mxu0 %v1671
    %v1832 = vpop.f32.mrb[0].mxu0
    %v1833 = vadd.f32 0.0, %v1832
    %v1834 = vpop.f32.mrb[0].mxu0
    %1835 = vmatprep.mubr.f32.mxu0 0.0
    %1836 = vmatmul.mubr.f32.gmra.mrb[0].mxu0 %v1674
    %v1837 = vpop.f32.mrb[0].mxu0
    %v1838 = vadd.f32 0.0, %v1837
    %v1839 = vpop.f32.mrb[0].mxu0
    %1840 = vmatprep.mubr.f32.mxu0 0.0
    %1841 = vmatmul.mubr.f32.gmra.mrb[0].mxu0 %v1677
    %v1842 = vpop.f32.mrb[0].mxu0
    %v1843 = vadd.f32 0.0, %v1842
    %v1844 = vpop.f32.mrb[0].mxu0
    %1845 = vmatprep.mubr.f32.mxu0 0.0
    %1846 = vmatmul.mubr.f32.gmra.mrb[0].mxu0 %v1680
    %v1847 = vpop.f32.mrb[0].mxu0
    %v1848 = vadd.f32 0.0, %v1847
    %v1849 = vpop.f32.mrb[0].mxu0
    %1850 = vmatprep.mubr.f32.mxu0 0.0
    %1851 = vmatmul.mubr.f32.gmra.mrb[0].mxu0 %v1683
    %v1852 = vpop.f32.mrb[0].mxu0
    %v1853 = vadd.f32 0.0, %v1852
    %v1854 = vpop.f32.mrb[0].mxu0
    %1855 = vmatprep.mubr.f32.mxu0 0.0
    %1856 = vmatmul.mubr.f32.gmra.mrb[0].mxu0 %v1686
    %v1857 = vpop.f32.mrb[0].mxu0
    %v1858 = vadd.f32 0.0, %v1857
    %v1859 = vpop.f32.mrb[0].mxu0
    %1860 = vmatprep.mubr.f32.mxu0 0.0
    %1861 = vmatmul.mubr.f32.gmra.mrb[0].mxu0 %v1689
    %v1862 = vpop.f32.mrb[0].mxu0
    %v1863 = vadd.f32 0.0, %v1862
    %v1864 = vpop.f32.mrb[0].mxu0
    %1865 = vmatprep.mubr.f32.mxu0 0.0
    %1866 = vmatmul.mubr.f32.gmra.mrb[0].mxu0 %v1692
    %v1867 = vpop.f32.mrb[0].mxu0
    %v1868 = vadd.f32 0.0, %v1867
    %v1869 = vpop.f32.mrb[0].mxu0
    %1870 = vmatprep.mubr.f32.mxu0 0.0
    %1871 = vmatmul.mubr.f32.gmra.mrb[0].mxu0 %v1695
    %v1872 = vpop.f32.mrb[0].mxu0
    %v1873 = vadd.f32 0.0, %v1872
    %v1874 = vpop.f32.mrb[0].mxu0
    %1875 = vmatprep.mubr.f32.mxu0 0.0
    %1876 = vmatmul.mubr.f32.gmra.mrb[0].mxu0 %v1698
    %v1877 = vpop.f32.mrb[0].mxu0
    %v1878 = vadd.f32 0.0, %v1877
    %v1879 = vpop.f32.mrb[0].mxu0
    %1880 = vmatprep.mubr.f32.mxu0 0.0
    %1881 = vmatmul.mubr.f32.gmra.mrb[0].mxu0 %v1701
    %v1882 = vpop.f32.mrb[0].mxu0
    %v1883 = vadd.f32 0.0, %v1882
    %v1884 = vpop.f32.mrb[0].mxu0
    %1885 = vmatprep.mubr.f32.mxu0 0.0
    %1886 = vmatmul.mubr.f32.gmra.mrb[0].mxu0 %v1704
    %v1887 = vpop.f32.mrb[0].mxu0
    %v1888 = vadd.f32 0.0, %v1887
    %v1889 = vpop.f32.mrb[0].mxu0
    %1890 = vmatprep.mubr.f32.mxu0 0.0
    %1891 = vmatmul.mubr.f32.gmra.mrb[0].mxu0 %v1707
    %v1892 = vpop.f32.mrb[0].mxu0
    %v1893 = vadd.f32 0.0, %v1892
    %v1894 = vpop.f32.mrb[0].mxu0
    %1895 = vmatprep.mubr.f32.mxu0 0.0
    %1896 = vmatmul.mubr.f32.gmra.mrb[0].mxu0 %v1710
    %v1897 = vpop.f32.mrb[0].mxu0
    %v1898 = vadd.f32 0.0, %v1897
    %v1899 = vpop.f32.mrb[0].mxu0
    %1900 = vmatprep.mubr.f32.mxu0 0.0
    %1901 = vmatmul.mubr.f32.gmra.mrb[0].mxu0 %v1713
    %v1902 = vpop.f32.mrb[0].mxu0
    %v1903 = vadd.f32 0.0, %v1902
    %v1904 = vpop.f32.mrb[0].mxu0
    %1905 = vmatprep.mubr.f32.mxu0 0.0
    %1906 = vmatmul.mubr.f32.gmra.mrb[0].mxu0 %v1716
    %v1907 = vpop.f32.mrb[0].mxu0
    %v1908 = vadd.f32 0.0, %v1907
    %v1909 = vpop.f32.mrb[0].mxu0
    %1910 = vmatprep.mubr.f32.mxu0 0.0
    %1911 = vmatmul.mubr.f32.gmra.mrb[0].mxu0 %v1719
    %v1912 = vpop.f32.mrb[0].mxu0
    %v1913 = vadd.f32 0.0, %v1912
    %v1914 = vpop.f32.mrb[0].mxu0
    %1915 = vmatprep.mubr.f32.mxu0 0.0
    %1916 = vmatmul.mubr.f32.gmra.mrb[0].mxu0 %v1722
    %v1917 = vpop.f32.mrb[0].mxu0
    %v1918 = vadd.f32 0.0, %v1917
    %v1919 = vpop.f32.mrb[0].mxu0
    %1920 = vmatprep.mubr.f32.mxu0 0.0
    %1921 = vmatmul.mubr.f32.gmra.mrb[0].mxu0 %v1725
    %v1922 = vpop.f32.mrb[0].mxu0
    %v1923 = vadd.f32 0.0, %v1922
    %v1924 = vpop.f32.mrb[0].mxu0
    %1925 = vmatprep.mubr.f32.mxu0 0.0
    %1926 = vmatmul.mubr.f32.gmra.mrb[0].mxu0 %v1728
    %v1927 = vpop.f32.mrb[0].mxu0
    %v1928 = vadd.f32 0.0, %v1927
    %v1929 = vpop.f32.mrb[0].mxu0
    %1930 = vmatprep.mubr.f32.mxu0 0.0
    %1931 = vmatmul.mubr.f32.gmra.mrb[0].mxu0 %v1731
    %v1932 = vpop.f32.mrb[0].mxu0
    %v1933 = vadd.f32 0.0, %v1932
    %v1934 = vpop.f32.mrb[0].mxu0
    %1935 = vmatprep.mubr.f32.mxu0 0.0
    %1936 = vmatmul.mubr.f32.gmra.mrb[0].mxu0 %v1734
    %v1937 = vpop.f32.mrb[0].mxu0
    %v1938 = vadd.f32 0.0, %v1937
    %v1939 = vpop.f32.mrb[0].mxu0
    %1940 = vmatprep.mubr.f32.mxu0 0.0
    %1941 = vmatmul.mubr.f32.gmra.mrb[0].mxu0 %v1737
    %v1942 = vpop.f32.mrb[0].mxu0
    %v1943 = vadd.f32 0.0, %v1942
    %v1944 = vpop.f32.mrb[0].mxu0
    %1945 = vmatprep.mubr.f32.mxu0 0.0
    %1946 = vmatmul.mubr.f32.gmra.mrb[0].mxu0 %v1740
    %v1947 = vpop.f32.mrb[0].mxu0
    %v1948 = vadd.f32 0.0, %v1947
    %v1949 = vpop.f32.mrb[0].mxu0
    %1950 = vmatprep.mubr.f32.mxu0 0.0
    %1951 = vmatmul.mubr.f32.gmra.mrb[0].mxu0 %v1743
    %v1952 = vpop.f32.mrb[0].mxu0
    %v1953 = vadd.f32 0.0, %v1952
    %v1954 = vpop.f32.mrb[0].mxu0
    %1955 = vmatprep.mubr.f32.mxu0 0.0
    %1956 = vmatmul.mubr.f32.gmra.mrb[0].mxu0 %v1746
    %v1957 = vpop.f32.mrb[0].mxu0
    %v1958 = vadd.f32 0.0, %v1957
    %v1959 = vpop.f32.mrb[0].mxu0
    %1960 = vmatprep.mubr.f32.mxu0 0.0
    %1961 = vmatmul.mubr.f32.gmra.mrb[0].mxu0 %v1749
    %v1962 = vpop.f32.mrb[0].mxu0
    %v1963 = vadd.f32 0.0, %v1962
    %v1964 = vpop.f32.mrb[0].mxu0
    %1965 = vdwg.mxu0
    %v1966 = vmax.f32 %v1625, %v1818
    %v1967 = vmax.f32 %v1626, %v1823
    %v1968 = vmax.f32 %v1627, %v1828
    %v1969 = vmax.f32 %v1628, %v1833
    %v1970 = vmax.f32 %v1629, %v1838
    %v1971 = vmax.f32 %v1630, %v1843
    %v1972 = vmax.f32 %v1631, %v1848
    %v1973 = vmax.f32 %v1632, %v1853
    %v1974 = vmax.f32 %v1633, %v1858
    %v1975 = vmax.f32 %v1634, %v1863
    %v1976 = vmax.f32 %v1635, %v1868
    %v1977 = vmax.f32 %v1636, %v1873
    %v1978 = vmax.f32 %v1637, %v1878
    %v1979 = vmax.f32 %v1638, %v1883
    %v1980 = vmax.f32 %v1639, %v1888
    %v1981 = vmax.f32 %v1640, %v1893
    %v1982 = vmax.f32 %v1641, %v1898
    %v1983 = vmax.f32 %v1642, %v1903
    %v1984 = vmax.f32 %v1643, %v1908
    %v1985 = vmax.f32 %v1644, %v1913
    %v1986 = vmax.f32 %v1645, %v1918
    %v1987 = vmax.f32 %v1646, %v1923
    %v1988 = vmax.f32 %v1647, %v1928
    %v1989 = vmax.f32 %v1648, %v1933
    %v1990 = vmax.f32 %v1649, %v1938
    %v1991 = vmax.f32 %v1650, %v1943
    %v1992 = vmax.f32 %v1651, %v1948
    %v1993 = vmax.f32 %v1652, %v1953
    %v1994 = vmax.f32 %v1653, %v1958
    %v1995 = vmax.f32 %v1654, %v1963
    %v1996 = vld [vmem:[%s1] sm:$0xff]
    %v1997 = vld [vmem:[%s1 + $0x8] sm:$0xff]
    %v1998 = vld [vmem:[%s1 + $0x10] sm:$0xff]
    %v1999 = vld [vmem:[%s1 + $0x18] sm:$0xff]
    %v2000 = vld [vmem:[%s1 + $0x20] sm:$0xff]
    %v2001 = vld [vmem:[%s1 + $0x28] sm:$0xff]
    %v2002 = vld [vmem:[%s1 + $0x30] sm:$0xff]
    %v2003 = vld [vmem:[%s1 + $0x38] sm:$0xff]
    %v2004 = vld [vmem:[%s1 + $0x40] sm:$0xff]
    %v2005 = vld [vmem:[%s1 + $0x48] sm:$0xff]
    %v2006 = vld [vmem:[%s1 + $0x50] sm:$0xff]
    %v2007 = vld [vmem:[%s1 + $0x58] sm:$0xff]
    %v2008 = vld [vmem:[%s1 + $0x60] sm:$0xff]
    %v2009 = vld [vmem:[%s1 + $0x68] sm:$0xff]
    %v2010 = vld [vmem:[%s1 + $0x70] sm:$0xff]
    %v2011 = vld [vmem:[%s1 + $0x78] sm:$0xff]
    %v2012 = vld [vmem:[%s1 + $0x80] sm:$0xff]
    %v2013 = vld [vmem:[%s1 + $0x88] sm:$0xff]
    %v2014 = vld [vmem:[%s1 + $0x90] sm:$0xff]
    %v2015 = vld [vmem:[%s1 + $0x98] sm:$0xff]
    %v2016 = vld [vmem:[%s1 + $0xa0] sm:$0xff]
    %v2017 = vld [vmem:[%s1 + $0xa8] sm:$0xff]
    %v2018 = vld [vmem:[%s1 + $0xb0] sm:$0xff]
    %v2019 = vld [vmem:[%s1 + $0xb8] sm:$0xff]
    %v2020 = vld [vmem:[%s1 + $0xc0] sm:$0xff]
    %v2021 = vld [vmem:[%s1 + $0xc8] sm:$0xff]
    %v2022 = vld [vmem:[%s1 + $0xd0] sm:$0xff]
    %v2023 = vld [vmem:[%s1 + $0xd8] sm:$0xff]
    %v2024 = vld [vmem:[%s1 + $0xe0] sm:$0xff]
    %v2025 = vld [vmem:[%s1 + $0xe8] sm:$0xff]
    %2027 = vset.pattern.permute.xlu0 0
    %2028 = vperm.xlu0 %2027, %v1996
    %v2029 = vpop.permute.xlu0 %2028
    %2032 = vset.pattern.permute.xlu0 0
    %2033 = vperm.xlu0 %2032, %v1997
    %v2034 = vpop.permute.xlu0 %2033
    %2037 = vset.pattern.permute.xlu0 0
    %2038 = vperm.xlu0 %2037, %v1998
    %v2039 = vpop.permute.xlu0 %2038
    %2042 = vset.pattern.permute.xlu0 0
    %2043 = vperm.xlu0 %2042, %v1999
    %v2044 = vpop.permute.xlu0 %2043
    %2047 = vset.pattern.permute.xlu0 0
    %2048 = vperm.xlu0 %2047, %v2000
    %v2049 = vpop.permute.xlu0 %2048
    %2052 = vset.pattern.permute.xlu0 0
    %2053 = vperm.xlu0 %2052, %v2001
    %v2054 = vpop.permute.xlu0 %2053
    %2057 = vset.pattern.permute.xlu0 0
    %2058 = vperm.xlu0 %2057, %v2002
    %v2059 = vpop.permute.xlu0 %2058
    %2062 = vset.pattern.permute.xlu0 0
    %2063 = vperm.xlu0 %2062, %v2003
    %v2064 = vpop.permute.xlu0 %2063
    %2067 = vset.pattern.permute.xlu0 0
    %2068 = vperm.xlu0 %2067, %v2004
    %v2069 = vpop.permute.xlu0 %2068
    %2072 = vset.pattern.permute.xlu0 0
    %2073 = vperm.xlu0 %2072, %v2005
    %v2074 = vpop.permute.xlu0 %2073
    %2077 = vset.pattern.permute.xlu0 0
    %2078 = vperm.xlu0 %2077, %v2006
    %v2079 = vpop.permute.xlu0 %2078
    %2082 = vset.pattern.permute.xlu0 0
    %2083 = vperm.xlu0 %2082, %v2007
    %v2084 = vpop.permute.xlu0 %2083
    %2087 = vset.pattern.permute.xlu0 0
    %2088 = vperm.xlu0 %2087, %v2008
    %v2089 = vpop.permute.xlu0 %2088
    %2092 = vset.pattern.permute.xlu0 0
    %2093 = vperm.xlu0 %2092, %v2009
    %v2094 = vpop.permute.xlu0 %2093
    %2097 = vset.pattern.permute.xlu0 0
    %2098 = vperm.xlu0 %2097, %v2010
    %v2099 = vpop.permute.xlu0 %2098
    %2102 = vset.pattern.permute.xlu0 0
    %2103 = vperm.xlu0 %2102, %v2011
    %v2104 = vpop.permute.xlu0 %2103
    %2107 = vset.pattern.permute.xlu0 0
    %2108 = vperm.xlu0 %2107, %v2012
    %v2109 = vpop.permute.xlu0 %2108
    %2112 = vset.pattern.permute.xlu0 0
    %2113 = vperm.xlu0 %2112, %v2013
    %v2114 = vpop.permute.xlu0 %2113
    %2117 = vset.pattern.permute.xlu0 0
    %2118 = vperm.xlu0 %2117, %v2014
    %v2119 = vpop.permute.xlu0 %2118
    %2122 = vset.pattern.permute.xlu0 0
    %2123 = vperm.xlu0 %2122, %v2015
    %v2124 = vpop.permute.xlu0 %2123
    %2127 = vset.pattern.permute.xlu0 0
    %2128 = vperm.xlu0 %2127, %v2016
    %v2129 = vpop.permute.xlu0 %2128
    %2132 = vset.pattern.permute.xlu0 0
    %2133 = vperm.xlu0 %2132, %v2017
    %v2134 = vpop.permute.xlu0 %2133
    %2137 = vset.pattern.permute.xlu0 0
    %2138 = vperm.xlu0 %2137, %v2018
    %v2139 = vpop.permute.xlu0 %2138
    %2142 = vset.pattern.permute.xlu0 0
    %2143 = vperm.xlu0 %2142, %v2019
    %v2144 = vpop.permute.xlu0 %2143
    %2147 = vset.pattern.permute.xlu0 0
    %2148 = vperm.xlu0 %2147, %v2020
    %v2149 = vpop.permute.xlu0 %2148
    %2152 = vset.pattern.permute.xlu0 0
    %2153 = vperm.xlu0 %2152, %v2021
    %v2154 = vpop.permute.xlu0 %2153
    %2157 = vset.pattern.permute.xlu0 0
    %2158 = vperm.xlu0 %2157, %v2022
    %v2159 = vpop.permute.xlu0 %2158
    %2162 = vset.pattern.permute.xlu0 0
    %2163 = vperm.xlu0 %2162, %v2023
    %v2164 = vpop.permute.xlu0 %2163
    %2167 = vset.pattern.permute.xlu0 0
    %2168 = vperm.xlu0 %2167, %v2024
    %v2169 = vpop.permute.xlu0 %2168
    %2172 = vset.pattern.permute.xlu0 0
    %2173 = vperm.xlu0 %2172, %v2025
    %v2174 = vpop.permute.xlu0 %2173
    %v2176 = vmul.f32 %v1966, %v2029
    %v2177 = vmul.f32 %v1967, %v2034
    %v2178 = vmul.f32 %v1968, %v2039
    %v2179 = vmul.f32 %v1969, %v2044
    %v2180 = vmul.f32 %v1970, %v2049
    %v2181 = vmul.f32 %v1971, %v2054
    %v2182 = vmul.f32 %v1972, %v2059
    %v2183 = vmul.f32 %v1973, %v2064
    %v2184 = vmul.f32 %v1974, %v2069
    %v2185 = vmul.f32 %v1975, %v2074
    %v2186 = vmul.f32 %v1976, %v2079
    %v2187 = vmul.f32 %v1977, %v2084
    %v2188 = vmul.f32 %v1978, %v2089
    %v2189 = vmul.f32 %v1979, %v2094
    %v2190 = vmul.f32 %v1980, %v2099
    %v2191 = vmul.f32 %v1981, %v2104
    %v2192 = vmul.f32 %v1982, %v2109
    %v2193 = vmul.f32 %v1983, %v2114
    %v2194 = vmul.f32 %v1984, %v2119
    %v2195 = vmul.f32 %v1985, %v2124
    %v2196 = vmul.f32 %v1986, %v2129
    %v2197 = vmul.f32 %v1987, %v2134
    %v2198 = vmul.f32 %v1988, %v2139
    %v2199 = vmul.f32 %v1989, %v2144
    %v2200 = vmul.f32 %v1990, %v2149
    %v2201 = vmul.f32 %v1991, %v2154
    %v2202 = vmul.f32 %v1992, %v2159
    %v2203 = vmul.f32 %v1993, %v2164
    %v2204 = vmul.f32 %v1994, %v2169
    %v2205 = vmul.f32 %v1995, %v2174
    %2206 = vst.msk [vmem:[#allocation2] sm:$0xff] %vm45, %v2176
    %2207 = vst.msk [vmem:[#allocation2 + $0x8] sm:$0xff] %vm45, %v2177
    %2208 = vst.msk [vmem:[#allocation2 + $0x10] sm:$0xff] %vm45, %v2178
    %2209 = vst.msk [vmem:[#allocation2 + $0x18] sm:$0xff] %vm45, %v2179
    %2210 = vst.msk [vmem:[#allocation2 + $0x20] sm:$0xff] %vm45, %v2180
    %2211 = vst.msk [vmem:[#allocation2 + $0x28] sm:$0xff] %vm45, %v2181
    %2212 = vst.msk [vmem:[#allocation2 + $0x30] sm:$0xff] %vm45, %v2182
    %2213 = vst.msk [vmem:[#allocation2 + $0x38] sm:$0xff] %vm45, %v2183
    %2214 = vst.msk [vmem:[#allocation2 + $0x40] sm:$0xff] %vm45, %v2184
    %2215 = vst.msk [vmem:[#allocation2 + $0x48] sm:$0xff] %vm45, %v2185
    %2216 = vst.msk [vmem:[#allocation2 + $0x50] sm:$0xff] %vm45, %v2186
    %2217 = vst.msk [vmem:[#allocation2 + $0x58] sm:$0xff] %vm45, %v2187
    %2218 = vst.msk [vmem:[#allocation2 + $0x60] sm:$0xff] %vm45, %v2188
    %2219 = vst.msk [vmem:[#allocation2 + $0x68] sm:$0xff] %vm45, %v2189
    %2220 = vst.msk [vmem:[#allocation2 + $0x70] sm:$0xff] %vm45, %v2190
    %2221 = vst.msk [vmem:[#allocation2 + $0x78] sm:$0xff] %vm45, %v2191
    %2222 = vst.msk [vmem:[#allocation2 + $0x80] sm:$0xff] %vm45, %v2192
    %2223 = vst.msk [vmem:[#allocation2 + $0x88] sm:$0xff] %vm45, %v2193
    %2224 = vst.msk [vmem:[#allocation2 + $0x90] sm:$0xff] %vm45, %v2194
    %2225 = vst.msk [vmem:[#allocation2 + $0x98] sm:$0xff] %vm45, %v2195
    %2226 = vst.msk [vmem:[#allocation2 + $0xa0] sm:$0xff] %vm45, %v2196
    %2227 = vst.msk [vmem:[#allocation2 + $0xa8] sm:$0xff] %vm45, %v2197
    %2228 = vst.msk [vmem:[#allocation2 + $0xb0] sm:$0xff] %vm45, %v2198
    %2229 = vst.msk [vmem:[#allocation2 + $0xb8] sm:$0xff] %vm45, %v2199
    %2230 = vst.msk [vmem:[#allocation2 + $0xc0] sm:$0xff] %vm45, %v2200
    %2231 = vst.msk [vmem:[#allocation2 + $0xc8] sm:$0xff] %vm45, %v2201
    %2232 = vst.msk [vmem:[#allocation2 + $0xd0] sm:$0xff] %vm45, %v2202
    %2233 = vst.msk [vmem:[#allocation2 + $0xd8] sm:$0xff] %vm45, %v2203
    %2234 = vst.msk [vmem:[#allocation2 + $0xe0] sm:$0xff] %vm45, %v2204
    %2235 = vst.msk [vmem:[#allocation2 + $0xe8] sm:$0xff] %vm45, %v2205
    %v2236 = vld [vmem:[#allocation2] sm:$0xff]
    %v2237 = vld [vmem:[#allocation2 + $0x8] sm:$0xff]
    %v2238 = vld [vmem:[#allocation2 + $0x10] sm:$0xff]
    %v2239 = vld [vmem:[#allocation2 + $0x18] sm:$0xff]
    %v2240 = vld [vmem:[#allocation2 + $0x20] sm:$0xff]
    %v2241 = vld [vmem:[#allocation2 + $0x28] sm:$0xff]
    %v2242 = vld [vmem:[#allocation2 + $0x30] sm:$0xff]
    %v2243 = vld [vmem:[#allocation2 + $0x38] sm:$0xff]
    %v2244 = vld [vmem:[#allocation2 + $0x40] sm:$0xff]
    %v2245 = vld [vmem:[#allocation2 + $0x48] sm:$0xff]
    %v2246 = vld [vmem:[#allocation2 + $0x50] sm:$0xff]
    %v2247 = vld [vmem:[#allocation2 + $0x58] sm:$0xff]
    %v2248 = vld [vmem:[#allocation2 + $0x60] sm:$0xff]
    %v2249 = vld [vmem:[#allocation2 + $0x68] sm:$0xff]
    %v2250 = vld [vmem:[#allocation2 + $0x70] sm:$0xff]
    %v2251 = vld [vmem:[#allocation2 + $0x78] sm:$0xff]
    %v2252 = vld [vmem:[#allocation2 + $0x80] sm:$0xff]
    %v2253 = vld [vmem:[#allocation2 + $0x88] sm:$0xff]
    %v2254 = vld [vmem:[#allocation2 + $0x90] sm:$0xff]
    %v2255 = vld [vmem:[#allocation2 + $0x98] sm:$0xff]
    %v2256 = vld [vmem:[#allocation2 + $0xa0] sm:$0xff]
    %v2257 = vld [vmem:[#allocation2 + $0xa8] sm:$0xff]
    %v2258 = vld [vmem:[#allocation2 + $0xb0] sm:$0xff]
    %v2259 = vld [vmem:[#allocation2 + $0xb8] sm:$0xff]
    %v2260 = vld [vmem:[#allocation2 + $0xc0] sm:$0xff]
    %v2261 = vld [vmem:[#allocation2 + $0xc8] sm:$0xff]
    %v2262 = vld [vmem:[#allocation2 + $0xd0] sm:$0xff]
    %v2263 = vld [vmem:[#allocation2 + $0xd8] sm:$0xff]
    %v2264 = vld [vmem:[#allocation2 + $0xe0] sm:$0xff]
    %v2265 = vld [vmem:[#allocation2 + $0xe8] sm:$0xff]
    %v2266 = vpack.c.bf16 %v2237, %v2236
    %v2267 = vpack.c.bf16 %v2239, %v2238
    %v2268 = vpack.c.bf16 %v2241, %v2240
    %v2269 = vpack.c.bf16 %v2243, %v2242
    %v2270 = vpack.c.bf16 %v2245, %v2244
    %v2271 = vpack.c.bf16 %v2247, %v2246
    %v2272 = vpack.c.bf16 %v2249, %v2248
    %v2273 = vpack.c.bf16 %v2251, %v2250
    %v2274 = vpack.c.bf16 %v2253, %v2252
    %v2275 = vpack.c.bf16 %v2255, %v2254
    %v2276 = vpack.c.bf16 %v2257, %v2256
    %v2277 = vpack.c.bf16 %v2259, %v2258
    %v2278 = vpack.c.bf16 %v2261, %v2260
    %v2279 = vpack.c.bf16 %v2263, %v2262
    %v2280 = vpack.c.bf16 %v2265, %v2264
    %v2281 = vld [vmem:[%s5] sm:$0xf]
    %v2282 = vld [vmem:[%s5 + $0x4] sm:$0xf]
    %v2283 = vld [vmem:[%s5 + $0x8] sm:$0xf]
    %v2284 = vld [vmem:[%s5 + $0xc] sm:$0xf]
    %v2285 = vld [vmem:[%s5 + $0x10] sm:$0xf]
    %v2286 = vld [vmem:[%s5 + $0x14] sm:$0xf]
    %v2287 = vld [vmem:[#allocation2 + $0x2] sm:$0xff]
    %v2288 = vld [vmem:[#allocation2 + $0xa] sm:$0xff]
    %v2289 = vld [vmem:[#allocation2 + $0x12] sm:$0xff]
    %v2290 = vld [vmem:[#allocation2 + $0x1a] sm:$0xff]
    %v2291 = vld [vmem:[#allocation2 + $0x22] sm:$0xff]
    %v2292 = vld [vmem:[#allocation2 + $0x2a] sm:$0xff]
    %v2293 = vld [vmem:[#allocation2 + $0x32] sm:$0xff]
    %v2294 = vld [vmem:[#allocation2 + $0x3a] sm:$0xff]
    %v2295 = vld [vmem:[#allocation2 + $0x42] sm:$0xff]
    %v2296 = vld [vmem:[#allocation2 + $0x4a] sm:$0xff]
    %v2297 = vld [vmem:[#allocation2 + $0x52] sm:$0xff]
    %v2298 = vld [vmem:[#allocation2 + $0x5a] sm:$0xff]
    %v2299 = vld [vmem:[#allocation2 + $0x62] sm:$0xff]
    %v2300 = vld [vmem:[#allocation2 + $0x6a] sm:$0xff]
    %v2301 = vld [vmem:[#allocation2 + $0x72] sm:$0xff]
    %v2302 = vld [vmem:[#allocation2 + $0x7a] sm:$0xff]
    %v2303 = vld [vmem:[#allocation2 + $0x82] sm:$0xff]
    %v2304 = vld [vmem:[#allocation2 + $0x8a] sm:$0xff]
    %v2305 = vld [vmem:[#allocation2 + $0x92] sm:$0xff]
    %v2306 = vld [vmem:[#allocation2 + $0x9a] sm:$0xff]
    %v2307 = vld [vmem:[#allocation2 + $0xa2] sm:$0xff]
    %v2308 = vld [vmem:[#allocation2 + $0xaa] sm:$0xff]
    %v2309 = vld [vmem:[#allocation2 + $0xb2] sm:$0xff]
    %v2310 = vld [vmem:[#allocation2 + $0xba] sm:$0xff]
    %v2311 = vld [vmem:[#allocation2 + $0xc2] sm:$0xff]
    %v2312 = vld [vmem:[#allocation2 + $0xca] sm:$0xff]
    %v2313 = vld [vmem:[#allocation2 + $0xd2] sm:$0xff]
    %v2314 = vld [vmem:[#allocation2 + $0xda] sm:$0xff]
    %v2315 = vld [vmem:[#allocation2 + $0xe2] sm:$0xff]
    %v2316 = vld [vmem:[#allocation2 + $0xea] sm:$0xff]
    %v2317 = vpack.c.bf16 %v2288, %v2287
    %v2318 = vpack.c.bf16 %v2290, %v2289
    %v2319 = vpack.c.bf16 %v2292, %v2291
    %v2320 = vpack.c.bf16 %v2294, %v2293
    %v2321 = vpack.c.bf16 %v2296, %v2295
    %v2322 = vpack.c.bf16 %v2298, %v2297
    %v2323 = vpack.c.bf16 %v2300, %v2299
    %v2324 = vpack.c.bf16 %v2302, %v2301
    %v2325 = vpack.c.bf16 %v2304, %v2303
    %v2326 = vpack.c.bf16 %v2306, %v2305
    %v2327 = vpack.c.bf16 %v2308, %v2307
    %v2328 = vpack.c.bf16 %v2310, %v2309
    %v2329 = vpack.c.bf16 %v2312, %v2311
    %v2330 = vpack.c.bf16 %v2314, %v2313
    %v2331 = vpack.c.bf16 %v2316, %v2315
    %s2332 = scalar_lea.vmem %s5, 24
    %v2333 = vld [vmem:[%s2332] sm:$0xf]
    %v2334 = vld [vmem:[%s2332 + $0x4] sm:$0xf]
    %v2335 = vld [vmem:[%s2332 + $0x8] sm:$0xf]
    %v2336 = vld [vmem:[%s2332 + $0xc] sm:$0xf]
    %v2337 = vld [vmem:[%s2332 + $0x10] sm:$0xf]
    %v2338 = vld [vmem:[%s2332 + $0x14] sm:$0xf]
    %v2345 = vunpack.c.l.b16 %v2333
    %v2346 = vunpack.c.l.b16 %v2334
    %v2347 = vunpack.c.l.b16 %v2335
    %v2348 = vunpack.c.l.b16 %v2336
    %v2349 = vunpack.c.l.b16 %v2337
    %v2350 = vunpack.c.l.b16 %v2338
    %v2351 = vpack.c.b16 %v2346, %v2345
    %v2352 = vpack.c.b16 %v2348, %v2347
    %v2353 = vpack.c.b16 %v2350, %v2349
    %v2358 = vsel %vm45, %v2317, 0
    %v2361 = vsel %vm45, %v2318, 0
    %v2364 = vsel %vm45, %v2319, 0
    %v2367 = vsel %vm45, %v2320, 0
    %v2370 = vsel %vm45, %v2321, 0
    %v2373 = vsel %vm45, %v2322, 0
    %v2376 = vsel %vm45, %v2323, 0
    %v2379 = vsel %vm45, %v2324, 0
    %v2382 = vsel %vm45, %v2325, 0
    %v2385 = vsel %vm45, %v2326, 0
    %v2388 = vsel %vm45, %v2327, 0
    %v2391 = vsel %vm45, %v2328, 0
    %v2394 = vsel %vm45, %v2329, 0
    %v2397 = vsel %vm45, %v2330, 0
    %v2400 = vsel %vm45, %v2331, 0
    %2402 = vmatprep.subr.bf16.mxu0 0
    %2403 = vmatpush1.bf16.msra.mxu0 %v2351
    %2404 = vmatprep.subr.bf16.mxu0 0
    %2405 = vmatpush1.bf16.msra.mxu0 %v2352
    %2406 = vmatprep.subr.bf16.mxu0 0
    %2407 = vmatpush1.bf16.msra.mxu0 %v2353
    %2408 = vmatprep.subr.bf16.mxu0 0
    %2409 = vmatpush1.bf16.msra.mxu0 0
    %2410 = vmatprep.subr.bf16.mxu0 0
    %2411 = vmatpush1.bf16.msra.mxu0 0
    %2412 = vmatprep.subr.bf16.mxu0 0
    %2413 = vmatpush1.bf16.msra.mxu0 0
    %2414 = vmatprep.subr.bf16.mxu0 0
    %2415 = vmatpush1.bf16.msra.mxu0 0
    %2416 = vmatprep.subr.bf16.mxu0 0
    %2417 = vmatpush1.bf16.msra.mxu0 0
    %2418 = vmatprep.subr.bf16.mxu0 0
    %2419 = vmatpush1.bf16.msra.mxu0 0
    %2420 = vmatprep.subr.bf16.mxu0 0
    %2421 = vmatpush1.bf16.msra.mxu0 0
    %2422 = vmatprep.subr.bf16.mxu0 0
    %2423 = vmatpush1.bf16.msra.mxu0 0
    %2424 = vmatprep.subr.bf16.mxu0 0
    %2425 = vmatpush1.bf16.msra.mxu0 0
    %2426 = vmatprep.subr.bf16.mxu0 0
    %2427 = vmatpush1.bf16.msra.mxu0 0
    %2428 = vmatprep.subr.bf16.mxu0 0
    %2429 = vmatpush1.bf16.msra.mxu0 0
    %2430 = vmatprep.subr.bf16.mxu0 0
    %2431 = vmatpush1.bf16.msra.mxu0 0
    %2432 = vmatprep.subr.bf16.mxu0 0
    %2433 = vmatpush1.bf16.msra.mxu0 0
    %2434 = vmatprep.mubr.bf16.mxu0 0
    %2435 = vmatmul.mubr.bf16.gmra.mrb[0].mxu0 %v2358
    %v2436 = vpop.f32.mrb[0].mxu0
    %v2437 = vadd.f32 0.0, %v2436
    %v2438 = vpop.f32.mrb[0].mxu0
    %v2439 = vpop.f32.mrb[0].mxu0
    %v2440 = vadd.f32 0.0, %v2439
    %v2441 = vpop.f32.mrb[0].mxu0
    %2442 = vmatprep.mubr.bf16.mxu0 0
    %2443 = vmatmul.mubr.bf16.gmra.mrb[0].mxu0 %v2361
    %v2444 = vpop.f32.mrb[0].mxu0
    %v2445 = vadd.f32 0.0, %v2444
    %v2446 = vpop.f32.mrb[0].mxu0
    %v2447 = vpop.f32.mrb[0].mxu0
    %v2448 = vadd.f32 0.0, %v2447
    %v2449 = vpop.f32.mrb[0].mxu0
    %2450 = vmatprep.mubr.bf16.mxu0 0
    %2451 = vmatmul.mubr.bf16.gmra.mrb[0].mxu0 %v2364
    %v2452 = vpop.f32.mrb[0].mxu0
    %v2453 = vadd.f32 0.0, %v2452
    %v2454 = vpop.f32.mrb[0].mxu0
    %v2455 = vpop.f32.mrb[0].mxu0
    %v2456 = vadd.f32 0.0, %v2455
    %v2457 = vpop.f32.mrb[0].mxu0
    %2458 = vmatprep.mubr.bf16.mxu0 0
    %2459 = vmatmul.mubr.bf16.gmra.mrb[0].mxu0 %v2367
    %v2460 = vpop.f32.mrb[0].mxu0
    %v2461 = vadd.f32 0.0, %v2460
    %v2462 = vpop.f32.mrb[0].mxu0
    %v2463 = vpop.f32.mrb[0].mxu0
    %v2464 = vadd.f32 0.0, %v2463
    %v2465 = vpop.f32.mrb[0].mxu0
    %2466 = vmatprep.mubr.bf16.mxu0 0
    %2467 = vmatmul.mubr.bf16.gmra.mrb[0].mxu0 %v2370
    %v2468 = vpop.f32.mrb[0].mxu0
    %v2469 = vadd.f32 0.0, %v2468
    %v2470 = vpop.f32.mrb[0].mxu0
    %v2471 = vpop.f32.mrb[0].mxu0
    %v2472 = vadd.f32 0.0, %v2471
    %v2473 = vpop.f32.mrb[0].mxu0
    %2474 = vmatprep.mubr.bf16.mxu0 0
    %2475 = vmatmul.mubr.bf16.gmra.mrb[0].mxu0 %v2373
    %v2476 = vpop.f32.mrb[0].mxu0
    %v2477 = vadd.f32 0.0, %v2476
    %v2478 = vpop.f32.mrb[0].mxu0
    %v2479 = vpop.f32.mrb[0].mxu0
    %v2480 = vadd.f32 0.0, %v2479
    %v2481 = vpop.f32.mrb[0].mxu0
    %2482 = vmatprep.mubr.bf16.mxu0 0
    %2483 = vmatmul.mubr.bf16.gmra.mrb[0].mxu0 %v2376
    %v2484 = vpop.f32.mrb[0].mxu0
    %v2485 = vadd.f32 0.0, %v2484
    %v2486 = vpop.f32.mrb[0].mxu0
    %v2487 = vpop.f32.mrb[0].mxu0
    %v2488 = vadd.f32 0.0, %v2487
    %v2489 = vpop.f32.mrb[0].mxu0
    %2490 = vmatprep.mubr.bf16.mxu0 0
    %2491 = vmatmul.mubr.bf16.gmra.mrb[0].mxu0 %v2379
    %v2492 = vpop.f32.mrb[0].mxu0
    %v2493 = vadd.f32 0.0, %v2492
    %v2494 = vpop.f32.mrb[0].mxu0
    %v2495 = vpop.f32.mrb[0].mxu0
    %v2496 = vadd.f32 0.0, %v2495
    %v2497 = vpop.f32.mrb[0].mxu0
    %2498 = vmatprep.mubr.bf16.mxu0 0
    %2499 = vmatmul.mubr.bf16.gmra.mrb[0].mxu0 %v2382
    %v2500 = vpop.f32.mrb[0].mxu0
    %v2501 = vadd.f32 0.0, %v2500
    %v2502 = vpop.f32.mrb[0].mxu0
    %v2503 = vpop.f32.mrb[0].mxu0
    %v2504 = vadd.f32 0.0, %v2503
    %v2505 = vpop.f32.mrb[0].mxu0
    %2506 = vmatprep.mubr.bf16.mxu0 0
    %2507 = vmatmul.mubr.bf16.gmra.mrb[0].mxu0 %v2385
    %v2508 = vpop.f32.mrb[0].mxu0
    %v2509 = vadd.f32 0.0, %v2508
    %v2510 = vpop.f32.mrb[0].mxu0
    %v2511 = vpop.f32.mrb[0].mxu0
    %v2512 = vadd.f32 0.0, %v2511
    %v2513 = vpop.f32.mrb[0].mxu0
    %2514 = vmatprep.mubr.bf16.mxu0 0
    %2515 = vmatmul.mubr.bf16.gmra.mrb[0].mxu0 %v2388
    %v2516 = vpop.f32.mrb[0].mxu0
    %v2517 = vadd.f32 0.0, %v2516
    %v2518 = vpop.f32.mrb[0].mxu0
    %v2519 = vpop.f32.mrb[0].mxu0
    %v2520 = vadd.f32 0.0, %v2519
    %v2521 = vpop.f32.mrb[0].mxu0
    %2522 = vmatprep.mubr.bf16.mxu0 0
    %2523 = vmatmul.mubr.bf16.gmra.mrb[0].mxu0 %v2391
    %v2524 = vpop.f32.mrb[0].mxu0
    %v2525 = vadd.f32 0.0, %v2524
    %v2526 = vpop.f32.mrb[0].mxu0
    %v2527 = vpop.f32.mrb[0].mxu0
    %v2528 = vadd.f32 0.0, %v2527
    %v2529 = vpop.f32.mrb[0].mxu0
    %2530 = vmatprep.mubr.bf16.mxu0 0
    %2531 = vmatmul.mubr.bf16.gmra.mrb[0].mxu0 %v2394
    %v2532 = vpop.f32.mrb[0].mxu0
    %v2533 = vadd.f32 0.0, %v2532
    %v2534 = vpop.f32.mrb[0].mxu0
    %v2535 = vpop.f32.mrb[0].mxu0
    %v2536 = vadd.f32 0.0, %v2535
    %v2537 = vpop.f32.mrb[0].mxu0
    %2538 = vmatprep.mubr.bf16.mxu0 0
    %2539 = vmatmul.mubr.bf16.gmra.mrb[0].mxu0 %v2397
    %v2540 = vpop.f32.mrb[0].mxu0
    %v2541 = vadd.f32 0.0, %v2540
    %v2542 = vpop.f32.mrb[0].mxu0
    %v2543 = vpop.f32.mrb[0].mxu0
    %v2544 = vadd.f32 0.0, %v2543
    %v2545 = vpop.f32.mrb[0].mxu0
    %2546 = vmatprep.mubr.bf16.mxu0 0
    %2547 = vmatmul.mubr.bf16.gmra.mrb[0].mxu0 %v2400
    %v2548 = vpop.f32.mrb[0].mxu0
    %v2549 = vadd.f32 0.0, %v2548
    %v2550 = vpop.f32.mrb[0].mxu0
    %v2551 = vpop.f32.mrb[0].mxu0
    %v2552 = vadd.f32 0.0, %v2551
    %v2553 = vpop.f32.mrb[0].mxu0
    %2554 = vdwg.mxu0
    %v2561 = vunpack.c.l.b16 %v2281
    %v2562 = vunpack.c.l.b16 %v2282
    %v2563 = vunpack.c.l.b16 %v2283
    %v2564 = vunpack.c.l.b16 %v2284
    %v2565 = vunpack.c.l.b16 %v2285
    %v2566 = vunpack.c.l.b16 %v2286
    %v2567 = vpack.c.b16 %v2562, %v2561
    %v2568 = vpack.c.b16 %v2564, %v2563
    %v2569 = vpack.c.b16 %v2566, %v2565
    %v2574 = vsel %vm45, %v2266, 0
    %v2577 = vsel %vm45, %v2267, 0
    %v2580 = vsel %vm45, %v2268, 0
    %v2583 = vsel %vm45, %v2269, 0
    %v2586 = vsel %vm45, %v2270, 0
    %v2589 = vsel %vm45, %v2271, 0
    %v2592 = vsel %vm45, %v2272, 0
    %v2595 = vsel %vm45, %v2273, 0
    %v2598 = vsel %vm45, %v2274, 0
    %v2601 = vsel %vm45, %v2275, 0
    %v2604 = vsel %vm45, %v2276, 0
    %v2607 = vsel %vm45, %v2277, 0
    %v2610 = vsel %vm45, %v2278, 0
    %v2613 = vsel %vm45, %v2279, 0
    %v2616 = vsel %vm45, %v2280, 0
    %2618 = vmatprep.subr.bf16.mxu0 0
    %2619 = vmatpush1.bf16.msra.mxu0 %v2567
    %2620 = vmatprep.subr.bf16.mxu0 0
    %2621 = vmatpush1.bf16.msra.mxu0 %v2568
    %2622 = vmatprep.subr.bf16.mxu0 0
    %2623 = vmatpush1.bf16.msra.mxu0 %v2569
    %2624 = vmatprep.subr.bf16.mxu0 0
    %2625 = vmatpush1.bf16.msra.mxu0 0
    %2626 = vmatprep.subr.bf16.mxu0 0
    %2627 = vmatpush1.bf16.msra.mxu0 0
    %2628 = vmatprep.subr.bf16.mxu0 0
    %2629 = vmatpush1.bf16.msra.mxu0 0
    %2630 = vmatprep.subr.bf16.mxu0 0
    %2631 = vmatpush1.bf16.msra.mxu0 0
    %2632 = vmatprep.subr.bf16.mxu0 0
    %2633 = vmatpush1.bf16.msra.mxu0 0
    %2634 = vmatprep.subr.bf16.mxu0 0
    %2635 = vmatpush1.bf16.msra.mxu0 0
    %2636 = vmatprep.subr.bf16.mxu0 0
    %2637 = vmatpush1.bf16.msra.mxu0 0
    %2638 = vmatprep.subr.bf16.mxu0 0
    %2639 = vmatpush1.bf16.msra.mxu0 0
    %2640 = vmatprep.subr.bf16.mxu0 0
    %2641 = vmatpush1.bf16.msra.mxu0 0
    %2642 = vmatprep.subr.bf16.mxu0 0
    %2643 = vmatpush1.bf16.msra.mxu0 0
    %2644 = vmatprep.subr.bf16.mxu0 0
    %2645 = vmatpush1.bf16.msra.mxu0 0
    %2646 = vmatprep.subr.bf16.mxu0 0
    %2647 = vmatpush1.bf16.msra.mxu0 0
    %2648 = vmatprep.subr.bf16.mxu0 0
    %2649 = vmatpush1.bf16.msra.mxu0 0
    %2650 = vmatprep.mubr.bf16.mxu0 0
    %2651 = vmatmul.mubr.bf16.gmra.mrb[0].mxu0 %v2574
    %v2652 = vpop.f32.mrb[0].mxu0
    %v2653 = vadd.f32 %v2437, %v2652
    %v2654 = vpop.f32.mrb[0].mxu0
    %v2655 = vpop.f32.mrb[0].mxu0
    %v2656 = vadd.f32 %v2440, %v2655
    %v2657 = vpop.f32.mrb[0].mxu0
    %2658 = vmatprep.mubr.bf16.mxu0 0
    %2659 = vmatmul.mubr.bf16.gmra.mrb[0].mxu0 %v2577
    %v2660 = vpop.f32.mrb[0].mxu0
    %v2661 = vadd.f32 %v2445, %v2660
    %v2662 = vpop.f32.mrb[0].mxu0
    %v2663 = vpop.f32.mrb[0].mxu0
    %v2664 = vadd.f32 %v2448, %v2663
    %v2665 = vpop.f32.mrb[0].mxu0
    %2666 = vmatprep.mubr.bf16.mxu0 0
    %2667 = vmatmul.mubr.bf16.gmra.mrb[0].mxu0 %v2580
    %v2668 = vpop.f32.mrb[0].mxu0
    %v2669 = vadd.f32 %v2453, %v2668
    %v2670 = vpop.f32.mrb[0].mxu0
    %v2671 = vpop.f32.mrb[0].mxu0
    %v2672 = vadd.f32 %v2456, %v2671
    %v2673 = vpop.f32.mrb[0].mxu0
    %2674 = vmatprep.mubr.bf16.mxu0 0
    %2675 = vmatmul.mubr.bf16.gmra.mrb[0].mxu0 %v2583
    %v2676 = vpop.f32.mrb[0].mxu0
    %v2677 = vadd.f32 %v2461, %v2676
    %v2678 = vpop.f32.mrb[0].mxu0
    %v2679 = vpop.f32.mrb[0].mxu0
    %v2680 = vadd.f32 %v2464, %v2679
    %v2681 = vpop.f32.mrb[0].mxu0
    %2682 = vmatprep.mubr.bf16.mxu0 0
    %2683 = vmatmul.mubr.bf16.gmra.mrb[0].mxu0 %v2586
    %v2684 = vpop.f32.mrb[0].mxu0
    %v2685 = vadd.f32 %v2469, %v2684
    %v2686 = vpop.f32.mrb[0].mxu0
    %v2687 = vpop.f32.mrb[0].mxu0
    %v2688 = vadd.f32 %v2472, %v2687
    %v2689 = vpop.f32.mrb[0].mxu0
    %2690 = vmatprep.mubr.bf16.mxu0 0
    %2691 = vmatmul.mubr.bf16.gmra.mrb[0].mxu0 %v2589
    %v2692 = vpop.f32.mrb[0].mxu0
    %v2693 = vadd.f32 %v2477, %v2692
    %v2694 = vpop.f32.mrb[0].mxu0
    %v2695 = vpop.f32.mrb[0].mxu0
    %v2696 = vadd.f32 %v2480, %v2695
    %v2697 = vpop.f32.mrb[0].mxu0
    %2698 = vmatprep.mubr.bf16.mxu0 0
    %2699 = vmatmul.mubr.bf16.gmra.mrb[0].mxu0 %v2592
    %v2700 = vpop.f32.mrb[0].mxu0
    %v2701 = vadd.f32 %v2485, %v2700
    %v2702 = vpop.f32.mrb[0].mxu0
    %v2703 = vpop.f32.mrb[0].mxu0
    %v2704 = vadd.f32 %v2488, %v2703
    %v2705 = vpop.f32.mrb[0].mxu0
    %2706 = vmatprep.mubr.bf16.mxu0 0
    %2707 = vmatmul.mubr.bf16.gmra.mrb[0].mxu0 %v2595
    %v2708 = vpop.f32.mrb[0].mxu0
    %v2709 = vadd.f32 %v2493, %v2708
    %v2710 = vpop.f32.mrb[0].mxu0
    %v2711 = vpop.f32.mrb[0].mxu0
    %v2712 = vadd.f32 %v2496, %v2711
    %v2713 = vpop.f32.mrb[0].mxu0
    %2714 = vmatprep.mubr.bf16.mxu0 0
    %2715 = vmatmul.mubr.bf16.gmra.mrb[0].mxu0 %v2598
    %v2716 = vpop.f32.mrb[0].mxu0
    %v2717 = vadd.f32 %v2501, %v2716
    %v2718 = vpop.f32.mrb[0].mxu0
    %v2719 = vpop.f32.mrb[0].mxu0
    %v2720 = vadd.f32 %v2504, %v2719
    %v2721 = vpop.f32.mrb[0].mxu0
    %2722 = vmatprep.mubr.bf16.mxu0 0
    %2723 = vmatmul.mubr.bf16.gmra.mrb[0].mxu0 %v2601
    %v2724 = vpop.f32.mrb[0].mxu0
    %v2725 = vadd.f32 %v2509, %v2724
    %v2726 = vpop.f32.mrb[0].mxu0
    %v2727 = vpop.f32.mrb[0].mxu0
    %v2728 = vadd.f32 %v2512, %v2727
    %v2729 = vpop.f32.mrb[0].mxu0
    %2730 = vmatprep.mubr.bf16.mxu0 0
    %2731 = vmatmul.mubr.bf16.gmra.mrb[0].mxu0 %v2604
    %v2732 = vpop.f32.mrb[0].mxu0
    %v2733 = vadd.f32 %v2517, %v2732
    %v2734 = vpop.f32.mrb[0].mxu0
    %v2735 = vpop.f32.mrb[0].mxu0
    %v2736 = vadd.f32 %v2520, %v2735
    %v2737 = vpop.f32.mrb[0].mxu0
    %2738 = vmatprep.mubr.bf16.mxu0 0
    %2739 = vmatmul.mubr.bf16.gmra.mrb[0].mxu0 %v2607
    %v2740 = vpop.f32.mrb[0].mxu0
    %v2741 = vadd.f32 %v2525, %v2740
    %v2742 = vpop.f32.mrb[0].mxu0
    %v2743 = vpop.f32.mrb[0].mxu0
    %v2744 = vadd.f32 %v2528, %v2743
    %v2745 = vpop.f32.mrb[0].mxu0
    %2746 = vmatprep.mubr.bf16.mxu0 0
    %2747 = vmatmul.mubr.bf16.gmra.mrb[0].mxu0 %v2610
    %v2748 = vpop.f32.mrb[0].mxu0
    %v2749 = vadd.f32 %v2533, %v2748
    %v2750 = vpop.f32.mrb[0].mxu0
    %v2751 = vpop.f32.mrb[0].mxu0
    %v2752 = vadd.f32 %v2536, %v2751
    %v2753 = vpop.f32.mrb[0].mxu0
    %2754 = vmatprep.mubr.bf16.mxu0 0
    %2755 = vmatmul.mubr.bf16.gmra.mrb[0].mxu0 %v2613
    %v2756 = vpop.f32.mrb[0].mxu0
    %v2757 = vadd.f32 %v2541, %v2756
    %v2758 = vpop.f32.mrb[0].mxu0
    %v2759 = vpop.f32.mrb[0].mxu0
    %v2760 = vadd.f32 %v2544, %v2759
    %v2761 = vpop.f32.mrb[0].mxu0
    %2762 = vmatprep.mubr.bf16.mxu0 0
    %2763 = vmatmul.mubr.bf16.gmra.mrb[0].mxu0 %v2616
    %v2764 = vpop.f32.mrb[0].mxu0
    %v2765 = vadd.f32 %v2549, %v2764
    %v2766 = vpop.f32.mrb[0].mxu0
    %v2767 = vpop.f32.mrb[0].mxu0
    %v2768 = vadd.f32 %v2552, %v2767
    %v2769 = vpop.f32.mrb[0].mxu0
    %2770 = vdwg.mxu0
    %v2771 = vld [vmem:[#allocation2 + $0x4] sm:$0xff]
    %v2772 = vld [vmem:[#allocation2 + $0xc] sm:$0xff]
    %v2773 = vld [vmem:[#allocation2 + $0x14] sm:$0xff]
    %v2774 = vld [vmem:[#allocation2 + $0x1c] sm:$0xff]
    %v2775 = vld [vmem:[#allocation2 + $0x24] sm:$0xff]
    %v2776 = vld [vmem:[#allocation2 + $0x2c] sm:$0xff]
    %v2777 = vld [vmem:[#allocation2 + $0x34] sm:$0xff]
    %v2778 = vld [vmem:[#allocation2 + $0x3c] sm:$0xff]
    %v2779 = vld [vmem:[#allocation2 + $0x44] sm:$0xff]
    %v2780 = vld [vmem:[#allocation2 + $0x4c] sm:$0xff]
    %v2781 = vld [vmem:[#allocation2 + $0x54] sm:$0xff]
    %v2782 = vld [vmem:[#allocation2 + $0x5c] sm:$0xff]
    %v2783 = vld [vmem:[#allocation2 + $0x64] sm:$0xff]
    %v2784 = vld [vmem:[#allocation2 + $0x6c] sm:$0xff]
    %v2785 = vld [vmem:[#allocation2 + $0x74] sm:$0xff]
    %v2786 = vld [vmem:[#allocation2 + $0x7c] sm:$0xff]
    %v2787 = vld [vmem:[#allocation2 + $0x84] sm:$0xff]
    %v2788 = vld [vmem:[#allocation2 + $0x8c] sm:$0xff]
    %v2789 = vld [vmem:[#allocation2 + $0x94] sm:$0xff]
    %v2790 = vld [vmem:[#allocation2 + $0x9c] sm:$0xff]
    %v2791 = vld [vmem:[#allocation2 + $0xa4] sm:$0xff]
    %v2792 = vld [vmem:[#allocation2 + $0xac] sm:$0xff]
    %v2793 = vld [vmem:[#allocation2 + $0xb4] sm:$0xff]
    %v2794 = vld [vmem:[#allocation2 + $0xbc] sm:$0xff]
    %v2795 = vld [vmem:[#allocation2 + $0xc4] sm:$0xff]
    %v2796 = vld [vmem:[#allocation2 + $0xcc] sm:$0xff]
    %v2797 = vld [vmem:[#allocation2 + $0xd4] sm:$0xff]
    %v2798 = vld [vmem:[#allocation2 + $0xdc] sm:$0xff]
    %v2799 = vld [vmem:[#allocation2 + $0xe4] sm:$0xff]
    %v2800 = vld [vmem:[#allocation2 + $0xec] sm:$0xff]
    %v2801 = vpack.c.bf16 %v2772, %v2771
    %v2802 = vpack.c.bf16 %v2774, %v2773
    %v2803 = vpack.c.bf16 %v2776, %v2775
    %v2804 = vpack.c.bf16 %v2778, %v2777
    %v2805 = vpack.c.bf16 %v2780, %v2779
    %v2806 = vpack.c.bf16 %v2782, %v2781
    %v2807 = vpack.c.bf16 %v2784, %v2783
    %v2808 = vpack.c.bf16 %v2786, %v2785
    %v2809 = vpack.c.bf16 %v2788, %v2787
    %v2810 = vpack.c.bf16 %v2790, %v2789
    %v2811 = vpack.c.bf16 %v2792, %v2791
    %v2812 = vpack.c.bf16 %v2794, %v2793
    %v2813 = vpack.c.bf16 %v2796, %v2795
    %v2814 = vpack.c.bf16 %v2798, %v2797
    %v2815 = vpack.c.bf16 %v2800, %v2799
    %s2816 = scalar_lea.vmem %s5, 48
    %v2817 = vld [vmem:[%s2816] sm:$0xf]
    %v2818 = vld [vmem:[%s2816 + $0x4] sm:$0xf]
    %v2819 = vld [vmem:[%s2816 + $0x8] sm:$0xf]
    %v2820 = vld [vmem:[%s2816 + $0xc] sm:$0xf]
    %v2821 = vld [vmem:[%s2816 + $0x10] sm:$0xf]
    %v2822 = vld [vmem:[%s2816 + $0x14] sm:$0xf]
    %v2829 = vunpack.c.l.b16 %v2817
    %v2830 = vunpack.c.l.b16 %v2818
    %v2831 = vunpack.c.l.b16 %v2819
    %v2832 = vunpack.c.l.b16 %v2820
    %v2833 = vunpack.c.l.b16 %v2821
    %v2834 = vunpack.c.l.b16 %v2822
    %v2835 = vpack.c.b16 %v2830, %v2829
    %v2836 = vpack.c.b16 %v2832, %v2831
    %v2837 = vpack.c.b16 %v2834, %v2833
    %v2842 = vsel %vm45, %v2801, 0
    %v2845 = vsel %vm45, %v2802, 0
    %v2848 = vsel %vm45, %v2803, 0
    %v2851 = vsel %vm45, %v2804, 0
    %v2854 = vsel %vm45, %v2805, 0
    %v2857 = vsel %vm45, %v2806, 0
    %v2860 = vsel %vm45, %v2807, 0
    %v2863 = vsel %vm45, %v2808, 0
    %v2866 = vsel %vm45, %v2809, 0
    %v2869 = vsel %vm45, %v2810, 0
    %v2872 = vsel %vm45, %v2811, 0
    %v2875 = vsel %vm45, %v2812, 0
    %v2878 = vsel %vm45, %v2813, 0
    %v2881 = vsel %vm45, %v2814, 0
    %v2884 = vsel %vm45, %v2815, 0
    %2886 = vmatprep.subr.bf16.mxu0 0
    %2887 = vmatpush1.bf16.msra.mxu0 %v2835
    %2888 = vmatprep.subr.bf16.mxu0 0
    %2889 = vmatpush1.bf16.msra.mxu0 %v2836
    %2890 = vmatprep.subr.bf16.mxu0 0
    %2891 = vmatpush1.bf16.msra.mxu0 %v2837
    %2892 = vmatprep.subr.bf16.mxu0 0
    %2893 = vmatpush1.bf16.msra.mxu0 0
    %2894 = vmatprep.subr.bf16.mxu0 0
    %2895 = vmatpush1.bf16.msra.mxu0 0
    %2896 = vmatprep.subr.bf16.mxu0 0
    %2897 = vmatpush1.bf16.msra.mxu0 0
    %2898 = vmatprep.subr.bf16.mxu0 0
    %2899 = vmatpush1.bf16.msra.mxu0 0
    %2900 = vmatprep.subr.bf16.mxu0 0
    %2901 = vmatpush1.bf16.msra.mxu0 0
    %2902 = vmatprep.subr.bf16.mxu0 0
    %2903 = vmatpush1.bf16.msra.mxu0 0
    %2904 = vmatprep.subr.bf16.mxu0 0
    %2905 = vmatpush1.bf16.msra.mxu0 0
    %2906 = vmatprep.subr.bf16.mxu0 0
    %2907 = vmatpush1.bf16.msra.mxu0 0
    %2908 = vmatprep.subr.bf16.mxu0 0
    %2909 = vmatpush1.bf16.msra.mxu0 0
    %2910 = vmatprep.subr.bf16.mxu0 0
    %2911 = vmatpush1.bf16.msra.mxu0 0
    %2912 = vmatprep.subr.bf16.mxu0 0
    %2913 = vmatpush1.bf16.msra.mxu0 0
    %2914 = vmatprep.subr.bf16.mxu0 0
    %2915 = vmatpush1.bf16.msra.mxu0 0
    %2916 = vmatprep.subr.bf16.mxu0 0
    %2917 = vmatpush1.bf16.msra.mxu0 0
    %2918 = vmatprep.mubr.bf16.mxu0 0
    %2919 = vmatmul.mubr.bf16.gmra.mrb[0].mxu0 %v2842
    %v2920 = vpop.f32.mrb[0].mxu0
    %v2921 = vadd.f32 0.0, %v2920
    %v2922 = vpop.f32.mrb[0].mxu0
    %v2923 = vpop.f32.mrb[0].mxu0
    %v2924 = vadd.f32 0.0, %v2923
    %v2925 = vpop.f32.mrb[0].mxu0
    %2926 = vmatprep.mubr.bf16.mxu0 0
    %2927 = vmatmul.mubr.bf16.gmra.mrb[0].mxu0 %v2845
    %v2928 = vpop.f32.mrb[0].mxu0
    %v2929 = vadd.f32 0.0, %v2928
    %v2930 = vpop.f32.mrb[0].mxu0
    %v2931 = vpop.f32.mrb[0].mxu0
    %v2932 = vadd.f32 0.0, %v2931
    %v2933 = vpop.f32.mrb[0].mxu0
    %2934 = vmatprep.mubr.bf16.mxu0 0
    %2935 = vmatmul.mubr.bf16.gmra.mrb[0].mxu0 %v2848
    %v2936 = vpop.f32.mrb[0].mxu0
    %v2937 = vadd.f32 0.0, %v2936
    %v2938 = vpop.f32.mrb[0].mxu0
    %v2939 = vpop.f32.mrb[0].mxu0
    %v2940 = vadd.f32 0.0, %v2939
    %v2941 = vpop.f32.mrb[0].mxu0
    %2942 = vmatprep.mubr.bf16.mxu0 0
    %2943 = vmatmul.mubr.bf16.gmra.mrb[0].mxu0 %v2851
    %v2944 = vpop.f32.mrb[0].mxu0
    %v2945 = vadd.f32 0.0, %v2944
    %v2946 = vpop.f32.mrb[0].mxu0
    %v2947 = vpop.f32.mrb[0].mxu0
    %v2948 = vadd.f32 0.0, %v2947
    %v2949 = vpop.f32.mrb[0].mxu0
    %2950 = vmatprep.mubr.bf16.mxu0 0
    %2951 = vmatmul.mubr.bf16.gmra.mrb[0].mxu0 %v2854
    %v2952 = vpop.f32.mrb[0].mxu0
    %v2953 = vadd.f32 0.0, %v2952
    %v2954 = vpop.f32.mrb[0].mxu0
    %v2955 = vpop.f32.mrb[0].mxu0
    %v2956 = vadd.f32 0.0, %v2955
    %v2957 = vpop.f32.mrb[0].mxu0
    %2958 = vmatprep.mubr.bf16.mxu0 0
    %2959 = vmatmul.mubr.bf16.gmra.mrb[0].mxu0 %v2857
    %v2960 = vpop.f32.mrb[0].mxu0
    %v2961 = vadd.f32 0.0, %v2960
    %v2962 = vpop.f32.mrb[0].mxu0
    %v2963 = vpop.f32.mrb[0].mxu0
    %v2964 = vadd.f32 0.0, %v2963
    %v2965 = vpop.f32.mrb[0].mxu0
    %2966 = vmatprep.mubr.bf16.mxu0 0
    %2967 = vmatmul.mubr.bf16.gmra.mrb[0].mxu0 %v2860
    %v2968 = vpop.f32.mrb[0].mxu0
    %v2969 = vadd.f32 0.0, %v2968
    %v2970 = vpop.f32.mrb[0].mxu0
    %v2971 = vpop.f32.mrb[0].mxu0
    %v2972 = vadd.f32 0.0, %v2971
    %v2973 = vpop.f32.mrb[0].mxu0
    %2974 = vmatprep.mubr.bf16.mxu0 0
    %2975 = vmatmul.mubr.bf16.gmra.mrb[0].mxu0 %v2863
    %v2976 = vpop.f32.mrb[0].mxu0
    %v2977 = vadd.f32 0.0, %v2976
    %v2978 = vpop.f32.mrb[0].mxu0
    %v2979 = vpop.f32.mrb[0].mxu0
    %v2980 = vadd.f32 0.0, %v2979
    %v2981 = vpop.f32.mrb[0].mxu0
    %2982 = vmatprep.mubr.bf16.mxu0 0
    %2983 = vmatmul.mubr.bf16.gmra.mrb[0].mxu0 %v2866
    %v2984 = vpop.f32.mrb[0].mxu0
    %v2985 = vadd.f32 0.0, %v2984
    %v2986 = vpop.f32.mrb[0].mxu0
    %v2987 = vpop.f32.mrb[0].mxu0
    %v2988 = vadd.f32 0.0, %v2987
    %v2989 = vpop.f32.mrb[0].mxu0
    %2990 = vmatprep.mubr.bf16.mxu0 0
    %2991 = vmatmul.mubr.bf16.gmra.mrb[0].mxu0 %v2869
    %v2992 = vpop.f32.mrb[0].mxu0
    %v2993 = vadd.f32 0.0, %v2992
    %v2994 = vpop.f32.mrb[0].mxu0
    %v2995 = vpop.f32.mrb[0].mxu0
    %v2996 = vadd.f32 0.0, %v2995
    %v2997 = vpop.f32.mrb[0].mxu0
    %2998 = vmatprep.mubr.bf16.mxu0 0
    %2999 = vmatmul.mubr.bf16.gmra.mrb[0].mxu0 %v2872
    %v3000 = vpop.f32.mrb[0].mxu0
    %v3001 = vadd.f32 0.0, %v3000
    %v3002 = vpop.f32.mrb[0].mxu0
    %v3003 = vpop.f32.mrb[0].mxu0
    %v3004 = vadd.f32 0.0, %v3003
    %v3005 = vpop.f32.mrb[0].mxu0
    %3006 = vmatprep.mubr.bf16.mxu0 0
    %3007 = vmatmul.mubr.bf16.gmra.mrb[0].mxu0 %v2875
    %v3008 = vpop.f32.mrb[0].mxu0
    %v3009 = vadd.f32 0.0, %v3008
    %v3010 = vpop.f32.mrb[0].mxu0
    %v3011 = vpop.f32.mrb[0].mxu0
    %v3012 = vadd.f32 0.0, %v3011
    %v3013 = vpop.f32.mrb[0].mxu0
    %3014 = vmatprep.mubr.bf16.mxu0 0
    %3015 = vmatmul.mubr.bf16.gmra.mrb[0].mxu0 %v2878
    %v3016 = vpop.f32.mrb[0].mxu0
    %v3017 = vadd.f32 0.0, %v3016
    %v3018 = vpop.f32.mrb[0].mxu0
    %v3019 = vpop.f32.mrb[0].mxu0
    %v3020 = vadd.f32 0.0, %v3019
    %v3021 = vpop.f32.mrb[0].mxu0
    %3022 = vmatprep.mubr.bf16.mxu0 0
    %3023 = vmatmul.mubr.bf16.gmra.mrb[0].mxu0 %v2881
    %v3024 = vpop.f32.mrb[0].mxu0
    %v3025 = vadd.f32 0.0, %v3024
    %v3026 = vpop.f32.mrb[0].mxu0
    %v3027 = vpop.f32.mrb[0].mxu0
    %v3028 = vadd.f32 0.0, %v3027
    %v3029 = vpop.f32.mrb[0].mxu0
    %3030 = vmatprep.mubr.bf16.mxu0 0
    %3031 = vmatmul.mubr.bf16.gmra.mrb[0].mxu0 %v2884
    %v3032 = vpop.f32.mrb[0].mxu0
    %v3033 = vadd.f32 0.0, %v3032
    %v3034 = vpop.f32.mrb[0].mxu0
    %v3035 = vpop.f32.mrb[0].mxu0
    %v3036 = vadd.f32 0.0, %v3035
    %v3037 = vpop.f32.mrb[0].mxu0
    %3038 = vdwg.mxu0
    %v3039 = vadd.f32 %v2653, %v2921
    %v3040 = vadd.f32 %v2656, %v2924
    %v3041 = vadd.f32 %v2661, %v2929
    %v3042 = vadd.f32 %v2664, %v2932
    %v3043 = vadd.f32 %v2669, %v2937
    %v3044 = vadd.f32 %v2672, %v2940
    %v3045 = vadd.f32 %v2677, %v2945
    %v3046 = vadd.f32 %v2680, %v2948
    %v3047 = vadd.f32 %v2685, %v2953
    %v3048 = vadd.f32 %v2688, %v2956
    %v3049 = vadd.f32 %v2693, %v2961
    %v3050 = vadd.f32 %v2696, %v2964
    %v3051 = vadd.f32 %v2701, %v2969
    %v3052 = vadd.f32 %v2704, %v2972
    %v3053 = vadd.f32 %v2709, %v2977
    %v3054 = vadd.f32 %v2712, %v2980
    %v3055 = vadd.f32 %v2717, %v2985
    %v3056 = vadd.f32 %v2720, %v2988
    %v3057 = vadd.f32 %v2725, %v2993
    %v3058 = vadd.f32 %v2728, %v2996
    %v3059 = vadd.f32 %v2733, %v3001
    %v3060 = vadd.f32 %v2736, %v3004
    %v3061 = vadd.f32 %v2741, %v3009
    %v3062 = vadd.f32 %v2744, %v3012
    %v3063 = vadd.f32 %v2749, %v3017
    %v3064 = vadd.f32 %v2752, %v3020
    %v3065 = vadd.f32 %v2757, %v3025
    %v3066 = vadd.f32 %v2760, %v3028
    %v3067 = vadd.f32 %v2765, %v3033
    %v3068 = vadd.f32 %v2768, %v3036
    %3069 = vmatprep.subr.bf16.mxu0 0
    %3070 = vmatpush1.bf16.msra.mxu0 %v2351
    %3071 = vmatprep.subr.bf16.mxu0 0
    %3072 = vmatpush1.bf16.msra.mxu0 %v2352
    %3073 = vmatprep.subr.bf16.mxu0 0
    %3074 = vmatpush1.bf16.msra.mxu0 %v2353
    %3075 = vmatprep.subr.bf16.mxu0 0
    %3076 = vmatpush1.bf16.msra.mxu0 0
    %3077 = vmatprep.subr.bf16.mxu0 0
    %3078 = vmatpush1.bf16.msra.mxu0 0
    %3079 = vmatprep.subr.bf16.mxu0 0
    %3080 = vmatpush1.bf16.msra.mxu0 0
    %3081 = vmatprep.subr.bf16.mxu0 0
    %3082 = vmatpush1.bf16.msra.mxu0 0
    %3083 = vmatprep.subr.bf16.mxu0 0
    %3084 = vmatpush1.bf16.msra.mxu0 0
    %3085 = vmatprep.subr.bf16.mxu0 0
    %3086 = vmatpush1.bf16.msra.mxu0 0
    %3087 = vmatprep.subr.bf16.mxu0 0
    %3088 = vmatpush1.bf16.msra.mxu0 0
    %3089 = vmatprep.subr.bf16.mxu0 0
    %3090 = vmatpush1.bf16.msra.mxu0 0
    %3091 = vmatprep.subr.bf16.mxu0 0
    %3092 = vmatpush1.bf16.msra.mxu0 0
    %3093 = vmatprep.subr.bf16.mxu0 0
    %3094 = vmatpush1.bf16.msra.mxu0 0
    %3095 = vmatprep.subr.bf16.mxu0 0
    %3096 = vmatpush1.bf16.msra.mxu0 0
    %3097 = vmatprep.subr.bf16.mxu0 0
    %3098 = vmatpush1.bf16.msra.mxu0 0
    %3099 = vmatprep.subr.bf16.mxu0 0
    %3100 = vmatpush1.bf16.msra.mxu0 0
    %3101 = vmatprep.mubr.bf16.mxu0 0
    %3102 = vmatmul.mubr.bf16.gmra.mrb[0].mxu0 %v2842
    %v3103 = vpop.f32.mrb[0].mxu0
    %v3104 = vadd.f32 0.0, %v3103
    %v3105 = vpop.f32.mrb[0].mxu0
    %v3106 = vpop.f32.mrb[0].mxu0
    %v3107 = vadd.f32 0.0, %v3106
    %v3108 = vpop.f32.mrb[0].mxu0
    %3109 = vmatprep.mubr.bf16.mxu0 0
    %3110 = vmatmul.mubr.bf16.gmra.mrb[0].mxu0 %v2845
    %v3111 = vpop.f32.mrb[0].mxu0
    %v3112 = vadd.f32 0.0, %v3111
    %v3113 = vpop.f32.mrb[0].mxu0
    %v3114 = vpop.f32.mrb[0].mxu0
    %v3115 = vadd.f32 0.0, %v3114
    %v3116 = vpop.f32.mrb[0].mxu0
    %3117 = vmatprep.mubr.bf16.mxu0 0
    %3118 = vmatmul.mubr.bf16.gmra.mrb[0].mxu0 %v2848
    %v3119 = vpop.f32.mrb[0].mxu0
    %v3120 = vadd.f32 0.0, %v3119
    %v3121 = vpop.f32.mrb[0].mxu0
    %v3122 = vpop.f32.mrb[0].mxu0
    %v3123 = vadd.f32 0.0, %v3122
    %v3124 = vpop.f32.mrb[0].mxu0
    %3125 = vmatprep.mubr.bf16.mxu0 0
    %3126 = vmatmul.mubr.bf16.gmra.mrb[0].mxu0 %v2851
    %v3127 = vpop.f32.mrb[0].mxu0
    %v3128 = vadd.f32 0.0, %v3127
    %v3129 = vpop.f32.mrb[0].mxu0
    %v3130 = vpop.f32.mrb[0].mxu0
    %v3131 = vadd.f32 0.0, %v3130
    %v3132 = vpop.f32.mrb[0].mxu0
    %3133 = vmatprep.mubr.bf16.mxu0 0
    %3134 = vmatmul.mubr.bf16.gmra.mrb[0].mxu0 %v2854
    %v3135 = vpop.f32.mrb[0].mxu0
    %v3136 = vadd.f32 0.0, %v3135
    %v3137 = vpop.f32.mrb[0].mxu0
    %v3138 = vpop.f32.mrb[0].mxu0
    %v3139 = vadd.f32 0.0, %v3138
    %v3140 = vpop.f32.mrb[0].mxu0
    %3141 = vmatprep.mubr.bf16.mxu0 0
    %3142 = vmatmul.mubr.bf16.gmra.mrb[0].mxu0 %v2857
    %v3143 = vpop.f32.mrb[0].mxu0
    %v3144 = vadd.f32 0.0, %v3143
    %v3145 = vpop.f32.mrb[0].mxu0
    %v3146 = vpop.f32.mrb[0].mxu0
    %v3147 = vadd.f32 0.0, %v3146
    %v3148 = vpop.f32.mrb[0].mxu0
    %3149 = vmatprep.mubr.bf16.mxu0 0
    %3150 = vmatmul.mubr.bf16.gmra.mrb[0].mxu0 %v2860
    %v3151 = vpop.f32.mrb[0].mxu0
    %v3152 = vadd.f32 0.0, %v3151
    %v3153 = vpop.f32.mrb[0].mxu0
    %v3154 = vpop.f32.mrb[0].mxu0
    %v3155 = vadd.f32 0.0, %v3154
    %v3156 = vpop.f32.mrb[0].mxu0
    %3157 = vmatprep.mubr.bf16.mxu0 0
    %3158 = vmatmul.mubr.bf16.gmra.mrb[0].mxu0 %v2863
    %v3159 = vpop.f32.mrb[0].mxu0
    %v3160 = vadd.f32 0.0, %v3159
    %v3161 = vpop.f32.mrb[0].mxu0
    %v3162 = vpop.f32.mrb[0].mxu0
    %v3163 = vadd.f32 0.0, %v3162
    %v3164 = vpop.f32.mrb[0].mxu0
    %3165 = vmatprep.mubr.bf16.mxu0 0
    %3166 = vmatmul.mubr.bf16.gmra.mrb[0].mxu0 %v2866
    %v3167 = vpop.f32.mrb[0].mxu0
    %v3168 = vadd.f32 0.0, %v3167
    %v3169 = vpop.f32.mrb[0].mxu0
    %v3170 = vpop.f32.mrb[0].mxu0
    %v3171 = vadd.f32 0.0, %v3170
    %v3172 = vpop.f32.mrb[0].mxu0
    %3173 = vmatprep.mubr.bf16.mxu0 0
    %3174 = vmatmul.mubr.bf16.gmra.mrb[0].mxu0 %v2869
    %v3175 = vpop.f32.mrb[0].mxu0
    %v3176 = vadd.f32 0.0, %v3175
    %v3177 = vpop.f32.mrb[0].mxu0
    %v3178 = vpop.f32.mrb[0].mxu0
    %v3179 = vadd.f32 0.0, %v3178
    %v3180 = vpop.f32.mrb[0].mxu0
    %3181 = vmatprep.mubr.bf16.mxu0 0
    %3182 = vmatmul.mubr.bf16.gmra.mrb[0].mxu0 %v2872
    %v3183 = vpop.f32.mrb[0].mxu0
    %v3184 = vadd.f32 0.0, %v3183
    %v3185 = vpop.f32.mrb[0].mxu0
    %v3186 = vpop.f32.mrb[0].mxu0
    %v3187 = vadd.f32 0.0, %v3186
    %v3188 = vpop.f32.mrb[0].mxu0
    %3189 = vmatprep.mubr.bf16.mxu0 0
    %3190 = vmatmul.mubr.bf16.gmra.mrb[0].mxu0 %v2875
    %v3191 = vpop.f32.mrb[0].mxu0
    %v3192 = vadd.f32 0.0, %v3191
    %v3193 = vpop.f32.mrb[0].mxu0
    %v3194 = vpop.f32.mrb[0].mxu0
    %v3195 = vadd.f32 0.0, %v3194
    %v3196 = vpop.f32.mrb[0].mxu0
    %3197 = vmatprep.mubr.bf16.mxu0 0
    %3198 = vmatmul.mubr.bf16.gmra.mrb[0].mxu0 %v2878
    %v3199 = vpop.f32.mrb[0].mxu0
    %v3200 = vadd.f32 0.0, %v3199
    %v3201 = vpop.f32.mrb[0].mxu0
    %v3202 = vpop.f32.mrb[0].mxu0
    %v3203 = vadd.f32 0.0, %v3202
    %v3204 = vpop.f32.mrb[0].mxu0
    %3205 = vmatprep.mubr.bf16.mxu0 0
    %3206 = vmatmul.mubr.bf16.gmra.mrb[0].mxu0 %v2881
    %v3207 = vpop.f32.mrb[0].mxu0
    %v3208 = vadd.f32 0.0, %v3207
    %v3209 = vpop.f32.mrb[0].mxu0
    %v3210 = vpop.f32.mrb[0].mxu0
    %v3211 = vadd.f32 0.0, %v3210
    %v3212 = vpop.f32.mrb[0].mxu0
    %3213 = vmatprep.mubr.bf16.mxu0 0
    %3214 = vmatmul.mubr.bf16.gmra.mrb[0].mxu0 %v2884
    %v3215 = vpop.f32.mrb[0].mxu0
    %v3216 = vadd.f32 0.0, %v3215
    %v3217 = vpop.f32.mrb[0].mxu0
    %v3218 = vpop.f32.mrb[0].mxu0
    %v3219 = vadd.f32 0.0, %v3218
    %v3220 = vpop.f32.mrb[0].mxu0
    %3221 = vdwg.mxu0
    %3222 = vmatprep.subr.bf16.mxu0 0
    %3223 = vmatpush1.bf16.msra.mxu0 %v2567
    %3224 = vmatprep.subr.bf16.mxu0 0
    %3225 = vmatpush1.bf16.msra.mxu0 %v2568
    %3226 = vmatprep.subr.bf16.mxu0 0
    %3227 = vmatpush1.bf16.msra.mxu0 %v2569
    %3228 = vmatprep.subr.bf16.mxu0 0
    %3229 = vmatpush1.bf16.msra.mxu0 0
    %3230 = vmatprep.subr.bf16.mxu0 0
    %3231 = vmatpush1.bf16.msra.mxu0 0
    %3232 = vmatprep.subr.bf16.mxu0 0
    %3233 = vmatpush1.bf16.msra.mxu0 0
    %3234 = vmatprep.subr.bf16.mxu0 0
    %3235 = vmatpush1.bf16.msra.mxu0 0
    %3236 = vmatprep.subr.bf16.mxu0 0
    %3237 = vmatpush1.bf16.msra.mxu0 0
    %3238 = vmatprep.subr.bf16.mxu0 0
    %3239 = vmatpush1.bf16.msra.mxu0 0
    %3240 = vmatprep.subr.bf16.mxu0 0
    %3241 = vmatpush1.bf16.msra.mxu0 0
    %3242 = vmatprep.subr.bf16.mxu0 0
    %3243 = vmatpush1.bf16.msra.mxu0 0
    %3244 = vmatprep.subr.bf16.mxu0 0
    %3245 = vmatpush1.bf16.msra.mxu0 0
    %3246 = vmatprep.subr.bf16.mxu0 0
    %3247 = vmatpush1.bf16.msra.mxu0 0
    %3248 = vmatprep.subr.bf16.mxu0 0
    %3249 = vmatpush1.bf16.msra.mxu0 0
    %3250 = vmatprep.subr.bf16.mxu0 0
    %3251 = vmatpush1.bf16.msra.mxu0 0
    %3252 = vmatprep.subr.bf16.mxu0 0
    %3253 = vmatpush1.bf16.msra.mxu0 0
    %3254 = vmatprep.mubr.bf16.mxu0 0
    %3255 = vmatmul.mubr.bf16.gmra.mrb[0].mxu0 %v2358
    %v3256 = vpop.f32.mrb[0].mxu0
    %v3257 = vadd.f32 %v3104, %v3256
    %v3258 = vpop.f32.mrb[0].mxu0
    %v3259 = vpop.f32.mrb[0].mxu0
    %v3260 = vadd.f32 %v3107, %v3259
    %v3261 = vpop.f32.mrb[0].mxu0
    %3262 = vmatprep.mubr.bf16.mxu0 0
    %3263 = vmatmul.mubr.bf16.gmra.mrb[0].mxu0 %v2361
    %v3264 = vpop.f32.mrb[0].mxu0
    %v3265 = vadd.f32 %v3112, %v3264
    %v3266 = vpop.f32.mrb[0].mxu0
    %v3267 = vpop.f32.mrb[0].mxu0
    %v3268 = vadd.f32 %v3115, %v3267
    %v3269 = vpop.f32.mrb[0].mxu0
    %3270 = vmatprep.mubr.bf16.mxu0 0
    %3271 = vmatmul.mubr.bf16.gmra.mrb[0].mxu0 %v2364
    %v3272 = vpop.f32.mrb[0].mxu0
    %v3273 = vadd.f32 %v3120, %v3272
    %v3274 = vpop.f32.mrb[0].mxu0
    %v3275 = vpop.f32.mrb[0].mxu0
    %v3276 = vadd.f32 %v3123, %v3275
    %v3277 = vpop.f32.mrb[0].mxu0
    %3278 = vmatprep.mubr.bf16.mxu0 0
    %3279 = vmatmul.mubr.bf16.gmra.mrb[0].mxu0 %v2367
    %v3280 = vpop.f32.mrb[0].mxu0
    %v3281 = vadd.f32 %v3128, %v3280
    %v3282 = vpop.f32.mrb[0].mxu0
    %v3283 = vpop.f32.mrb[0].mxu0
    %v3284 = vadd.f32 %v3131, %v3283
    %v3285 = vpop.f32.mrb[0].mxu0
    %3286 = vmatprep.mubr.bf16.mxu0 0
    %3287 = vmatmul.mubr.bf16.gmra.mrb[0].mxu0 %v2370
    %v3288 = vpop.f32.mrb[0].mxu0
    %v3289 = vadd.f32 %v3136, %v3288
    %v3290 = vpop.f32.mrb[0].mxu0
    %v3291 = vpop.f32.mrb[0].mxu0
    %v3292 = vadd.f32 %v3139, %v3291
    %v3293 = vpop.f32.mrb[0].mxu0
    %3294 = vmatprep.mubr.bf16.mxu0 0
    %3295 = vmatmul.mubr.bf16.gmra.mrb[0].mxu0 %v2373
    %v3296 = vpop.f32.mrb[0].mxu0
    %v3297 = vadd.f32 %v3144, %v3296
    %v3298 = vpop.f32.mrb[0].mxu0
    %v3299 = vpop.f32.mrb[0].mxu0
    %v3300 = vadd.f32 %v3147, %v3299
    %v3301 = vpop.f32.mrb[0].mxu0
    %3302 = vmatprep.mubr.bf16.mxu0 0
    %3303 = vmatmul.mubr.bf16.gmra.mrb[0].mxu0 %v2376
    %v3304 = vpop.f32.mrb[0].mxu0
    %v3305 = vadd.f32 %v3152, %v3304
    %v3306 = vpop.f32.mrb[0].mxu0
    %v3307 = vpop.f32.mrb[0].mxu0
    %v3308 = vadd.f32 %v3155, %v3307
    %v3309 = vpop.f32.mrb[0].mxu0
    %3310 = vmatprep.mubr.bf16.mxu0 0
    %3311 = vmatmul.mubr.bf16.gmra.mrb[0].mxu0 %v2379
    %v3312 = vpop.f32.mrb[0].mxu0
    %v3313 = vadd.f32 %v3160, %v3312
    %v3314 = vpop.f32.mrb[0].mxu0
    %v3315 = vpop.f32.mrb[0].mxu0
    %v3316 = vadd.f32 %v3163, %v3315
    %v3317 = vpop.f32.mrb[0].mxu0
    %3318 = vmatprep.mubr.bf16.mxu0 0
    %3319 = vmatmul.mubr.bf16.gmra.mrb[0].mxu0 %v2382
    %v3320 = vpop.f32.mrb[0].mxu0
    %v3321 = vadd.f32 %v3168, %v3320
    %v3322 = vpop.f32.mrb[0].mxu0
    %v3323 = vpop.f32.mrb[0].mxu0
    %v3324 = vadd.f32 %v3171, %v3323
    %v3325 = vpop.f32.mrb[0].mxu0
    %3326 = vmatprep.mubr.bf16.mxu0 0
    %3327 = vmatmul.mubr.bf16.gmra.mrb[0].mxu0 %v2385
    %v3328 = vpop.f32.mrb[0].mxu0
    %v3329 = vadd.f32 %v3176, %v3328
    %v3330 = vpop.f32.mrb[0].mxu0
    %v3331 = vpop.f32.mrb[0].mxu0
    %v3332 = vadd.f32 %v3179, %v3331
    %v3333 = vpop.f32.mrb[0].mxu0
    %3334 = vmatprep.mubr.bf16.mxu0 0
    %3335 = vmatmul.mubr.bf16.gmra.mrb[0].mxu0 %v2388
    %v3336 = vpop.f32.mrb[0].mxu0
    %v3337 = vadd.f32 %v3184, %v3336
    %v3338 = vpop.f32.mrb[0].mxu0
    %v3339 = vpop.f32.mrb[0].mxu0
    %v3340 = vadd.f32 %v3187, %v3339
    %v3341 = vpop.f32.mrb[0].mxu0
    %3342 = vmatprep.mubr.bf16.mxu0 0
    %3343 = vmatmul.mubr.bf16.gmra.mrb[0].mxu0 %v2391
    %v3344 = vpop.f32.mrb[0].mxu0
    %v3345 = vadd.f32 %v3192, %v3344
    %v3346 = vpop.f32.mrb[0].mxu0
    %v3347 = vpop.f32.mrb[0].mxu0
    %v3348 = vadd.f32 %v3195, %v3347
    %v3349 = vpop.f32.mrb[0].mxu0
    %3350 = vmatprep.mubr.bf16.mxu0 0
    %3351 = vmatmul.mubr.bf16.gmra.mrb[0].mxu0 %v2394
    %v3352 = vpop.f32.mrb[0].mxu0
    %v3353 = vadd.f32 %v3200, %v3352
    %v3354 = vpop.f32.mrb[0].mxu0
    %v3355 = vpop.f32.mrb[0].mxu0
    %v3356 = vadd.f32 %v3203, %v3355
    %v3357 = vpop.f32.mrb[0].mxu0
    %3358 = vmatprep.mubr.bf16.mxu0 0
    %3359 = vmatmul.mubr.bf16.gmra.mrb[0].mxu0 %v2397
    %v3360 = vpop.f32.mrb[0].mxu0
    %v3361 = vadd.f32 %v3208, %v3360
    %v3362 = vpop.f32.mrb[0].mxu0
    %v3363 = vpop.f32.mrb[0].mxu0
    %v3364 = vadd.f32 %v3211, %v3363
    %v3365 = vpop.f32.mrb[0].mxu0
    %3366 = vmatprep.mubr.bf16.mxu0 0
    %3367 = vmatmul.mubr.bf16.gmra.mrb[0].mxu0 %v2400
    %v3368 = vpop.f32.mrb[0].mxu0
    %v3369 = vadd.f32 %v3216, %v3368
    %v3370 = vpop.f32.mrb[0].mxu0
    %v3371 = vpop.f32.mrb[0].mxu0
    %v3372 = vadd.f32 %v3219, %v3371
    %v3373 = vpop.f32.mrb[0].mxu0
    %3374 = vdwg.mxu0
    %v3375 = vld [vmem:[#allocation2 + $0x6] sm:$0xff]
    %v3376 = vld [vmem:[#allocation2 + $0xe] sm:$0xff]
    %v3377 = vld [vmem:[#allocation2 + $0x16] sm:$0xff]
    %v3378 = vld [vmem:[#allocation2 + $0x1e] sm:$0xff]
    %v3379 = vld [vmem:[#allocation2 + $0x26] sm:$0xff]
    %v3380 = vld [vmem:[#allocation2 + $0x2e] sm:$0xff]
    %v3381 = vld [vmem:[#allocation2 + $0x36] sm:$0xff]
    %v3382 = vld [vmem:[#allocation2 + $0x3e] sm:$0xff]
    %v3383 = vld [vmem:[#allocation2 + $0x46] sm:$0xff]
    %v3384 = vld [vmem:[#allocation2 + $0x4e] sm:$0xff]
    %v3385 = vld [vmem:[#allocation2 + $0x56] sm:$0xff]
    %v3386 = vld [vmem:[#allocation2 + $0x5e] sm:$0xff]
    %v3387 = vld [vmem:[#allocation2 + $0x66] sm:$0xff]
    %v3388 = vld [vmem:[#allocation2 + $0x6e] sm:$0xff]
    %v3389 = vld [vmem:[#allocation2 + $0x76] sm:$0xff]
    %v3390 = vld [vmem:[#allocation2 + $0x7e] sm:$0xff]
    %v3391 = vld [vmem:[#allocation2 + $0x86] sm:$0xff]
    %v3392 = vld [vmem:[#allocation2 + $0x8e] sm:$0xff]
    %v3393 = vld [vmem:[#allocation2 + $0x96] sm:$0xff]
    %v3394 = vld [vmem:[#allocation2 + $0x9e] sm:$0xff]
    %v3395 = vld [vmem:[#allocation2 + $0xa6] sm:$0xff]
    %v3396 = vld [vmem:[#allocation2 + $0xae] sm:$0xff]
    %v3397 = vld [vmem:[#allocation2 + $0xb6] sm:$0xff]
    %v3398 = vld [vmem:[#allocation2 + $0xbe] sm:$0xff]
    %v3399 = vld [vmem:[#allocation2 + $0xc6] sm:$0xff]
    %v3400 = vld [vmem:[#allocation2 + $0xce] sm:$0xff]
    %v3401 = vld [vmem:[#allocation2 + $0xd6] sm:$0xff]
    %v3402 = vld [vmem:[#allocation2 + $0xde] sm:$0xff]
    %v3403 = vld [vmem:[#allocation2 + $0xe6] sm:$0xff]
    %v3404 = vld [vmem:[#allocation2 + $0xee] sm:$0xff]
    %v3405 = vpack.c.bf16 %v3376, %v3375
    %v3406 = vpack.c.bf16 %v3378, %v3377
    %v3407 = vpack.c.bf16 %v3380, %v3379
    %v3408 = vpack.c.bf16 %v3382, %v3381
    %v3409 = vpack.c.bf16 %v3384, %v3383
    %v3410 = vpack.c.bf16 %v3386, %v3385
    %v3411 = vpack.c.bf16 %v3388, %v3387
    %v3412 = vpack.c.bf16 %v3390, %v3389
    %v3413 = vpack.c.bf16 %v3392, %v3391
    %v3414 = vpack.c.bf16 %v3394, %v3393
    %v3415 = vpack.c.bf16 %v3396, %v3395
    %v3416 = vpack.c.bf16 %v3398, %v3397
    %v3417 = vpack.c.bf16 %v3400, %v3399
    %v3418 = vpack.c.bf16 %v3402, %v3401
    %v3419 = vpack.c.bf16 %v3404, %v3403
    %v3421 = vsel %vm45, %v3405, 0
    %v3424 = vsel %vm45, %v3406, 0
    %v3427 = vsel %vm45, %v3407, 0
    %v3430 = vsel %vm45, %v3408, 0
    %v3433 = vsel %vm45, %v3409, 0
    %v3436 = vsel %vm45, %v3410, 0
    %v3439 = vsel %vm45, %v3411, 0
    %v3442 = vsel %vm45, %v3412, 0
    %v3445 = vsel %vm45, %v3413, 0
    %v3448 = vsel %vm45, %v3414, 0
    %v3451 = vsel %vm45, %v3415, 0
    %v3454 = vsel %vm45, %v3416, 0
    %v3457 = vsel %vm45, %v3417, 0
    %v3460 = vsel %vm45, %v3418, 0
    %v3463 = vsel %vm45, %v3419, 0
    %3465 = vmatprep.subr.bf16.mxu0 0
    %3466 = vmatpush1.bf16.msra.mxu0 %v2835
    %3467 = vmatprep.subr.bf16.mxu0 0
    %3468 = vmatpush1.bf16.msra.mxu0 %v2836
    %3469 = vmatprep.subr.bf16.mxu0 0
    %3470 = vmatpush1.bf16.msra.mxu0 %v2837
    %3471 = vmatprep.subr.bf16.mxu0 0
    %3472 = vmatpush1.bf16.msra.mxu0 0
    %3473 = vmatprep.subr.bf16.mxu0 0
    %3474 = vmatpush1.bf16.msra.mxu0 0
    %3475 = vmatprep.subr.bf16.mxu0 0
    %3476 = vmatpush1.bf16.msra.mxu0 0
    %3477 = vmatprep.subr.bf16.mxu0 0
    %3478 = vmatpush1.bf16.msra.mxu0 0
    %3479 = vmatprep.subr.bf16.mxu0 0
    %3480 = vmatpush1.bf16.msra.mxu0 0
    %3481 = vmatprep.subr.bf16.mxu0 0
    %3482 = vmatpush1.bf16.msra.mxu0 0
    %3483 = vmatprep.subr.bf16.mxu0 0
    %3484 = vmatpush1.bf16.msra.mxu0 0
    %3485 = vmatprep.subr.bf16.mxu0 0
    %3486 = vmatpush1.bf16.msra.mxu0 0
    %3487 = vmatprep.subr.bf16.mxu0 0
    %3488 = vmatpush1.bf16.msra.mxu0 0
    %3489 = vmatprep.subr.bf16.mxu0 0
    %3490 = vmatpush1.bf16.msra.mxu0 0
    %3491 = vmatprep.subr.bf16.mxu0 0
    %3492 = vmatpush1.bf16.msra.mxu0 0
    %3493 = vmatprep.subr.bf16.mxu0 0
    %3494 = vmatpush1.bf16.msra.mxu0 0
    %3495 = vmatprep.subr.bf16.mxu0 0
    %3496 = vmatpush1.bf16.msra.mxu0 0
    %3497 = vmatprep.mubr.bf16.mxu0 0
    %3498 = vmatmul.mubr.bf16.gmra.mrb[0].mxu0 %v3421
    %v3499 = vpop.f32.mrb[0].mxu0
    %v3500 = vadd.f32 0.0, %v3499
    %v3501 = vpop.f32.mrb[0].mxu0
    %v3502 = vpop.f32.mrb[0].mxu0
    %v3503 = vadd.f32 0.0, %v3502
    %v3504 = vpop.f32.mrb[0].mxu0
    %3505 = vmatprep.mubr.bf16.mxu0 0
    %3506 = vmatmul.mubr.bf16.gmra.mrb[0].mxu0 %v3424
    %v3507 = vpop.f32.mrb[0].mxu0
    %v3508 = vadd.f32 0.0, %v3507
    %v3509 = vpop.f32.mrb[0].mxu0
    %v3510 = vpop.f32.mrb[0].mxu0
    %v3511 = vadd.f32 0.0, %v3510
    %v3512 = vpop.f32.mrb[0].mxu0
    %3513 = vmatprep.mubr.bf16.mxu0 0
    %3514 = vmatmul.mubr.bf16.gmra.mrb[0].mxu0 %v3427
    %v3515 = vpop.f32.mrb[0].mxu0
    %v3516 = vadd.f32 0.0, %v3515
    %v3517 = vpop.f32.mrb[0].mxu0
    %v3518 = vpop.f32.mrb[0].mxu0
    %v3519 = vadd.f32 0.0, %v3518
    %v3520 = vpop.f32.mrb[0].mxu0
    %3521 = vmatprep.mubr.bf16.mxu0 0
    %3522 = vmatmul.mubr.bf16.gmra.mrb[0].mxu0 %v3430
    %v3523 = vpop.f32.mrb[0].mxu0
    %v3524 = vadd.f32 0.0, %v3523
    %v3525 = vpop.f32.mrb[0].mxu0
    %v3526 = vpop.f32.mrb[0].mxu0
    %v3527 = vadd.f32 0.0, %v3526
    %v3528 = vpop.f32.mrb[0].mxu0
    %3529 = vmatprep.mubr.bf16.mxu0 0
    %3530 = vmatmul.mubr.bf16.gmra.mrb[0].mxu0 %v3433
    %v3531 = vpop.f32.mrb[0].mxu0
    %v3532 = vadd.f32 0.0, %v3531
    %v3533 = vpop.f32.mrb[0].mxu0
    %v3534 = vpop.f32.mrb[0].mxu0
    %v3535 = vadd.f32 0.0, %v3534
    %v3536 = vpop.f32.mrb[0].mxu0
    %3537 = vmatprep.mubr.bf16.mxu0 0
    %3538 = vmatmul.mubr.bf16.gmra.mrb[0].mxu0 %v3436
    %v3539 = vpop.f32.mrb[0].mxu0
    %v3540 = vadd.f32 0.0, %v3539
    %v3541 = vpop.f32.mrb[0].mxu0
    %v3542 = vpop.f32.mrb[0].mxu0
    %v3543 = vadd.f32 0.0, %v3542
    %v3544 = vpop.f32.mrb[0].mxu0
    %3545 = vmatprep.mubr.bf16.mxu0 0
    %3546 = vmatmul.mubr.bf16.gmra.mrb[0].mxu0 %v3439
    %v3547 = vpop.f32.mrb[0].mxu0
    %v3548 = vadd.f32 0.0, %v3547
    %v3549 = vpop.f32.mrb[0].mxu0
    %v3550 = vpop.f32.mrb[0].mxu0
    %v3551 = vadd.f32 0.0, %v3550
    %v3552 = vpop.f32.mrb[0].mxu0
    %3553 = vmatprep.mubr.bf16.mxu0 0
    %3554 = vmatmul.mubr.bf16.gmra.mrb[0].mxu0 %v3442
    %v3555 = vpop.f32.mrb[0].mxu0
    %v3556 = vadd.f32 0.0, %v3555
    %v3557 = vpop.f32.mrb[0].mxu0
    %v3558 = vpop.f32.mrb[0].mxu0
    %v3559 = vadd.f32 0.0, %v3558
    %v3560 = vpop.f32.mrb[0].mxu0
    %3561 = vmatprep.mubr.bf16.mxu0 0
    %3562 = vmatmul.mubr.bf16.gmra.mrb[0].mxu0 %v3445
    %v3563 = vpop.f32.mrb[0].mxu0
    %v3564 = vadd.f32 0.0, %v3563
    %v3565 = vpop.f32.mrb[0].mxu0
    %v3566 = vpop.f32.mrb[0].mxu0
    %v3567 = vadd.f32 0.0, %v3566
    %v3568 = vpop.f32.mrb[0].mxu0
    %3569 = vmatprep.mubr.bf16.mxu0 0
    %3570 = vmatmul.mubr.bf16.gmra.mrb[0].mxu0 %v3448
    %v3571 = vpop.f32.mrb[0].mxu0
    %v3572 = vadd.f32 0.0, %v3571
    %v3573 = vpop.f32.mrb[0].mxu0
    %v3574 = vpop.f32.mrb[0].mxu0
    %v3575 = vadd.f32 0.0, %v3574
    %v3576 = vpop.f32.mrb[0].mxu0
    %3577 = vmatprep.mubr.bf16.mxu0 0
    %3578 = vmatmul.mubr.bf16.gmra.mrb[0].mxu0 %v3451
    %v3579 = vpop.f32.mrb[0].mxu0
    %v3580 = vadd.f32 0.0, %v3579
    %v3581 = vpop.f32.mrb[0].mxu0
    %v3582 = vpop.f32.mrb[0].mxu0
    %v3583 = vadd.f32 0.0, %v3582
    %v3584 = vpop.f32.mrb[0].mxu0
    %3585 = vmatprep.mubr.bf16.mxu0 0
    %3586 = vmatmul.mubr.bf16.gmra.mrb[0].mxu0 %v3454
    %v3587 = vpop.f32.mrb[0].mxu0
    %v3588 = vadd.f32 0.0, %v3587
    %v3589 = vpop.f32.mrb[0].mxu0
    %v3590 = vpop.f32.mrb[0].mxu0
    %v3591 = vadd.f32 0.0, %v3590
    %v3592 = vpop.f32.mrb[0].mxu0
    %3593 = vmatprep.mubr.bf16.mxu0 0
    %3594 = vmatmul.mubr.bf16.gmra.mrb[0].mxu0 %v3457
    %v3595 = vpop.f32.mrb[0].mxu0
    %v3596 = vadd.f32 0.0, %v3595
    %v3597 = vpop.f32.mrb[0].mxu0
    %v3598 = vpop.f32.mrb[0].mxu0
    %v3599 = vadd.f32 0.0, %v3598
    %v3600 = vpop.f32.mrb[0].mxu0
    %3601 = vmatprep.mubr.bf16.mxu0 0
    %3602 = vmatmul.mubr.bf16.gmra.mrb[0].mxu0 %v3460
    %v3603 = vpop.f32.mrb[0].mxu0
    %v3604 = vadd.f32 0.0, %v3603
    %v3605 = vpop.f32.mrb[0].mxu0
    %v3606 = vpop.f32.mrb[0].mxu0
    %v3607 = vadd.f32 0.0, %v3606
    %v3608 = vpop.f32.mrb[0].mxu0
    %3609 = vmatprep.mubr.bf16.mxu0 0
    %3610 = vmatmul.mubr.bf16.gmra.mrb[0].mxu0 %v3463
    %v3611 = vpop.f32.mrb[0].mxu0
    %v3612 = vadd.f32 0.0, %v3611
    %v3613 = vpop.f32.mrb[0].mxu0
    %v3614 = vpop.f32.mrb[0].mxu0
    %v3615 = vadd.f32 0.0, %v3614
    %v3616 = vpop.f32.mrb[0].mxu0
    %3617 = vdwg.mxu0
    %v3618 = vadd.f32 %v3257, %v3500
    %v3619 = vadd.f32 %v3260, %v3503
    %v3620 = vadd.f32 %v3265, %v3508
    %v3621 = vadd.f32 %v3268, %v3511
    %v3622 = vadd.f32 %v3273, %v3516
    %v3623 = vadd.f32 %v3276, %v3519
    %v3624 = vadd.f32 %v3281, %v3524
    %v3625 = vadd.f32 %v3284, %v3527
    %v3626 = vadd.f32 %v3289, %v3532
    %v3627 = vadd.f32 %v3292, %v3535
    %v3628 = vadd.f32 %v3297, %v3540
    %v3629 = vadd.f32 %v3300, %v3543
    %v3630 = vadd.f32 %v3305, %v3548
    %v3631 = vadd.f32 %v3308, %v3551
    %v3632 = vadd.f32 %v3313, %v3556
    %v3633 = vadd.f32 %v3316, %v3559
    %v3634 = vadd.f32 %v3321, %v3564
    %v3635 = vadd.f32 %v3324, %v3567
    %v3636 = vadd.f32 %v3329, %v3572
    %v3637 = vadd.f32 %v3332, %v3575
    %v3638 = vadd.f32 %v3337, %v3580
    %v3639 = vadd.f32 %v3340, %v3583
    %v3640 = vadd.f32 %v3345, %v3588
    %v3641 = vadd.f32 %v3348, %v3591
    %v3642 = vadd.f32 %v3353, %v3596
    %v3643 = vadd.f32 %v3356, %v3599
    %v3644 = vadd.f32 %v3361, %v3604
    %v3645 = vadd.f32 %v3364, %v3607
    %v3646 = vadd.f32 %v3369, %v3612
    %v3647 = vadd.f32 %v3372, %v3615
    %v3648 = vmax.f32 %v3039, %v3618
    %v3649 = vmax.f32 %v3040, %v3619
    %v3650 = vmax.f32 %v3041, %v3620
    %v3651 = vmax.f32 %v3042, %v3621
    %v3652 = vmax.f32 %v3043, %v3622
    %v3653 = vmax.f32 %v3044, %v3623
    %v3654 = vmax.f32 %v3045, %v3624
    %v3655 = vmax.f32 %v3046, %v3625
    %v3656 = vmax.f32 %v3047, %v3626
    %v3657 = vmax.f32 %v3048, %v3627
    %v3658 = vmax.f32 %v3049, %v3628
    %v3659 = vmax.f32 %v3050, %v3629
    %v3660 = vmax.f32 %v3051, %v3630
    %v3661 = vmax.f32 %v3052, %v3631
    %v3662 = vmax.f32 %v3053, %v3632
    %v3663 = vmax.f32 %v3054, %v3633
    %v3664 = vmax.f32 %v3055, %v3634
    %v3665 = vmax.f32 %v3056, %v3635
    %v3666 = vmax.f32 %v3057, %v3636
    %v3667 = vmax.f32 %v3058, %v3637
    %v3668 = vmax.f32 %v3059, %v3638
    %v3669 = vmax.f32 %v3060, %v3639
    %v3670 = vmax.f32 %v3061, %v3640
    %v3671 = vmax.f32 %v3062, %v3641
    %v3672 = vmax.f32 %v3063, %v3642
    %v3673 = vmax.f32 %v3064, %v3643
    %v3674 = vmax.f32 %v3065, %v3644
    %v3675 = vmax.f32 %v3066, %v3645
    %v3676 = vmax.f32 %v3067, %v3646
    %v3677 = vmax.f32 %v3068, %v3647
    %v3678 = vld [vmem:[%s6] sm:$0x1]
    %v3680 = vlaneseq
    %v3681 = vshrl.u32 %v3680, 7
    %v3682 = vsub.s32 0, %v3681
    %v3683 = vrot.slane %v3678, %v3682
    %v3685 = vadd.f32 %v3648, %v3683
    %v3686 = vadd.f32 %v3649, %v3683
    %v3687 = vadd.f32 %v3650, %v3683
    %v3688 = vadd.f32 %v3651, %v3683
    %v3689 = vadd.f32 %v3652, %v3683
    %v3690 = vadd.f32 %v3653, %v3683
    %v3691 = vadd.f32 %v3654, %v3683
    %v3692 = vadd.f32 %v3655, %v3683
    %v3693 = vadd.f32 %v3656, %v3683
    %v3694 = vadd.f32 %v3657, %v3683
    %v3695 = vadd.f32 %v3658, %v3683
    %v3696 = vadd.f32 %v3659, %v3683
    %v3697 = vadd.f32 %v3660, %v3683
    %v3698 = vadd.f32 %v3661, %v3683
    %v3699 = vadd.f32 %v3662, %v3683
    %v3700 = vadd.f32 %v3663, %v3683
    %v3701 = vadd.f32 %v3664, %v3683
    %v3702 = vadd.f32 %v3665, %v3683
    %v3703 = vadd.f32 %v3666, %v3683
    %v3704 = vadd.f32 %v3667, %v3683
    %v3705 = vadd.f32 %v3668, %v3683
    %v3706 = vadd.f32 %v3669, %v3683
    %v3707 = vadd.f32 %v3670, %v3683
    %v3708 = vadd.f32 %v3671, %v3683
    %v3709 = vadd.f32 %v3672, %v3683
    %v3710 = vadd.f32 %v3673, %v3683
    %v3711 = vadd.f32 %v3674, %v3683
    %v3712 = vadd.f32 %v3675, %v3683
    %v3713 = vadd.f32 %v3676, %v3683
    %v3714 = vadd.f32 %v3677, %v3683
    %v3715 = vmax.f32 %v3685, 0.0
    %v3716 = vmax.f32 %v3686, 0.0
    %v3717 = vmax.f32 %v3687, 0.0
    %v3718 = vmax.f32 %v3688, 0.0
    %v3719 = vmax.f32 %v3689, 0.0
    %v3720 = vmax.f32 %v3690, 0.0
    %v3721 = vmax.f32 %v3691, 0.0
    %v3722 = vmax.f32 %v3692, 0.0
    %v3723 = vmax.f32 %v3693, 0.0
    %v3724 = vmax.f32 %v3694, 0.0
    %v3725 = vmax.f32 %v3695, 0.0
    %v3726 = vmax.f32 %v3696, 0.0
    %v3727 = vmax.f32 %v3697, 0.0
    %v3728 = vmax.f32 %v3698, 0.0
    %v3729 = vmax.f32 %v3699, 0.0
    %v3730 = vmax.f32 %v3700, 0.0
    %v3731 = vmax.f32 %v3701, 0.0
    %v3732 = vmax.f32 %v3702, 0.0
    %v3733 = vmax.f32 %v3703, 0.0
    %v3734 = vmax.f32 %v3704, 0.0
    %v3735 = vmax.f32 %v3705, 0.0
    %v3736 = vmax.f32 %v3706, 0.0
    %v3737 = vmax.f32 %v3707, 0.0
    %v3738 = vmax.f32 %v3708, 0.0
    %v3739 = vmax.f32 %v3709, 0.0
    %v3740 = vmax.f32 %v3710, 0.0
    %v3741 = vmax.f32 %v3711, 0.0
    %v3742 = vmax.f32 %v3712, 0.0
    %v3743 = vmax.f32 %v3713, 0.0
    %v3744 = vmax.f32 %v3714, 0.0
    %v3745 = vld [vmem:[%s7] sm:$0xff]
    %v3746 = vld [vmem:[%s7 + $0x8] sm:$0xff]
    %v3747 = vld [vmem:[%s7 + $0x10] sm:$0xff]
    %v3749 = vsel %vm47, %v3715, 0
    %v3752 = vsel %vm47, %v3716, 0
    %v3755 = vsel %vm47, %v3717, 0
    %v3758 = vsel %vm47, %v3718, 0
    %v3761 = vsel %vm47, %v3719, 0
    %v3764 = vsel %vm47, %v3720, 0
    %v3767 = vsel %vm47, %v3721, 0
    %v3770 = vsel %vm47, %v3722, 0
    %v3773 = vsel %vm47, %v3723, 0
    %v3776 = vsel %vm47, %v3724, 0
    %v3779 = vsel %vm47, %v3725, 0
    %v3782 = vsel %vm47, %v3726, 0
    %v3785 = vsel %vm47, %v3727, 0
    %v3788 = vsel %vm47, %v3728, 0
    %v3791 = vsel %vm47, %v3729, 0
    %v3794 = vsel %vm47, %v3730, 0
    %v3797 = vsel %vm47, %v3731, 0
    %v3800 = vsel %vm47, %v3732, 0
    %v3803 = vsel %vm47, %v3733, 0
    %v3806 = vsel %vm47, %v3734, 0
    %v3809 = vsel %vm47, %v3735, 0
    %v3812 = vsel %vm47, %v3736, 0
    %v3815 = vsel %vm47, %v3737, 0
    %v3818 = vsel %vm47, %v3738, 0
    %v3821 = vsel %vm47, %v3739, 0
    %v3824 = vsel %vm47, %v3740, 0
    %v3827 = vsel %vm47, %v3741, 0
    %v3830 = vsel %vm47, %v3742, 0
    %v3833 = vsel %vm47, %v3743, 0
    %v3836 = vsel %vm47, %v3744, 0
    %3838 = vmatprep.subr.mxu0 0.0
    %3839 = vmatpush1.msra.mxu0 %v3745
    %3840 = vmatprep.subr.mxu0 0.0
    %3841 = vmatpush1.msra.mxu0 %v3746
    %3842 = vmatprep.subr.mxu0 0.0
    %3843 = vmatpush1.msra.mxu0 %v3747
    %3844 = vmatprep.subr.mxu0 0.0
    %3845 = vmatpush1.msra.mxu0 0.0
    %3846 = vmatprep.subr.mxu0 0.0
    %3847 = vmatpush1.msra.mxu0 0.0
    %3848 = vmatprep.subr.mxu0 0.0
    %3849 = vmatpush1.msra.mxu0 0.0
    %3850 = vmatprep.subr.mxu0 0.0
    %3851 = vmatpush1.msra.mxu0 0.0
    %3852 = vmatprep.subr.mxu0 0.0
    %3853 = vmatpush1.msra.mxu0 0.0
    %3854 = vmatprep.subr.mxu0 0.0
    %3855 = vmatpush1.msra.mxu0 0.0
    %3856 = vmatprep.subr.mxu0 0.0
    %3857 = vmatpush1.msra.mxu0 0.0
    %3858 = vmatprep.subr.mxu0 0.0
    %3859 = vmatpush1.msra.mxu0 0.0
    %3860 = vmatprep.subr.mxu0 0.0
    %3861 = vmatpush1.msra.mxu0 0.0
    %3862 = vmatprep.subr.mxu0 0.0
    %3863 = vmatpush1.msra.mxu0 0.0
    %3864 = vmatprep.subr.mxu0 0.0
    %3865 = vmatpush1.msra.mxu0 0.0
    %3866 = vmatprep.subr.mxu0 0.0
    %3867 = vmatpush1.msra.mxu0 0.0
    %3868 = vmatprep.subr.mxu0 0.0
    %3869 = vmatpush1.msra.mxu0 0.0
    %3870 = vmatprep.subr.mxu0 0.0
    %3871 = vmatpush1.msra.mxu0 0.0
    %3872 = vmatprep.subr.mxu0 0.0
    %3873 = vmatpush1.msra.mxu0 0.0
    %3874 = vmatprep.subr.mxu0 0.0
    %3875 = vmatpush1.msra.mxu0 0.0
    %3876 = vmatprep.subr.mxu0 0.0
    %3877 = vmatpush1.msra.mxu0 0.0
    %3878 = vmatprep.subr.mxu0 0.0
    %3879 = vmatpush1.msra.mxu0 0.0
    %3880 = vmatprep.subr.mxu0 0.0
    %3881 = vmatpush1.msra.mxu0 0.0
    %3882 = vmatprep.subr.mxu0 0.0
    %3883 = vmatpush1.msra.mxu0 0.0
    %3884 = vmatprep.subr.mxu0 0.0
    %3885 = vmatpush1.msra.mxu0 0.0
    %3886 = vmatprep.subr.mxu0 0.0
    %3887 = vmatpush1.msra.mxu0 0.0
    %3888 = vmatprep.subr.mxu0 0.0
    %3889 = vmatpush1.msra.mxu0 0.0
    %3890 = vmatprep.subr.mxu0 0.0
    %3891 = vmatpush1.msra.mxu0 0.0
    %3892 = vmatprep.subr.mxu0 0.0
    %3893 = vmatpush1.msra.mxu0 0.0
    %3894 = vmatprep.subr.mxu0 0.0
    %3895 = vmatpush1.msra.mxu0 0.0
    %3896 = vmatprep.subr.mxu0 0.0
    %3897 = vmatpush1.msra.mxu0 0.0
    %3898 = vmatprep.subr.mxu0 0.0
    %3899 = vmatpush1.msra.mxu0 0.0
    %3900 = vmatprep.subr.mxu0 0.0
    %3901 = vmatpush1.msra.mxu0 0.0
    %3902 = vmatprep.mubr.f32.mxu0 0.0
    %3903 = vmatmul.mubr.f32.gmra.mrb[0].mxu0 %v3749
    %v3904 = vpop.f32.mrb[0].mxu0
    %v3905 = vadd.f32 0.0, %v3904
    %v3906 = vpop.f32.mrb[0].mxu0
    %3907 = vmatprep.mubr.f32.mxu0 0.0
    %3908 = vmatmul.mubr.f32.gmra.mrb[0].mxu0 %v3752
    %v3909 = vpop.f32.mrb[0].mxu0
    %v3910 = vadd.f32 0.0, %v3909
    %v3911 = vpop.f32.mrb[0].mxu0
    %3912 = vmatprep.mubr.f32.mxu0 0.0
    %3913 = vmatmul.mubr.f32.gmra.mrb[0].mxu0 %v3755
    %v3914 = vpop.f32.mrb[0].mxu0
    %v3915 = vadd.f32 0.0, %v3914
    %v3916 = vpop.f32.mrb[0].mxu0
    %3917 = vmatprep.mubr.f32.mxu0 0.0
    %3918 = vmatmul.mubr.f32.gmra.mrb[0].mxu0 %v3758
    %v3919 = vpop.f32.mrb[0].mxu0
    %v3920 = vadd.f32 0.0, %v3919
    %v3921 = vpop.f32.mrb[0].mxu0
    %3922 = vmatprep.mubr.f32.mxu0 0.0
    %3923 = vmatmul.mubr.f32.gmra.mrb[0].mxu0 %v3761
    %v3924 = vpop.f32.mrb[0].mxu0
    %v3925 = vadd.f32 0.0, %v3924
    %v3926 = vpop.f32.mrb[0].mxu0
    %3927 = vmatprep.mubr.f32.mxu0 0.0
    %3928 = vmatmul.mubr.f32.gmra.mrb[0].mxu0 %v3764
    %v3929 = vpop.f32.mrb[0].mxu0
    %v3930 = vadd.f32 0.0, %v3929
    %v3931 = vpop.f32.mrb[0].mxu0
    %3932 = vmatprep.mubr.f32.mxu0 0.0
    %3933 = vmatmul.mubr.f32.gmra.mrb[0].mxu0 %v3767
    %v3934 = vpop.f32.mrb[0].mxu0
    %v3935 = vadd.f32 0.0, %v3934
    %v3936 = vpop.f32.mrb[0].mxu0
    %3937 = vmatprep.mubr.f32.mxu0 0.0
    %3938 = vmatmul.mubr.f32.gmra.mrb[0].mxu0 %v3770
    %v3939 = vpop.f32.mrb[0].mxu0
    %v3940 = vadd.f32 0.0, %v3939
    %v3941 = vpop.f32.mrb[0].mxu0
    %3942 = vmatprep.mubr.f32.mxu0 0.0
    %3943 = vmatmul.mubr.f32.gmra.mrb[0].mxu0 %v3773
    %v3944 = vpop.f32.mrb[0].mxu0
    %v3945 = vadd.f32 0.0, %v3944
    %v3946 = vpop.f32.mrb[0].mxu0
    %3947 = vmatprep.mubr.f32.mxu0 0.0
    %3948 = vmatmul.mubr.f32.gmra.mrb[0].mxu0 %v3776
    %v3949 = vpop.f32.mrb[0].mxu0
    %v3950 = vadd.f32 0.0, %v3949
    %v3951 = vpop.f32.mrb[0].mxu0
    %3952 = vmatprep.mubr.f32.mxu0 0.0
    %3953 = vmatmul.mubr.f32.gmra.mrb[0].mxu0 %v3779
    %v3954 = vpop.f32.mrb[0].mxu0
    %v3955 = vadd.f32 0.0, %v3954
    %v3956 = vpop.f32.mrb[0].mxu0
    %3957 = vmatprep.mubr.f32.mxu0 0.0
    %3958 = vmatmul.mubr.f32.gmra.mrb[0].mxu0 %v3782
    %v3959 = vpop.f32.mrb[0].mxu0
    %v3960 = vadd.f32 0.0, %v3959
    %v3961 = vpop.f32.mrb[0].mxu0
    %3962 = vmatprep.mubr.f32.mxu0 0.0
    %3963 = vmatmul.mubr.f32.gmra.mrb[0].mxu0 %v3785
    %v3964 = vpop.f32.mrb[0].mxu0
    %v3965 = vadd.f32 0.0, %v3964
    %v3966 = vpop.f32.mrb[0].mxu0
    %3967 = vmatprep.mubr.f32.mxu0 0.0
    %3968 = vmatmul.mubr.f32.gmra.mrb[0].mxu0 %v3788
    %v3969 = vpop.f32.mrb[0].mxu0
    %v3970 = vadd.f32 0.0, %v3969
    %v3971 = vpop.f32.mrb[0].mxu0
    %3972 = vmatprep.mubr.f32.mxu0 0.0
    %3973 = vmatmul.mubr.f32.gmra.mrb[0].mxu0 %v3791
    %v3974 = vpop.f32.mrb[0].mxu0
    %v3975 = vadd.f32 0.0, %v3974
    %v3976 = vpop.f32.mrb[0].mxu0
    %3977 = vmatprep.mubr.f32.mxu0 0.0
    %3978 = vmatmul.mubr.f32.gmra.mrb[0].mxu0 %v3794
    %v3979 = vpop.f32.mrb[0].mxu0
    %v3980 = vadd.f32 0.0, %v3979
    %v3981 = vpop.f32.mrb[0].mxu0
    %3982 = vmatprep.mubr.f32.mxu0 0.0
    %3983 = vmatmul.mubr.f32.gmra.mrb[0].mxu0 %v3797
    %v3984 = vpop.f32.mrb[0].mxu0
    %v3985 = vadd.f32 0.0, %v3984
    %v3986 = vpop.f32.mrb[0].mxu0
    %3987 = vmatprep.mubr.f32.mxu0 0.0
    %3988 = vmatmul.mubr.f32.gmra.mrb[0].mxu0 %v3800
    %v3989 = vpop.f32.mrb[0].mxu0
    %v3990 = vadd.f32 0.0, %v3989
    %v3991 = vpop.f32.mrb[0].mxu0
    %3992 = vmatprep.mubr.f32.mxu0 0.0
    %3993 = vmatmul.mubr.f32.gmra.mrb[0].mxu0 %v3803
    %v3994 = vpop.f32.mrb[0].mxu0
    %v3995 = vadd.f32 0.0, %v3994
    %v3996 = vpop.f32.mrb[0].mxu0
    %3997 = vmatprep.mubr.f32.mxu0 0.0
    %3998 = vmatmul.mubr.f32.gmra.mrb[0].mxu0 %v3806
    %v3999 = vpop.f32.mrb[0].mxu0
    %v4000 = vadd.f32 0.0, %v3999
    %v4001 = vpop.f32.mrb[0].mxu0
    %4002 = vmatprep.mubr.f32.mxu0 0.0
    %4003 = vmatmul.mubr.f32.gmra.mrb[0].mxu0 %v3809
    %v4004 = vpop.f32.mrb[0].mxu0
    %v4005 = vadd.f32 0.0, %v4004
    %v4006 = vpop.f32.mrb[0].mxu0
    %4007 = vmatprep.mubr.f32.mxu0 0.0
    %4008 = vmatmul.mubr.f32.gmra.mrb[0].mxu0 %v3812
    %v4009 = vpop.f32.mrb[0].mxu0
    %v4010 = vadd.f32 0.0, %v4009
    %v4011 = vpop.f32.mrb[0].mxu0
    %4012 = vmatprep.mubr.f32.mxu0 0.0
    %4013 = vmatmul.mubr.f32.gmra.mrb[0].mxu0 %v3815
    %v4014 = vpop.f32.mrb[0].mxu0
    %v4015 = vadd.f32 0.0, %v4014
    %v4016 = vpop.f32.mrb[0].mxu0
    %4017 = vmatprep.mubr.f32.mxu0 0.0
    %4018 = vmatmul.mubr.f32.gmra.mrb[0].mxu0 %v3818
    %v4019 = vpop.f32.mrb[0].mxu0
    %v4020 = vadd.f32 0.0, %v4019
    %v4021 = vpop.f32.mrb[0].mxu0
    %4022 = vmatprep.mubr.f32.mxu0 0.0
    %4023 = vmatmul.mubr.f32.gmra.mrb[0].mxu0 %v3821
    %v4024 = vpop.f32.mrb[0].mxu0
    %v4025 = vadd.f32 0.0, %v4024
    %v4026 = vpop.f32.mrb[0].mxu0
    %4027 = vmatprep.mubr.f32.mxu0 0.0
    %4028 = vmatmul.mubr.f32.gmra.mrb[0].mxu0 %v3824
    %v4029 = vpop.f32.mrb[0].mxu0
    %v4030 = vadd.f32 0.0, %v4029
    %v4031 = vpop.f32.mrb[0].mxu0
    %4032 = vmatprep.mubr.f32.mxu0 0.0
    %4033 = vmatmul.mubr.f32.gmra.mrb[0].mxu0 %v3827
    %v4034 = vpop.f32.mrb[0].mxu0
    %v4035 = vadd.f32 0.0, %v4034
    %v4036 = vpop.f32.mrb[0].mxu0
    %4037 = vmatprep.mubr.f32.mxu0 0.0
    %4038 = vmatmul.mubr.f32.gmra.mrb[0].mxu0 %v3830
    %v4039 = vpop.f32.mrb[0].mxu0
    %v4040 = vadd.f32 0.0, %v4039
    %v4041 = vpop.f32.mrb[0].mxu0
    %4042 = vmatprep.mubr.f32.mxu0 0.0
    %4043 = vmatmul.mubr.f32.gmra.mrb[0].mxu0 %v3833
    %v4044 = vpop.f32.mrb[0].mxu0
    %v4045 = vadd.f32 0.0, %v4044
    %v4046 = vpop.f32.mrb[0].mxu0
    %4047 = vmatprep.mubr.f32.mxu0 0.0
    %4048 = vmatmul.mubr.f32.gmra.mrb[0].mxu0 %v3836
    %v4049 = vpop.f32.mrb[0].mxu0
    %v4050 = vadd.f32 0.0, %v4049
    %v4051 = vpop.f32.mrb[0].mxu0
    %4052 = vdwg.mxu0
    %v4053 = vmax.f32 %v3715, %v3905
    %v4054 = vmax.f32 %v3716, %v3910
    %v4055 = vmax.f32 %v3717, %v3915
    %v4056 = vmax.f32 %v3718, %v3920
    %v4057 = vmax.f32 %v3719, %v3925
    %v4058 = vmax.f32 %v3720, %v3930
    %v4059 = vmax.f32 %v3721, %v3935
    %v4060 = vmax.f32 %v3722, %v3940
    %v4061 = vmax.f32 %v3723, %v3945
    %v4062 = vmax.f32 %v3724, %v3950
    %v4063 = vmax.f32 %v3725, %v3955
    %v4064 = vmax.f32 %v3726, %v3960
    %v4065 = vmax.f32 %v3727, %v3965
    %v4066 = vmax.f32 %v3728, %v3970
    %v4067 = vmax.f32 %v3729, %v3975
    %v4068 = vmax.f32 %v3730, %v3980
    %v4069 = vmax.f32 %v3731, %v3985
    %v4070 = vmax.f32 %v3732, %v3990
    %v4071 = vmax.f32 %v3733, %v3995
    %v4072 = vmax.f32 %v3734, %v4000
    %v4073 = vmax.f32 %v3735, %v4005
    %v4074 = vmax.f32 %v3736, %v4010
    %v4075 = vmax.f32 %v3737, %v4015
    %v4076 = vmax.f32 %v3738, %v4020
    %v4077 = vmax.f32 %v3739, %v4025
    %v4078 = vmax.f32 %v3740, %v4030
    %v4079 = vmax.f32 %v3741, %v4035
    %v4080 = vmax.f32 %v3742, %v4040
    %v4081 = vmax.f32 %v3743, %v4045
    %v4082 = vmax.f32 %v3744, %v4050
    %4083 = vst.msk [vmem:[#allocation3] sm:$0xff] %vm47, %v4053
    %4084 = vst.msk [vmem:[#allocation3 + $0x8] sm:$0xff] %vm47, %v4054
    %4085 = vst.msk [vmem:[#allocation3 + $0x10] sm:$0xff] %vm47, %v4055
    %4086 = vst.msk [vmem:[#allocation3 + $0x18] sm:$0xff] %vm47, %v4056
    %4087 = vst.msk [vmem:[#allocation3 + $0x20] sm:$0xff] %vm47, %v4057
    %4088 = vst.msk [vmem:[#allocation3 + $0x28] sm:$0xff] %vm47, %v4058
    %4089 = vst.msk [vmem:[#allocation3 + $0x30] sm:$0xff] %vm47, %v4059
    %4090 = vst.msk [vmem:[#allocation3 + $0x38] sm:$0xff] %vm47, %v4060
    %4091 = vst.msk [vmem:[#allocation3 + $0x40] sm:$0xff] %vm47, %v4061
    %4092 = vst.msk [vmem:[#allocation3 + $0x48] sm:$0xff] %vm47, %v4062
    %4093 = vst.msk [vmem:[#allocation3 + $0x50] sm:$0xff] %vm47, %v4063
    %4094 = vst.msk [vmem:[#allocation3 + $0x58] sm:$0xff] %vm47, %v4064
    %4095 = vst.msk [vmem:[#allocation3 + $0x60] sm:$0xff] %vm47, %v4065
    %4096 = vst.msk [vmem:[#allocation3 + $0x68] sm:$0xff] %vm47, %v4066
    %4097 = vst.msk [vmem:[#allocation3 + $0x70] sm:$0xff] %vm47, %v4067
    %4098 = vst.msk [vmem:[#allocation3 + $0x78] sm:$0xff] %vm47, %v4068
    %4099 = vst.msk [vmem:[#allocation3 + $0x80] sm:$0xff] %vm47, %v4069
    %4100 = vst.msk [vmem:[#allocation3 + $0x88] sm:$0xff] %vm47, %v4070
    %4101 = vst.msk [vmem:[#allocation3 + $0x90] sm:$0xff] %vm47, %v4071
    %4102 = vst.msk [vmem:[#allocation3 + $0x98] sm:$0xff] %vm47, %v4072
    %4103 = vst.msk [vmem:[#allocation3 + $0xa0] sm:$0xff] %vm47, %v4073
    %4104 = vst.msk [vmem:[#allocation3 + $0xa8] sm:$0xff] %vm47, %v4074
    %4105 = vst.msk [vmem:[#allocation3 + $0xb0] sm:$0xff] %vm47, %v4075
    %4106 = vst.msk [vmem:[#allocation3 + $0xb8] sm:$0xff] %vm47, %v4076
    %4107 = vst.msk [vmem:[#allocation3 + $0xc0] sm:$0xff] %vm47, %v4077
    %4108 = vst.msk [vmem:[#allocation3 + $0xc8] sm:$0xff] %vm47, %v4078
    %4109 = vst.msk [vmem:[#allocation3 + $0xd0] sm:$0xff] %vm47, %v4079
    %4110 = vst.msk [vmem:[#allocation3 + $0xd8] sm:$0xff] %vm47, %v4080
    %4111 = vst.msk [vmem:[#allocation3 + $0xe0] sm:$0xff] %vm47, %v4081
    %4112 = vst.msk [vmem:[#allocation3 + $0xe8] sm:$0xff] %vm47, %v4082
    %v4113 = vld [vmem:[#allocation3] sm:$0xff]
    %v4114 = vld [vmem:[#allocation3 + $0x8] sm:$0xff]
    %v4115 = vld [vmem:[#allocation3 + $0x10] sm:$0xff]
    %v4116 = vld [vmem:[#allocation3 + $0x18] sm:$0xff]
    %v4117 = vld [vmem:[#allocation3 + $0x20] sm:$0xff]
    %v4118 = vld [vmem:[#allocation3 + $0x28] sm:$0xff]
    %v4119 = vld [vmem:[#allocation3 + $0x30] sm:$0xff]
    %v4120 = vld [vmem:[#allocation3 + $0x38] sm:$0xff]
    %v4121 = vld [vmem:[#allocation3 + $0x40] sm:$0xff]
    %v4122 = vld [vmem:[#allocation3 + $0x48] sm:$0xff]
    %v4123 = vld [vmem:[#allocation3 + $0x50] sm:$0xff]
    %v4124 = vld [vmem:[#allocation3 + $0x58] sm:$0xff]
    %v4125 = vld [vmem:[#allocation3 + $0x60] sm:$0xff]
    %v4126 = vld [vmem:[#allocation3 + $0x68] sm:$0xff]
    %v4127 = vld [vmem:[#allocation3 + $0x70] sm:$0xff]
    %v4128 = vld [vmem:[#allocation3 + $0x78] sm:$0xff]
    %v4129 = vld [vmem:[#allocation3 + $0x80] sm:$0xff]
    %v4130 = vld [vmem:[#allocation3 + $0x88] sm:$0xff]
    %v4131 = vld [vmem:[#allocation3 + $0x90] sm:$0xff]
    %v4132 = vld [vmem:[#allocation3 + $0x98] sm:$0xff]
    %v4133 = vld [vmem:[#allocation3 + $0xa0] sm:$0xff]
    %v4134 = vld [vmem:[#allocation3 + $0xa8] sm:$0xff]
    %v4135 = vld [vmem:[#allocation3 + $0xb0] sm:$0xff]
    %v4136 = vld [vmem:[#allocation3 + $0xb8] sm:$0xff]
    %v4137 = vld [vmem:[#allocation3 + $0xc0] sm:$0xff]
    %v4138 = vld [vmem:[#allocation3 + $0xc8] sm:$0xff]
    %v4139 = vld [vmem:[#allocation3 + $0xd0] sm:$0xff]
    %v4140 = vld [vmem:[#allocation3 + $0xd8] sm:$0xff]
    %v4141 = vld [vmem:[#allocation3 + $0xe0] sm:$0xff]
    %v4142 = vld [vmem:[#allocation3 + $0xe8] sm:$0xff]
    %v4143 = vpack.c.bf16 %v4114, %v4113
    %v4144 = vpack.c.bf16 %v4116, %v4115
    %v4145 = vpack.c.bf16 %v4118, %v4117
    %v4146 = vpack.c.bf16 %v4120, %v4119
    %v4147 = vpack.c.bf16 %v4122, %v4121
    %v4148 = vpack.c.bf16 %v4124, %v4123
    %v4149 = vpack.c.bf16 %v4126, %v4125
    %v4150 = vpack.c.bf16 %v4128, %v4127
    %v4151 = vpack.c.bf16 %v4130, %v4129
    %v4152 = vpack.c.bf16 %v4132, %v4131
    %v4153 = vpack.c.bf16 %v4134, %v4133
    %v4154 = vpack.c.bf16 %v4136, %v4135
    %v4155 = vpack.c.bf16 %v4138, %v4137
    %v4156 = vpack.c.bf16 %v4140, %v4139
    %v4157 = vpack.c.bf16 %v4142, %v4141
    %v4158 = vld [vmem:[%s8] sm:$0xf]
    %v4159 = vld [vmem:[%s8 + $0x4] sm:$0xf]
    %v4160 = vld [vmem:[%s8 + $0x8] sm:$0xf]
    %v4161 = vld [vmem:[#allocation3 + $0x4] sm:$0xff]
    %v4162 = vld [vmem:[#allocation3 + $0xc] sm:$0xff]
    %v4163 = vld [vmem:[#allocation3 + $0x14] sm:$0xff]
    %v4164 = vld [vmem:[#allocation3 + $0x1c] sm:$0xff]
    %v4165 = vld [vmem:[#allocation3 + $0x24] sm:$0xff]
    %v4166 = vld [vmem:[#allocation3 + $0x2c] sm:$0xff]
    %v4167 = vld [vmem:[#allocation3 + $0x34] sm:$0xff]
    %v4168 = vld [vmem:[#allocation3 + $0x3c] sm:$0xff]
    %v4169 = vld [vmem:[#allocation3 + $0x44] sm:$0xff]
    %v4170 = vld [vmem:[#allocation3 + $0x4c] sm:$0xff]
    %v4171 = vld [vmem:[#allocation3 + $0x54] sm:$0xff]
    %v4172 = vld [vmem:[#allocation3 + $0x5c] sm:$0xff]
    %v4173 = vld [vmem:[#allocation3 + $0x64] sm:$0xff]
    %v4174 = vld [vmem:[#allocation3 + $0x6c] sm:$0xff]
    %v4175 = vld [vmem:[#allocation3 + $0x74] sm:$0xff]
    %v4176 = vld [vmem:[#allocation3 + $0x7c] sm:$0xff]
    %v4177 = vld [vmem:[#allocation3 + $0x84] sm:$0xff]
    %v4178 = vld [vmem:[#allocation3 + $0x8c] sm:$0xff]
    %v4179 = vld [vmem:[#allocation3 + $0x94] sm:$0xff]
    %v4180 = vld [vmem:[#allocation3 + $0x9c] sm:$0xff]
    %v4181 = vld [vmem:[#allocation3 + $0xa4] sm:$0xff]
    %v4182 = vld [vmem:[#allocation3 + $0xac] sm:$0xff]
    %v4183 = vld [vmem:[#allocation3 + $0xb4] sm:$0xff]
    %v4184 = vld [vmem:[#allocation3 + $0xbc] sm:$0xff]
    %v4185 = vld [vmem:[#allocation3 + $0xc4] sm:$0xff]
    %v4186 = vld [vmem:[#allocation3 + $0xcc] sm:$0xff]
    %v4187 = vld [vmem:[#allocation3 + $0xd4] sm:$0xff]
    %v4188 = vld [vmem:[#allocation3 + $0xdc] sm:$0xff]
    %v4189 = vld [vmem:[#allocation3 + $0xe4] sm:$0xff]
    %v4190 = vld [vmem:[#allocation3 + $0xec] sm:$0xff]
    %v4191 = vpack.c.bf16 %v4162, %v4161
    %v4192 = vpack.c.bf16 %v4164, %v4163
    %v4193 = vpack.c.bf16 %v4166, %v4165
    %v4194 = vpack.c.bf16 %v4168, %v4167
    %v4195 = vpack.c.bf16 %v4170, %v4169
    %v4196 = vpack.c.bf16 %v4172, %v4171
    %v4197 = vpack.c.bf16 %v4174, %v4173
    %v4198 = vpack.c.bf16 %v4176, %v4175
    %v4199 = vpack.c.bf16 %v4178, %v4177
    %v4200 = vpack.c.bf16 %v4180, %v4179
    %v4201 = vpack.c.bf16 %v4182, %v4181
    %v4202 = vpack.c.bf16 %v4184, %v4183
    %v4203 = vpack.c.bf16 %v4186, %v4185
    %v4204 = vpack.c.bf16 %v4188, %v4187
    %v4205 = vpack.c.bf16 %v4190, %v4189
    %s4206 = scalar_lea.vmem %s8, 12
    %v4207 = vld [vmem:[%s4206] sm:$0xf]
    %v4208 = vld [vmem:[%s4206 + $0x4] sm:$0xf]
    %v4209 = vld [vmem:[%s4206 + $0x8] sm:$0xf]
    %v4213 = vunpack.c.l.b16 %v4207
    %v4214 = vunpack.c.l.b16 %v4208
    %v4215 = vunpack.c.l.b16 %v4209
    %v4216 = vpack.c.b16 %v4214, %v4213
    %v4217 = vpack.c.b16 %v4215, %v4215
    %v4220 = vsel %vm47, %v4191, 0
    %v4223 = vsel %vm47, %v4192, 0
    %v4226 = vsel %vm47, %v4193, 0
    %v4229 = vsel %vm47, %v4194, 0
    %v4232 = vsel %vm47, %v4195, 0
    %v4235 = vsel %vm47, %v4196, 0
    %v4238 = vsel %vm47, %v4197, 0
    %v4241 = vsel %vm47, %v4198, 0
    %v4244 = vsel %vm47, %v4199, 0
    %v4247 = vsel %vm47, %v4200, 0
    %v4250 = vsel %vm47, %v4201, 0
    %v4253 = vsel %vm47, %v4202, 0
    %v4256 = vsel %vm47, %v4203, 0
    %v4259 = vsel %vm47, %v4204, 0
    %v4262 = vsel %vm47, %v4205, 0
    %vm4264 = vcmask 1043456
    %v4266 = vsel %vm4264, %v4217, 0
    %4268 = vmatprep.subr.bf16.mxu0 0
    %4269 = vmatpush1.bf16.msra.mxu0 %v4216
    %4270 = vmatprep.subr.bf16.mxu0 0
    %4271 = vmatpush1.bf16.msra.mxu0 %v4266
    %4272 = vmatprep.subr.bf16.mxu0 0
    %4273 = vmatpush1.bf16.msra.mxu0 0
    %4274 = vmatprep.subr.bf16.mxu0 0
    %4275 = vmatpush1.bf16.msra.mxu0 0
    %4276 = vmatprep.subr.bf16.mxu0 0
    %4277 = vmatpush1.bf16.msra.mxu0 0
    %4278 = vmatprep.subr.bf16.mxu0 0
    %4279 = vmatpush1.bf16.msra.mxu0 0
    %4280 = vmatprep.subr.bf16.mxu0 0
    %4281 = vmatpush1.bf16.msra.mxu0 0
    %4282 = vmatprep.subr.bf16.mxu0 0
    %4283 = vmatpush1.bf16.msra.mxu0 0
    %4284 = vmatprep.subr.bf16.mxu0 0
    %4285 = vmatpush1.bf16.msra.mxu0 0
    %4286 = vmatprep.subr.bf16.mxu0 0
    %4287 = vmatpush1.bf16.msra.mxu0 0
    %4288 = vmatprep.subr.bf16.mxu0 0
    %4289 = vmatpush1.bf16.msra.mxu0 0
    %4290 = vmatprep.subr.bf16.mxu0 0
    %4291 = vmatpush1.bf16.msra.mxu0 0
    %4292 = vmatprep.subr.bf16.mxu0 0
    %4293 = vmatpush1.bf16.msra.mxu0 0
    %4294 = vmatprep.subr.bf16.mxu0 0
    %4295 = vmatpush1.bf16.msra.mxu0 0
    %4296 = vmatprep.subr.bf16.mxu0 0
    %4297 = vmatpush1.bf16.msra.mxu0 0
    %4298 = vmatprep.subr.bf16.mxu0 0
    %4299 = vmatpush1.bf16.msra.mxu0 0
    %4300 = vmatprep.mubr.bf16.mxu0 0
    %4301 = vmatmul.mubr.bf16.gmra.mrb[0].mxu0 %v4220
    %v4302 = vpop.f32.mrb[0].mxu0
    %v4303 = vadd.f32 0.0, %v4302
    %v4304 = vpop.f32.mrb[0].mxu0
    %v4305 = vpop.f32.mrb[0].mxu0
    %v4306 = vadd.f32 0.0, %v4305
    %v4307 = vpop.f32.mrb[0].mxu0
    %4308 = vmatprep.mubr.bf16.mxu0 0
    %4309 = vmatmul.mubr.bf16.gmra.mrb[0].mxu0 %v4223
    %v4310 = vpop.f32.mrb[0].mxu0
    %v4311 = vadd.f32 0.0, %v4310
    %v4312 = vpop.f32.mrb[0].mxu0
    %v4313 = vpop.f32.mrb[0].mxu0
    %v4314 = vadd.f32 0.0, %v4313
    %v4315 = vpop.f32.mrb[0].mxu0
    %4316 = vmatprep.mubr.bf16.mxu0 0
    %4317 = vmatmul.mubr.bf16.gmra.mrb[0].mxu0 %v4226
    %v4318 = vpop.f32.mrb[0].mxu0
    %v4319 = vadd.f32 0.0, %v4318
    %v4320 = vpop.f32.mrb[0].mxu0
    %v4321 = vpop.f32.mrb[0].mxu0
    %v4322 = vadd.f32 0.0, %v4321
    %v4323 = vpop.f32.mrb[0].mxu0
    %4324 = vmatprep.mubr.bf16.mxu0 0
    %4325 = vmatmul.mubr.bf16.gmra.mrb[0].mxu0 %v4229
    %v4326 = vpop.f32.mrb[0].mxu0
    %v4327 = vadd.f32 0.0, %v4326
    %v4328 = vpop.f32.mrb[0].mxu0
    %v4329 = vpop.f32.mrb[0].mxu0
    %v4330 = vadd.f32 0.0, %v4329
    %v4331 = vpop.f32.mrb[0].mxu0
    %4332 = vmatprep.mubr.bf16.mxu0 0
    %4333 = vmatmul.mubr.bf16.gmra.mrb[0].mxu0 %v4232
    %v4334 = vpop.f32.mrb[0].mxu0
    %v4335 = vadd.f32 0.0, %v4334
    %v4336 = vpop.f32.mrb[0].mxu0
    %v4337 = vpop.f32.mrb[0].mxu0
    %v4338 = vadd.f32 0.0, %v4337
    %v4339 = vpop.f32.mrb[0].mxu0
    %4340 = vmatprep.mubr.bf16.mxu0 0
    %4341 = vmatmul.mubr.bf16.gmra.mrb[0].mxu0 %v4235
    %v4342 = vpop.f32.mrb[0].mxu0
    %v4343 = vadd.f32 0.0, %v4342
    %v4344 = vpop.f32.mrb[0].mxu0
    %v4345 = vpop.f32.mrb[0].mxu0
    %v4346 = vadd.f32 0.0, %v4345
    %v4347 = vpop.f32.mrb[0].mxu0
    %4348 = vmatprep.mubr.bf16.mxu0 0
    %4349 = vmatmul.mubr.bf16.gmra.mrb[0].mxu0 %v4238
    %v4350 = vpop.f32.mrb[0].mxu0
    %v4351 = vadd.f32 0.0, %v4350
    %v4352 = vpop.f32.mrb[0].mxu0
    %v4353 = vpop.f32.mrb[0].mxu0
    %v4354 = vadd.f32 0.0, %v4353
    %v4355 = vpop.f32.mrb[0].mxu0
    %4356 = vmatprep.mubr.bf16.mxu0 0
    %4357 = vmatmul.mubr.bf16.gmra.mrb[0].mxu0 %v4241
    %v4358 = vpop.f32.mrb[0].mxu0
    %v4359 = vadd.f32 0.0, %v4358
    %v4360 = vpop.f32.mrb[0].mxu0
    %v4361 = vpop.f32.mrb[0].mxu0
    %v4362 = vadd.f32 0.0, %v4361
    %v4363 = vpop.f32.mrb[0].mxu0
    %4364 = vmatprep.mubr.bf16.mxu0 0
    %4365 = vmatmul.mubr.bf16.gmra.mrb[0].mxu0 %v4244
    %v4366 = vpop.f32.mrb[0].mxu0
    %v4367 = vadd.f32 0.0, %v4366
    %v4368 = vpop.f32.mrb[0].mxu0
    %v4369 = vpop.f32.mrb[0].mxu0
    %v4370 = vadd.f32 0.0, %v4369
    %v4371 = vpop.f32.mrb[0].mxu0
    %4372 = vmatprep.mubr.bf16.mxu0 0
    %4373 = vmatmul.mubr.bf16.gmra.mrb[0].mxu0 %v4247
    %v4374 = vpop.f32.mrb[0].mxu0
    %v4375 = vadd.f32 0.0, %v4374
    %v4376 = vpop.f32.mrb[0].mxu0
    %v4377 = vpop.f32.mrb[0].mxu0
    %v4378 = vadd.f32 0.0, %v4377
    %v4379 = vpop.f32.mrb[0].mxu0
    %4380 = vmatprep.mubr.bf16.mxu0 0
    %4381 = vmatmul.mubr.bf16.gmra.mrb[0].mxu0 %v4250
    %v4382 = vpop.f32.mrb[0].mxu0
    %v4383 = vadd.f32 0.0, %v4382
    %v4384 = vpop.f32.mrb[0].mxu0
    %v4385 = vpop.f32.mrb[0].mxu0
    %v4386 = vadd.f32 0.0, %v4385
    %v4387 = vpop.f32.mrb[0].mxu0
    %4388 = vmatprep.mubr.bf16.mxu0 0
    %4389 = vmatmul.mubr.bf16.gmra.mrb[0].mxu0 %v4253
    %v4390 = vpop.f32.mrb[0].mxu0
    %v4391 = vadd.f32 0.0, %v4390
    %v4392 = vpop.f32.mrb[0].mxu0
    %v4393 = vpop.f32.mrb[0].mxu0
    %v4394 = vadd.f32 0.0, %v4393
    %v4395 = vpop.f32.mrb[0].mxu0
    %4396 = vmatprep.mubr.bf16.mxu0 0
    %4397 = vmatmul.mubr.bf16.gmra.mrb[0].mxu0 %v4256
    %v4398 = vpop.f32.mrb[0].mxu0
    %v4399 = vadd.f32 0.0, %v4398
    %v4400 = vpop.f32.mrb[0].mxu0
    %v4401 = vpop.f32.mrb[0].mxu0
    %v4402 = vadd.f32 0.0, %v4401
    %v4403 = vpop.f32.mrb[0].mxu0
    %4404 = vmatprep.mubr.bf16.mxu0 0
    %4405 = vmatmul.mubr.bf16.gmra.mrb[0].mxu0 %v4259
    %v4406 = vpop.f32.mrb[0].mxu0
    %v4407 = vadd.f32 0.0, %v4406
    %v4408 = vpop.f32.mrb[0].mxu0
    %v4409 = vpop.f32.mrb[0].mxu0
    %v4410 = vadd.f32 0.0, %v4409
    %v4411 = vpop.f32.mrb[0].mxu0
    %4412 = vmatprep.mubr.bf16.mxu0 0
    %4413 = vmatmul.mubr.bf16.gmra.mrb[0].mxu0 %v4262
    %v4414 = vpop.f32.mrb[0].mxu0
    %v4415 = vadd.f32 0.0, %v4414
    %v4416 = vpop.f32.mrb[0].mxu0
    %v4417 = vpop.f32.mrb[0].mxu0
    %v4418 = vadd.f32 0.0, %v4417
    %v4419 = vpop.f32.mrb[0].mxu0
    %4420 = vdwg.mxu0
    %v4424 = vunpack.c.l.b16 %v4158
    %v4425 = vunpack.c.l.b16 %v4159
    %v4426 = vunpack.c.l.b16 %v4160
    %v4427 = vpack.c.b16 %v4425, %v4424
    %v4428 = vpack.c.b16 %v4426, %v4426
    %v4431 = vsel %vm47, %v4143, 0
    %v4434 = vsel %vm47, %v4144, 0
    %v4437 = vsel %vm47, %v4145, 0
    %v4440 = vsel %vm47, %v4146, 0
    %v4443 = vsel %vm47, %v4147, 0
    %v4446 = vsel %vm47, %v4148, 0
    %v4449 = vsel %vm47, %v4149, 0
    %v4452 = vsel %vm47, %v4150, 0
    %v4455 = vsel %vm47, %v4151, 0
    %v4458 = vsel %vm47, %v4152, 0
    %v4461 = vsel %vm47, %v4153, 0
    %v4464 = vsel %vm47, %v4154, 0
    %v4467 = vsel %vm47, %v4155, 0
    %v4470 = vsel %vm47, %v4156, 0
    %v4473 = vsel %vm47, %v4157, 0
    %v4476 = vsel %vm4264, %v4428, 0
    %4478 = vmatprep.subr.bf16.mxu0 0
    %4479 = vmatpush1.bf16.msra.mxu0 %v4427
    %4480 = vmatprep.subr.bf16.mxu0 0
    %4481 = vmatpush1.bf16.msra.mxu0 %v4476
    %4482 = vmatprep.subr.bf16.mxu0 0
    %4483 = vmatpush1.bf16.msra.mxu0 0
    %4484 = vmatprep.subr.bf16.mxu0 0
    %4485 = vmatpush1.bf16.msra.mxu0 0
    %4486 = vmatprep.subr.bf16.mxu0 0
    %4487 = vmatpush1.bf16.msra.mxu0 0
    %4488 = vmatprep.subr.bf16.mxu0 0
    %4489 = vmatpush1.bf16.msra.mxu0 0
    %4490 = vmatprep.subr.bf16.mxu0 0
    %4491 = vmatpush1.bf16.msra.mxu0 0
    %4492 = vmatprep.subr.bf16.mxu0 0
    %4493 = vmatpush1.bf16.msra.mxu0 0
    %4494 = vmatprep.subr.bf16.mxu0 0
    %4495 = vmatpush1.bf16.msra.mxu0 0
    %4496 = vmatprep.subr.bf16.mxu0 0
    %4497 = vmatpush1.bf16.msra.mxu0 0
    %4498 = vmatprep.subr.bf16.mxu0 0
    %4499 = vmatpush1.bf16.msra.mxu0 0
    %4500 = vmatprep.subr.bf16.mxu0 0
    %4501 = vmatpush1.bf16.msra.mxu0 0
    %4502 = vmatprep.subr.bf16.mxu0 0
    %4503 = vmatpush1.bf16.msra.mxu0 0
    %4504 = vmatprep.subr.bf16.mxu0 0
    %4505 = vmatpush1.bf16.msra.mxu0 0
    %4506 = vmatprep.subr.bf16.mxu0 0
    %4507 = vmatpush1.bf16.msra.mxu0 0
    %4508 = vmatprep.subr.bf16.mxu0 0
    %4509 = vmatpush1.bf16.msra.mxu0 0
    %4510 = vmatprep.mubr.bf16.mxu0 0
    %4511 = vmatmul.mubr.bf16.gmra.mrb[0].mxu0 %v4431
    %v4512 = vpop.f32.mrb[0].mxu0
    %v4513 = vadd.f32 %v4303, %v4512
    %v4514 = vpop.f32.mrb[0].mxu0
    %v4515 = vpop.f32.mrb[0].mxu0
    %v4516 = vadd.f32 %v4306, %v4515
    %v4517 = vpop.f32.mrb[0].mxu0
    %4518 = vmatprep.mubr.bf16.mxu0 0
    %4519 = vmatmul.mubr.bf16.gmra.mrb[0].mxu0 %v4434
    %v4520 = vpop.f32.mrb[0].mxu0
    %v4521 = vadd.f32 %v4311, %v4520
    %v4522 = vpop.f32.mrb[0].mxu0
    %v4523 = vpop.f32.mrb[0].mxu0
    %v4524 = vadd.f32 %v4314, %v4523
    %v4525 = vpop.f32.mrb[0].mxu0
    %4526 = vmatprep.mubr.bf16.mxu0 0
    %4527 = vmatmul.mubr.bf16.gmra.mrb[0].mxu0 %v4437
    %v4528 = vpop.f32.mrb[0].mxu0
    %v4529 = vadd.f32 %v4319, %v4528
    %v4530 = vpop.f32.mrb[0].mxu0
    %v4531 = vpop.f32.mrb[0].mxu0
    %v4532 = vadd.f32 %v4322, %v4531
    %v4533 = vpop.f32.mrb[0].mxu0
    %4534 = vmatprep.mubr.bf16.mxu0 0
    %4535 = vmatmul.mubr.bf16.gmra.mrb[0].mxu0 %v4440
    %v4536 = vpop.f32.mrb[0].mxu0
    %v4537 = vadd.f32 %v4327, %v4536
    %v4538 = vpop.f32.mrb[0].mxu0
    %v4539 = vpop.f32.mrb[0].mxu0
    %v4540 = vadd.f32 %v4330, %v4539
    %v4541 = vpop.f32.mrb[0].mxu0
    %4542 = vmatprep.mubr.bf16.mxu0 0
    %4543 = vmatmul.mubr.bf16.gmra.mrb[0].mxu0 %v4443
    %v4544 = vpop.f32.mrb[0].mxu0
    %v4545 = vadd.f32 %v4335, %v4544
    %v4546 = vpop.f32.mrb[0].mxu0
    %v4547 = vpop.f32.mrb[0].mxu0
    %v4548 = vadd.f32 %v4338, %v4547
    %v4549 = vpop.f32.mrb[0].mxu0
    %4550 = vmatprep.mubr.bf16.mxu0 0
    %4551 = vmatmul.mubr.bf16.gmra.mrb[0].mxu0 %v4446
    %v4552 = vpop.f32.mrb[0].mxu0
    %v4553 = vadd.f32 %v4343, %v4552
    %v4554 = vpop.f32.mrb[0].mxu0
    %v4555 = vpop.f32.mrb[0].mxu0
    %v4556 = vadd.f32 %v4346, %v4555
    %v4557 = vpop.f32.mrb[0].mxu0
    %4558 = vmatprep.mubr.bf16.mxu0 0
    %4559 = vmatmul.mubr.bf16.gmra.mrb[0].mxu0 %v4449
    %v4560 = vpop.f32.mrb[0].mxu0
    %v4561 = vadd.f32 %v4351, %v4560
    %v4562 = vpop.f32.mrb[0].mxu0
    %v4563 = vpop.f32.mrb[0].mxu0
    %v4564 = vadd.f32 %v4354, %v4563
    %v4565 = vpop.f32.mrb[0].mxu0
    %4566 = vmatprep.mubr.bf16.mxu0 0
    %4567 = vmatmul.mubr.bf16.gmra.mrb[0].mxu0 %v4452
    %v4568 = vpop.f32.mrb[0].mxu0
    %v4569 = vadd.f32 %v4359, %v4568
    %v4570 = vpop.f32.mrb[0].mxu0
    %v4571 = vpop.f32.mrb[0].mxu0
    %v4572 = vadd.f32 %v4362, %v4571
    %v4573 = vpop.f32.mrb[0].mxu0
    %4574 = vmatprep.mubr.bf16.mxu0 0
    %4575 = vmatmul.mubr.bf16.gmra.mrb[0].mxu0 %v4455
    %v4576 = vpop.f32.mrb[0].mxu0
    %v4577 = vadd.f32 %v4367, %v4576
    %v4578 = vpop.f32.mrb[0].mxu0
    %v4579 = vpop.f32.mrb[0].mxu0
    %v4580 = vadd.f32 %v4370, %v4579
    %v4581 = vpop.f32.mrb[0].mxu0
    %4582 = vmatprep.mubr.bf16.mxu0 0
    %4583 = vmatmul.mubr.bf16.gmra.mrb[0].mxu0 %v4458
    %v4584 = vpop.f32.mrb[0].mxu0
    %v4585 = vadd.f32 %v4375, %v4584
    %v4586 = vpop.f32.mrb[0].mxu0
    %v4587 = vpop.f32.mrb[0].mxu0
    %v4588 = vadd.f32 %v4378, %v4587
    %v4589 = vpop.f32.mrb[0].mxu0
    %4590 = vmatprep.mubr.bf16.mxu0 0
    %4591 = vmatmul.mubr.bf16.gmra.mrb[0].mxu0 %v4461
    %v4592 = vpop.f32.mrb[0].mxu0
    %v4593 = vadd.f32 %v4383, %v4592
    %v4594 = vpop.f32.mrb[0].mxu0
    %v4595 = vpop.f32.mrb[0].mxu0
    %v4596 = vadd.f32 %v4386, %v4595
    %v4597 = vpop.f32.mrb[0].mxu0
    %4598 = vmatprep.mubr.bf16.mxu0 0
    %4599 = vmatmul.mubr.bf16.gmra.mrb[0].mxu0 %v4464
    %v4600 = vpop.f32.mrb[0].mxu0
    %v4601 = vadd.f32 %v4391, %v4600
    %v4602 = vpop.f32.mrb[0].mxu0
    %v4603 = vpop.f32.mrb[0].mxu0
    %v4604 = vadd.f32 %v4394, %v4603
    %v4605 = vpop.f32.mrb[0].mxu0
    %4606 = vmatprep.mubr.bf16.mxu0 0
    %4607 = vmatmul.mubr.bf16.gmra.mrb[0].mxu0 %v4467
    %v4608 = vpop.f32.mrb[0].mxu0
    %v4609 = vadd.f32 %v4399, %v4608
    %v4610 = vpop.f32.mrb[0].mxu0
    %v4611 = vpop.f32.mrb[0].mxu0
    %v4612 = vadd.f32 %v4402, %v4611
    %v4613 = vpop.f32.mrb[0].mxu0
    %4614 = vmatprep.mubr.bf16.mxu0 0
    %4615 = vmatmul.mubr.bf16.gmra.mrb[0].mxu0 %v4470
    %v4616 = vpop.f32.mrb[0].mxu0
    %v4617 = vadd.f32 %v4407, %v4616
    %v4618 = vpop.f32.mrb[0].mxu0
    %v4619 = vpop.f32.mrb[0].mxu0
    %v4620 = vadd.f32 %v4410, %v4619
    %v4621 = vpop.f32.mrb[0].mxu0
    %4622 = vmatprep.mubr.bf16.mxu0 0
    %4623 = vmatmul.mubr.bf16.gmra.mrb[0].mxu0 %v4473
    %v4624 = vpop.f32.mrb[0].mxu0
    %v4625 = vadd.f32 %v4415, %v4624
    %v4626 = vpop.f32.mrb[0].mxu0
    %v4627 = vpop.f32.mrb[0].mxu0
    %v4628 = vadd.f32 %v4418, %v4627
    %v4629 = vpop.f32.mrb[0].mxu0
    %4630 = vdwg.mxu0
    %v4631 = vld [vmem:[#allocation3 + $0x8] sm:$0xff]
    %v4632 = vld [vmem:[#allocation3 + $0x10] sm:$0xff]
    %v4633 = vld [vmem:[#allocation3 + $0x18] sm:$0xff]
    %v4634 = vld [vmem:[#allocation3 + $0x20] sm:$0xff]
    %v4635 = vld [vmem:[#allocation3 + $0x28] sm:$0xff]
    %v4636 = vld [vmem:[#allocation3 + $0x30] sm:$0xff]
    %v4637 = vld [vmem:[#allocation3 + $0x38] sm:$0xff]
    %v4638 = vld [vmem:[#allocation3 + $0x40] sm:$0xff]
    %v4639 = vld [vmem:[#allocation3 + $0x48] sm:$0xff]
    %v4640 = vld [vmem:[#allocation3 + $0x50] sm:$0xff]
    %v4641 = vld [vmem:[#allocation3 + $0x58] sm:$0xff]
    %v4642 = vld [vmem:[#allocation3 + $0x60] sm:$0xff]
    %v4643 = vld [vmem:[#allocation3 + $0x68] sm:$0xff]
    %v4644 = vld [vmem:[#allocation3 + $0x70] sm:$0xff]
    %v4645 = vld [vmem:[#allocation3 + $0x78] sm:$0xff]
    %v4646 = vld [vmem:[#allocation3 + $0x80] sm:$0xff]
    %v4647 = vld [vmem:[#allocation3 + $0x88] sm:$0xff]
    %v4648 = vld [vmem:[#allocation3 + $0x90] sm:$0xff]
    %v4649 = vld [vmem:[#allocation3 + $0x98] sm:$0xff]
    %v4650 = vld [vmem:[#allocation3 + $0xa0] sm:$0xff]
    %v4651 = vld [vmem:[#allocation3 + $0xa8] sm:$0xff]
    %v4652 = vld [vmem:[#allocation3 + $0xb0] sm:$0xff]
    %v4653 = vld [vmem:[#allocation3 + $0xb8] sm:$0xff]
    %v4654 = vld [vmem:[#allocation3 + $0xc0] sm:$0xff]
    %v4655 = vld [vmem:[#allocation3 + $0xc8] sm:$0xff]
    %v4656 = vld [vmem:[#allocation3 + $0xd0] sm:$0xff]
    %v4657 = vld [vmem:[#allocation3 + $0xd8] sm:$0xff]
    %v4658 = vld [vmem:[#allocation3 + $0xe0] sm:$0xff]
    %v4659 = vld [vmem:[#allocation3 + $0xe8] sm:$0xff]
    %v4660 = vld [vmem:[#allocation3 + $0xf0] sm:$0xff]
    %v4661 = vpack.c.bf16 %v4632, %v4631
    %v4662 = vpack.c.bf16 %v4634, %v4633
    %v4663 = vpack.c.bf16 %v4636, %v4635
    %v4664 = vpack.c.bf16 %v4638, %v4637
    %v4665 = vpack.c.bf16 %v4640, %v4639
    %v4666 = vpack.c.bf16 %v4642, %v4641
    %v4667 = vpack.c.bf16 %v4644, %v4643
    %v4668 = vpack.c.bf16 %v4646, %v4645
    %v4669 = vpack.c.bf16 %v4648, %v4647
    %v4670 = vpack.c.bf16 %v4650, %v4649
    %v4671 = vpack.c.bf16 %v4652, %v4651
    %v4672 = vpack.c.bf16 %v4654, %v4653
    %v4673 = vpack.c.bf16 %v4656, %v4655
    %v4674 = vpack.c.bf16 %v4658, %v4657
    %v4675 = vpack.c.bf16 %v4660, %v4659
    %s4676 = scalar_lea.vmem %s8, 24
    %v4677 = vld [vmem:[%s4676] sm:$0xf]
    %v4678 = vld [vmem:[%s4676 + $0x4] sm:$0xf]
    %v4679 = vld [vmem:[%s4676 + $0x8] sm:$0xf]
    %v4683 = vunpack.c.l.b16 %v4677
    %v4684 = vunpack.c.l.b16 %v4678
    %v4685 = vunpack.c.l.b16 %v4679
    %v4686 = vpack.c.b16 %v4684, %v4683
    %v4687 = vpack.c.b16 %v4685, %v4685
    %v4690 = vsel %vm47, %v4661, 0
    %v4693 = vsel %vm47, %v4662, 0
    %v4696 = vsel %vm47, %v4663, 0
    %v4699 = vsel %vm47, %v4664, 0
    %v4702 = vsel %vm47, %v4665, 0
    %v4705 = vsel %vm47, %v4666, 0
    %v4708 = vsel %vm47, %v4667, 0
    %v4711 = vsel %vm47, %v4668, 0
    %v4714 = vsel %vm47, %v4669, 0
    %v4717 = vsel %vm47, %v4670, 0
    %v4720 = vsel %vm47, %v4671, 0
    %v4723 = vsel %vm47, %v4672, 0
    %v4726 = vsel %vm47, %v4673, 0
    %v4729 = vsel %vm47, %v4674, 0
    %v4732 = vsel %vm47, %v4675, 0
    %v4735 = vsel %vm4264, %v4687, 0
    %4737 = vmatprep.subr.bf16.mxu0 0
    %4738 = vmatpush1.bf16.msra.mxu0 %v4686
    %4739 = vmatprep.subr.bf16.mxu0 0
    %4740 = vmatpush1.bf16.msra.mxu0 %v4735
    %4741 = vmatprep.subr.bf16.mxu0 0
    %4742 = vmatpush1.bf16.msra.mxu0 0
    %4743 = vmatprep.subr.bf16.mxu0 0
    %4744 = vmatpush1.bf16.msra.mxu0 0
    %4745 = vmatprep.subr.bf16.mxu0 0
    %4746 = vmatpush1.bf16.msra.mxu0 0
    %4747 = vmatprep.subr.bf16.mxu0 0
    %4748 = vmatpush1.bf16.msra.mxu0 0
    %4749 = vmatprep.subr.bf16.mxu0 0
    %4750 = vmatpush1.bf16.msra.mxu0 0
    %4751 = vmatprep.subr.bf16.mxu0 0
    %4752 = vmatpush1.bf16.msra.mxu0 0
    %4753 = vmatprep.subr.bf16.mxu0 0
    %4754 = vmatpush1.bf16.msra.mxu0 0
    %4755 = vmatprep.subr.bf16.mxu0 0
    %4756 = vmatpush1.bf16.msra.mxu0 0
    %4757 = vmatprep.subr.bf16.mxu0 0
    %4758 = vmatpush1.bf16.msra.mxu0 0
    %4759 = vmatprep.subr.bf16.mxu0 0
    %4760 = vmatpush1.bf16.msra.mxu0 0
    %4761 = vmatprep.subr.bf16.mxu0 0
    %4762 = vmatpush1.bf16.msra.mxu0 0
    %4763 = vmatprep.subr.bf16.mxu0 0
    %4764 = vmatpush1.bf16.msra.mxu0 0
    %4765 = vmatprep.subr.bf16.mxu0 0
    %4766 = vmatpush1.bf16.msra.mxu0 0
    %4767 = vmatprep.subr.bf16.mxu0 0
    %4768 = vmatpush1.bf16.msra.mxu0 0
    %4769 = vmatprep.mubr.bf16.mxu0 0
    %4770 = vmatmul.mubr.bf16.gmra.mrb[0].mxu0 %v4690
    %v4771 = vpop.f32.mrb[0].mxu0
    %v4772 = vadd.f32 0.0, %v4771
    %v4773 = vpop.f32.mrb[0].mxu0
    %v4774 = vpop.f32.mrb[0].mxu0
    %v4775 = vadd.f32 0.0, %v4774
    %v4776 = vpop.f32.mrb[0].mxu0
    %4777 = vmatprep.mubr.bf16.mxu0 0
    %4778 = vmatmul.mubr.bf16.gmra.mrb[0].mxu0 %v4693
    %v4779 = vpop.f32.mrb[0].mxu0
    %v4780 = vadd.f32 0.0, %v4779
    %v4781 = vpop.f32.mrb[0].mxu0
    %v4782 = vpop.f32.mrb[0].mxu0
    %v4783 = vadd.f32 0.0, %v4782
    %v4784 = vpop.f32.mrb[0].mxu0
    %4785 = vmatprep.mubr.bf16.mxu0 0
    %4786 = vmatmul.mubr.bf16.gmra.mrb[0].mxu0 %v4696
    %v4787 = vpop.f32.mrb[0].mxu0
    %v4788 = vadd.f32 0.0, %v4787
    %v4789 = vpop.f32.mrb[0].mxu0
    %v4790 = vpop.f32.mrb[0].mxu0
    %v4791 = vadd.f32 0.0, %v4790
    %v4792 = vpop.f32.mrb[0].mxu0
    %4793 = vmatprep.mubr.bf16.mxu0 0
    %4794 = vmatmul.mubr.bf16.gmra.mrb[0].mxu0 %v4699
    %v4795 = vpop.f32.mrb[0].mxu0
    %v4796 = vadd.f32 0.0, %v4795
    %v4797 = vpop.f32.mrb[0].mxu0
    %v4798 = vpop.f32.mrb[0].mxu0
    %v4799 = vadd.f32 0.0, %v4798
    %v4800 = vpop.f32.mrb[0].mxu0
    %4801 = vmatprep.mubr.bf16.mxu0 0
    %4802 = vmatmul.mubr.bf16.gmra.mrb[0].mxu0 %v4702
    %v4803 = vpop.f32.mrb[0].mxu0
    %v4804 = vadd.f32 0.0, %v4803
    %v4805 = vpop.f32.mrb[0].mxu0
    %v4806 = vpop.f32.mrb[0].mxu0
    %v4807 = vadd.f32 0.0, %v4806
    %v4808 = vpop.f32.mrb[0].mxu0
    %4809 = vmatprep.mubr.bf16.mxu0 0
    %4810 = vmatmul.mubr.bf16.gmra.mrb[0].mxu0 %v4705
    %v4811 = vpop.f32.mrb[0].mxu0
    %v4812 = vadd.f32 0.0, %v4811
    %v4813 = vpop.f32.mrb[0].mxu0
    %v4814 = vpop.f32.mrb[0].mxu0
    %v4815 = vadd.f32 0.0, %v4814
    %v4816 = vpop.f32.mrb[0].mxu0
    %4817 = vmatprep.mubr.bf16.mxu0 0
    %4818 = vmatmul.mubr.bf16.gmra.mrb[0].mxu0 %v4708
    %v4819 = vpop.f32.mrb[0].mxu0
    %v4820 = vadd.f32 0.0, %v4819
    %v4821 = vpop.f32.mrb[0].mxu0
    %v4822 = vpop.f32.mrb[0].mxu0
    %v4823 = vadd.f32 0.0, %v4822
    %v4824 = vpop.f32.mrb[0].mxu0
    %4825 = vmatprep.mubr.bf16.mxu0 0
    %4826 = vmatmul.mubr.bf16.gmra.mrb[0].mxu0 %v4711
    %v4827 = vpop.f32.mrb[0].mxu0
    %v4828 = vadd.f32 0.0, %v4827
    %v4829 = vpop.f32.mrb[0].mxu0
    %v4830 = vpop.f32.mrb[0].mxu0
    %v4831 = vadd.f32 0.0, %v4830
    %v4832 = vpop.f32.mrb[0].mxu0
    %4833 = vmatprep.mubr.bf16.mxu0 0
    %4834 = vmatmul.mubr.bf16.gmra.mrb[0].mxu0 %v4714
    %v4835 = vpop.f32.mrb[0].mxu0
    %v4836 = vadd.f32 0.0, %v4835
    %v4837 = vpop.f32.mrb[0].mxu0
    %v4838 = vpop.f32.mrb[0].mxu0
    %v4839 = vadd.f32 0.0, %v4838
    %v4840 = vpop.f32.mrb[0].mxu0
    %4841 = vmatprep.mubr.bf16.mxu0 0
    %4842 = vmatmul.mubr.bf16.gmra.mrb[0].mxu0 %v4717
    %v4843 = vpop.f32.mrb[0].mxu0
    %v4844 = vadd.f32 0.0, %v4843
    %v4845 = vpop.f32.mrb[0].mxu0
    %v4846 = vpop.f32.mrb[0].mxu0
    %v4847 = vadd.f32 0.0, %v4846
    %v4848 = vpop.f32.mrb[0].mxu0
    %4849 = vmatprep.mubr.bf16.mxu0 0
    %4850 = vmatmul.mubr.bf16.gmra.mrb[0].mxu0 %v4720
    %v4851 = vpop.f32.mrb[0].mxu0
    %v4852 = vadd.f32 0.0, %v4851
    %v4853 = vpop.f32.mrb[0].mxu0
    %v4854 = vpop.f32.mrb[0].mxu0
    %v4855 = vadd.f32 0.0, %v4854
    %v4856 = vpop.f32.mrb[0].mxu0
    %4857 = vmatprep.mubr.bf16.mxu0 0
    %4858 = vmatmul.mubr.bf16.gmra.mrb[0].mxu0 %v4723
    %v4859 = vpop.f32.mrb[0].mxu0
    %v4860 = vadd.f32 0.0, %v4859
    %v4861 = vpop.f32.mrb[0].mxu0
    %v4862 = vpop.f32.mrb[0].mxu0
    %v4863 = vadd.f32 0.0, %v4862
    %v4864 = vpop.f32.mrb[0].mxu0
    %4865 = vmatprep.mubr.bf16.mxu0 0
    %4866 = vmatmul.mubr.bf16.gmra.mrb[0].mxu0 %v4726
    %v4867 = vpop.f32.mrb[0].mxu0
    %v4868 = vadd.f32 0.0, %v4867
    %v4869 = vpop.f32.mrb[0].mxu0
    %v4870 = vpop.f32.mrb[0].mxu0
    %v4871 = vadd.f32 0.0, %v4870
    %v4872 = vpop.f32.mrb[0].mxu0
    %4873 = vmatprep.mubr.bf16.mxu0 0
    %4874 = vmatmul.mubr.bf16.gmra.mrb[0].mxu0 %v4729
    %v4875 = vpop.f32.mrb[0].mxu0
    %v4876 = vadd.f32 0.0, %v4875
    %v4877 = vpop.f32.mrb[0].mxu0
    %v4878 = vpop.f32.mrb[0].mxu0
    %v4879 = vadd.f32 0.0, %v4878
    %v4880 = vpop.f32.mrb[0].mxu0
    %4881 = vmatprep.mubr.bf16.mxu0 0
    %4882 = vmatmul.mubr.bf16.gmra.mrb[0].mxu0 %v4732
    %v4883 = vpop.f32.mrb[0].mxu0
    %v4884 = vadd.f32 0.0, %v4883
    %v4885 = vpop.f32.mrb[0].mxu0
    %v4886 = vpop.f32.mrb[0].mxu0
    %v4887 = vadd.f32 0.0, %v4886
    %v4888 = vpop.f32.mrb[0].mxu0
    %4889 = vdwg.mxu0
    %v4890 = vadd.f32 %v4513, %v4772
    %v4891 = vadd.f32 %v4516, %v4775
    %v4892 = vadd.f32 %v4521, %v4780
    %v4893 = vadd.f32 %v4524, %v4783
    %v4894 = vadd.f32 %v4529, %v4788
    %v4895 = vadd.f32 %v4532, %v4791
    %v4896 = vadd.f32 %v4537, %v4796
    %v4897 = vadd.f32 %v4540, %v4799
    %v4898 = vadd.f32 %v4545, %v4804
    %v4899 = vadd.f32 %v4548, %v4807
    %v4900 = vadd.f32 %v4553, %v4812
    %v4901 = vadd.f32 %v4556, %v4815
    %v4902 = vadd.f32 %v4561, %v4820
    %v4903 = vadd.f32 %v4564, %v4823
    %v4904 = vadd.f32 %v4569, %v4828
    %v4905 = vadd.f32 %v4572, %v4831
    %v4906 = vadd.f32 %v4577, %v4836
    %v4907 = vadd.f32 %v4580, %v4839
    %v4908 = vadd.f32 %v4585, %v4844
    %v4909 = vadd.f32 %v4588, %v4847
    %v4910 = vadd.f32 %v4593, %v4852
    %v4911 = vadd.f32 %v4596, %v4855
    %v4912 = vadd.f32 %v4601, %v4860
    %v4913 = vadd.f32 %v4604, %v4863
    %v4914 = vadd.f32 %v4609, %v4868
    %v4915 = vadd.f32 %v4612, %v4871
    %v4916 = vadd.f32 %v4617, %v4876
    %v4917 = vadd.f32 %v4620, %v4879
    %v4918 = vadd.f32 %v4625, %v4884
    %v4919 = vadd.f32 %v4628, %v4887
    %v4920 = vld [vmem:[%s9] sm:$0x1]
    %v4922 = vlaneseq
    %v4923 = vshrl.u32 %v4922, 7
    %v4924 = vsub.s32 0, %v4923
    %v4925 = vrot.slane %v4920, %v4924
    %v4927 = vadd.f32 %v4890, %v4925
    %v4928 = vadd.f32 %v4891, %v4925
    %v4929 = vadd.f32 %v4892, %v4925
    %v4930 = vadd.f32 %v4893, %v4925
    %v4931 = vadd.f32 %v4894, %v4925
    %v4932 = vadd.f32 %v4895, %v4925
    %v4933 = vadd.f32 %v4896, %v4925
    %v4934 = vadd.f32 %v4897, %v4925
    %v4935 = vadd.f32 %v4898, %v4925
    %v4936 = vadd.f32 %v4899, %v4925
    %v4937 = vadd.f32 %v4900, %v4925
    %v4938 = vadd.f32 %v4901, %v4925
    %v4939 = vadd.f32 %v4902, %v4925
    %v4940 = vadd.f32 %v4903, %v4925
    %v4941 = vadd.f32 %v4904, %v4925
    %v4942 = vadd.f32 %v4905, %v4925
    %v4943 = vadd.f32 %v4906, %v4925
    %v4944 = vadd.f32 %v4907, %v4925
    %v4945 = vadd.f32 %v4908, %v4925
    %v4946 = vadd.f32 %v4909, %v4925
    %v4947 = vadd.f32 %v4910, %v4925
    %v4948 = vadd.f32 %v4911, %v4925
    %v4949 = vadd.f32 %v4912, %v4925
    %v4950 = vadd.f32 %v4913, %v4925
    %v4951 = vadd.f32 %v4914, %v4925
    %v4952 = vadd.f32 %v4915, %v4925
    %v4953 = vadd.f32 %v4916, %v4925
    %v4954 = vadd.f32 %v4917, %v4925
    %v4955 = vadd.f32 %v4918, %v4925
    %v4956 = vadd.f32 %v4919, %v4925
    %v4957 = vmax.f32 %v4927, 0.0
    %v4958 = vmax.f32 %v4928, 0.0
    %v4959 = vmax.f32 %v4929, 0.0
    %v4960 = vmax.f32 %v4930, 0.0
    %v4961 = vmax.f32 %v4931, 0.0
    %v4962 = vmax.f32 %v4932, 0.0
    %v4963 = vmax.f32 %v4933, 0.0
    %v4964 = vmax.f32 %v4934, 0.0
    %v4965 = vmax.f32 %v4935, 0.0
    %v4966 = vmax.f32 %v4936, 0.0
    %v4967 = vmax.f32 %v4937, 0.0
    %v4968 = vmax.f32 %v4938, 0.0
    %v4969 = vmax.f32 %v4939, 0.0
    %v4970 = vmax.f32 %v4940, 0.0
    %v4971 = vmax.f32 %v4941, 0.0
    %v4972 = vmax.f32 %v4942, 0.0
    %v4973 = vmax.f32 %v4943, 0.0
    %v4974 = vmax.f32 %v4944, 0.0
    %v4975 = vmax.f32 %v4945, 0.0
    %v4976 = vmax.f32 %v4946, 0.0
    %v4977 = vmax.f32 %v4947, 0.0
    %v4978 = vmax.f32 %v4948, 0.0
    %v4979 = vmax.f32 %v4949, 0.0
    %v4980 = vmax.f32 %v4950, 0.0
    %v4981 = vmax.f32 %v4951, 0.0
    %v4982 = vmax.f32 %v4952, 0.0
    %v4983 = vmax.f32 %v4953, 0.0
    %v4984 = vmax.f32 %v4954, 0.0
    %v4985 = vmax.f32 %v4955, 0.0
    %v4986 = vmax.f32 %v4956, 0.0
    %v4987 = vld [vmem:[%s10] sm:$0xff]
    %v4988 = vld [vmem:[#allocation4] sm:$0x1]
    %v4990 = vlaneseq
    %v4991 = vshrl.u32 %v4990, 7
    %v4992 = vsub.s32 0, %v4991
    %v4993 = vrot.slane %v4988, %v4992
    %4994 = vset.pattern.permute.xlu0 0
    %4995 = vperm.xlu0 %4994, %v4993
    %v4996 = vpop.permute.xlu0 %4995
    %vm4998 = vcmask 64512
    %v5000 = vsel %vm4998, %v4987, 0
    %v5003 = vsel %vm4998, %v4957, 0
    %v5006 = vsel %vm4998, %v4958, 0
    %v5009 = vsel %vm4998, %v4959, 0
    %v5012 = vsel %vm4998, %v4960, 0
    %v5015 = vsel %vm4998, %v4961, 0
    %v5018 = vsel %vm4998, %v4962, 0
    %v5021 = vsel %vm4998, %v4963, 0
    %v5024 = vsel %vm4998, %v4964, 0
    %v5027 = vsel %vm4998, %v4965, 0
    %v5030 = vsel %vm4998, %v4966, 0
    %v5033 = vsel %vm4998, %v4967, 0
    %v5036 = vsel %vm4998, %v4968, 0
    %v5039 = vsel %vm4998, %v4969, 0
    %v5042 = vsel %vm4998, %v4970, 0
    %v5045 = vsel %vm4998, %v4971, 0
    %v5048 = vsel %vm4998, %v4972, 0
    %v5051 = vsel %vm4998, %v4973, 0
    %v5054 = vsel %vm4998, %v4974, 0
    %v5057 = vsel %vm4998, %v4975, 0
    %v5060 = vsel %vm4998, %v4976, 0
    %v5063 = vsel %vm4998, %v4977, 0
    %v5066 = vsel %vm4998, %v4978, 0
    %v5069 = vsel %vm4998, %v4979, 0
    %v5072 = vsel %vm4998, %v4980, 0
    %v5075 = vsel %vm4998, %v4981, 0
    %v5078 = vsel %vm4998, %v4982, 0
    %v5081 = vsel %vm4998, %v4983, 0
    %v5084 = vsel %vm4998, %v4984, 0
    %v5087 = vsel %vm4998, %v4985, 0
    %v5090 = vsel %vm4998, %v4986, 0
    %5092 = vmatprep.subr.mxu0 0.0
    %5093 = vmatpush1.xpose.msra.mxu0 %v5003
    %5094 = vmatprep.subr.mxu0 0.0
    %5095 = vmatpush1.xpose.msra.mxu0 %v5006
    %5096 = vmatprep.subr.mxu0 0.0
    %5097 = vmatpush1.xpose.msra.mxu0 %v5009
    %5098 = vmatprep.subr.mxu0 0.0
    %5099 = vmatpush1.xpose.msra.mxu0 %v5012
    %5100 = vmatprep.subr.mxu0 0.0
    %5101 = vmatpush1.xpose.msra.mxu0 %v5015
    %5102 = vmatprep.subr.mxu0 0.0
    %5103 = vmatpush1.xpose.msra.mxu0 %v5018
    %5104 = vmatprep.subr.mxu0 0.0
    %5105 = vmatpush1.xpose.msra.mxu0 %v5021
    %5106 = vmatprep.subr.mxu0 0.0
    %5107 = vmatpush1.xpose.msra.mxu0 %v5024
    %5108 = vmatprep.subr.mxu0 0.0
    %5109 = vmatpush1.xpose.msra.mxu0 %v5027
    %5110 = vmatprep.subr.mxu0 0.0
    %5111 = vmatpush1.xpose.msra.mxu0 %v5030
    %5112 = vmatprep.subr.mxu0 0.0
    %5113 = vmatpush1.xpose.msra.mxu0 %v5033
    %5114 = vmatprep.subr.mxu0 0.0
    %5115 = vmatpush1.xpose.msra.mxu0 %v5036
    %5116 = vmatprep.subr.mxu0 0.0
    %5117 = vmatpush1.xpose.msra.mxu0 %v5039
    %5118 = vmatprep.subr.mxu0 0.0
    %5119 = vmatpush1.xpose.msra.mxu0 %v5042
    %5120 = vmatprep.subr.mxu0 0.0
    %5121 = vmatpush1.xpose.msra.mxu0 %v5045
    %5122 = vmatprep.subr.mxu0 0.0
    %5123 = vmatpush1.xpose.msra.mxu0 %v5048
    %5124 = vmatprep.subr.mxu0 0.0
    %5125 = vmatpush1.xpose.msra.mxu0 %v5051
    %5126 = vmatprep.subr.mxu0 0.0
    %5127 = vmatpush1.xpose.msra.mxu0 %v5054
    %5128 = vmatprep.subr.mxu0 0.0
    %5129 = vmatpush1.xpose.msra.mxu0 %v5057
    %5130 = vmatprep.subr.mxu0 0.0
    %5131 = vmatpush1.xpose.msra.mxu0 %v5060
    %5132 = vmatprep.subr.mxu0 0.0
    %5133 = vmatpush1.xpose.msra.mxu0 %v5063
    %5134 = vmatprep.subr.mxu0 0.0
    %5135 = vmatpush1.xpose.msra.mxu0 %v5066
    %5136 = vmatprep.subr.mxu0 0.0
    %5137 = vmatpush1.xpose.msra.mxu0 %v5069
    %5138 = vmatprep.subr.mxu0 0.0
    %5139 = vmatpush1.xpose.msra.mxu0 %v5072
    %5140 = vmatprep.subr.mxu0 0.0
    %5141 = vmatpush1.xpose.msra.mxu0 %v5075
    %5142 = vmatprep.subr.mxu0 0.0
    %5143 = vmatpush1.xpose.msra.mxu0 %v5078
    %5144 = vmatprep.subr.mxu0 0.0
    %5145 = vmatpush1.xpose.msra.mxu0 %v5081
    %5146 = vmatprep.subr.mxu0 0.0
    %5147 = vmatpush1.xpose.msra.mxu0 %v5084
    %5148 = vmatprep.subr.mxu0 0.0
    %5149 = vmatpush1.xpose.msra.mxu0 %v5087
    %5150 = vmatprep.subr.mxu0 0.0
    %5151 = vmatpush1.xpose.msra.mxu0 %v5090
    %5152 = vmatprep.subr.mxu0 0.0
    %5153 = vmatpush1.xpose.msra.mxu0 0.0
    %5154 = vmatprep.subr.mxu0 0.0
    %5155 = vmatpush1.xpose.msra.mxu0 0.0
    %5156 = vmatprep.mubr.f32.mxu0 0.0
    %5157 = vmatmul.mubr.f32.gmra.mrb[0].mxu0 %v5000
    %v5158 = vpop.f32.mrb[0].mxu0
    %v5159 = vadd.f32 %v4996, %v5158
    %v5160 = vpop.f32.mrb[0].mxu0
    %v5161 = vadd.f32 %v4996, %v5160
    %5162 = vdwg.mxu0
    %v5163 = vsub.f32 0.0, %v5159
    %v5164 = vsub.f32 0.0, %v5161
    %v5165 = vmul.f32 %v5163, 1.442695
    %v5166 = vpow.pop %v5165
    %v5167 = vmul.f32 %v5164, 1.442695
    %v5168 = vpow.pop %v5167
    %v5169 = vadd.f32 %v5166, 1.0
    %v5170 = vadd.f32 %v5168, 1.0
    %v5171 = vrcp.pop %v5169
    %v5172 = vrcp.pop %v5170
    %5173 = vst [vmem:[#allocation5] sm:$0xff] %v5171
    %5174 = vst.msk [vmem:[#allocation5 + $0x8] sm:$0xff] %vm210, %v5172
    // Predicated region
    $region50: #{tpu_custom_call.1} parent=1 // pred_check
      _
    $region51: #{tpu_custom_call.1} parent=1 // pred_check_branch
      %5176 = sbr.rel (0) target = $region53
    $region52: #{tpu_custom_call.1} parent=1 // pred_region
      %s5178 = ssub.s32 256, 256
      %5179 = vsyncadd [#allocation6], %s5178
      %s5181 = sshll.u32 [#allocation5], 4
      %s5182 = int_to_ptr.vmem [resolvable:$true] %s5181
      %5184 = dma.vmem_to_hbm [thread:$0]  %s5182, 256, %s12, [#allocation6]
    $region53: #{tpu_custom_call.1} parent=1 // pred_fallthru
      _
    // Predicated region
    $region54: #{tpu_custom_call.1} parent=1 // pred_check
      _
    $region55: #{tpu_custom_call.1} parent=1 // pred_check_branch
      %5186 = sbr.rel (0) target = $region57
    $region56: #{tpu_custom_call.1} parent=1 // pred_region
      %5187 = dma.done [#allocation6], 256
    $region57: #{tpu_custom_call.1} parent=1 // pred_fallthru
      _
    %5188 = vsyncpa [#allocation6], 1

</llo_original>
